<compile_context>
chip_gen: v6e
topology: v6e:2x2x1
jax: 0.10.0
libtpu: 0.0.40
codegen_flags: <defaults>
</compile_context>

<pallas_src>
import math

import numpy as np
import jax
import jax.numpy as jnp
from jax import lax
from jax.experimental import pallas as pl
from jax.experimental.pallas import tpu as pltpu


# --------------------------------------------------------------------------
# Kernel 1: fused (folded-normalize) conv matmul + bias + ReLU + ROI avg-pool
# --------------------------------------------------------------------------
def _conv_pool_kernel(a_ref, w_ref, b_ref, p_ref, o_ref):
    # a_ref: (IPS, H*W, K_PAD)        bf16 im2col patches (normalization folded into w/b)
    # w_ref: (K_PAD, COUT_PAD)        bf16 folded conv weight (zero-padded K and Cout)
    # b_ref: (1, COUT_PAD)            f32  folded bias
    # p_ref: (POOL_ROWS, H*W)         bf16 quadrant/ROI average-pooling matrix
    # o_ref: (IPS, POOL_ROWS, COUT_PAD) f32 pooled per-box features
    w = w_ref[...]
    b = b_ref[...]
    pm = p_ref[...]
    for j in range(a_ref.shape[0]):                       # static unroll over images in the tile
        feat = jnp.dot(a_ref[j], w, preferred_element_type=jnp.float32)   # MXU (bf16 x bf16 -> f32)
        feat = jnp.maximum(feat + b, 0.0)                 # bias + ReLU kept in f32 (VPU, v5e-safe)
        pooled = jnp.dot(pm, feat.astype(jnp.bfloat16),   # average pooling as a second MXU matmul
                         preferred_element_type=jnp.float32)
        o_ref[j] = pooled


def conv_pool_features(a_bf16, w_mat, b_vec, pool_mat, imgs_per_step=4):
    """a_bf16: (N, H*W, K_PAD) bf16 -> pooled (N, POOL_ROWS, COUT_PAD) f32."""
    N, HW, K = a_bf16.shape
    POOL_ROWS = pool_mat.shape[0]
    COUT = w_mat.shape[1]
    ips = max(1, min(imgs_per_step, N))
    n_pad = ((N + ips - 1) // ips) * ips
    if n_pad != N:
        a_bf16 = jnp.pad(a_bf16, ((0, n_pad - N), (0, 0), (0, 0)))
    out = pl.pallas_call(
        _conv_pool_kernel,
        out_shape=jax.ShapeDtypeStruct((n_pad, POOL_ROWS, COUT), jnp.float32),
        grid=(n_pad // ips,),
        in_specs=[
            pl.BlockSpec((ips, HW, K), lambda i: (i, 0, 0)),
            pl.BlockSpec((K, COUT), lambda i: (0, 0)),        # resident weight
            pl.BlockSpec((1, COUT), lambda i: (0, 0)),        # resident bias
            pl.BlockSpec((POOL_ROWS, HW), lambda i: (0, 0)),  # resident pooling matrix
        ],
        out_specs=pl.BlockSpec((ips, POOL_ROWS, COUT), lambda i: (i, 0, 0)),
        compiler_params=pltpu.CompilerParams(dimension_semantics=("parallel",)),
    )(a_bf16, w_mat, b_vec, pool_mat)
    return out[:N]


# --------------------------------------------------------------------------
# Kernel 2: contrastive visual-embedding projection + L2 normalization
# --------------------------------------------------------------------------
def _embed_kernel(a_ref, w_ref, o_ref):
    emb = jnp.dot(a_ref[...], w_ref[...], preferred_element_type=jnp.float32)
    ss = jnp.sum(emb * emb, axis=-1, keepdims=True)
    o_ref[...] = (emb * lax.rsqrt(ss + 1e-6)).astype(o_ref.dtype)   # rsqrt -> EUP slot


def contrastive_embed(pooled_bf16, proj_mat, row_tile=64):
    """pooled_bf16: (R, F) bf16; proj_mat: (F, E_PAD) bf16 -> L2-normalized (R, E_PAD) f32."""
    R, F = pooled_bf16.shape
    E = proj_mat.shape[1]
    tr = min(row_tile, max(8, ((R + 7) // 8) * 8))
    r_pad = ((R + tr - 1) // tr) * tr
    if r_pad != R:
        pooled_bf16 = jnp.pad(pooled_bf16, ((0, r_pad - R), (0, 0)))
    out = pl.pallas_call(
        _embed_kernel,
        out_shape=jax.ShapeDtypeStruct((r_pad, E), jnp.float32),
        grid=(r_pad // tr,),
        in_specs=[
            pl.BlockSpec((tr, F), lambda i: (i, 0)),
            pl.BlockSpec((F, E), lambda i: (0, 0)),
        ],
        out_specs=pl.BlockSpec((tr, E), lambda i: (i, 0)),
        compiler_params=pltpu.CompilerParams(dimension_semantics=("parallel",)),
    )(pooled_bf16, proj_mat)
    return out[:R]


# --------------------------------------------------------------------------
# Module wrapper
# --------------------------------------------------------------------------
class FullSeqPredictorPallas:
    """JAX/Pallas re-implementation of FullSeqPredictor.forward (inference,
    use_saved_feat_mode=False, use_gt_boxes=False branch)."""

    SUB_BATCH = 4     # mirrors sub_batch_size=4; used as images-per-grid-step tile
    COUT_PAD = 128    # conv output channels padded to a full 128-lane vreg
    EMB_PAD = 128     # embedding dim padded to a full 128-lane vreg

    def __init__(self, key, in_channels=3, hidden=32, pool_res=4, emb_dim=32):
        self.in_channels = in_channels
        self.hidden = hidden
        self.pool_res = pool_res
        self.emb_dim = emb_dim

        # Registered buffers (Detectron2 defaults), shape (C, 1, 1) like PyTorch.
        self.pixel_mean = jnp.array([103.53, 116.28, 123.675], jnp.float32)[:in_channels].reshape(-1, 1, 1)
        self.pixel_std = jnp.array([57.375, 57.12, 58.395], jnp.float32)[:in_channels].reshape(-1, 1, 1)

        k1, k2 = jax.random.split(key, 2)
        fan_in_conv = 9 * in_channels
        self.conv_w = jax.random.normal(k1, (3, 3, in_channels, hidden), jnp.float32) / math.sqrt(fan_in_conv)
        self.conv_b = jnp.zeros((hidden,), jnp.float32)
        feat_dim = hidden * pool_res * pool_res
        self.proj_w = jax.random.normal(k2, (feat_dim, emb_dim), jnp.float32) / math.sqrt(feat_dim)

        # ---- fold (x - mean)/std into the conv weights/bias (done once) ------
        mean_c = self.pixel_mean.reshape(-1)
        inv_std_c = 1.0 / self.pixel_std.reshape(-1)
        w_fold = self.conv_w * inv_std_c.reshape(1, 1, in_channels, 1)
        b_fold = self.conv_b - jnp.einsum("yxco,c->o", self.conv_w, mean_c * inv_std_c)

        K = 9 * in_channels
        self.K_PAD = ((K + 7) // 8) * 8
        w_mat = w_fold.reshape(K, hidden)
        w_mat = jnp.pad(w_mat, ((0, self.K_PAD - K), (0, self.COUT_PAD - hidden)))
        self.w_mat = w_mat.astype(jnp.bfloat16)
        self.b_vec = jnp.pad(b_fold, (0, self.COUT_PAD - hidden)).reshape(1, self.COUT_PAD).astype(jnp.float32)

        # ---- projection weight laid out for the padded (cell, 128-channel) features
        proj3 = self.proj_w.reshape(pool_res * pool_res, hidden, emb_dim)
        proj3 = jnp.pad(proj3, ((0, 0),
                                (0, self.COUT_PAD - hidden),
                                (0, self.EMB_PAD - emb_dim)))
        self.proj_mat = proj3.reshape(pool_res * pool_res * self.COUT_PAD, self.EMB_PAD).astype(jnp.bfloat16)

        self._pool_mats = {}
        self._predict = jax.jit(self._predict_all)

    # ----- preprocess_seq_image (API parity only) --------------------------
    def preprocess_seq_image(self, batched_inputs):
        """Normalized sequences, as in the reference. The forward path does NOT
        use this: the normalization is folded into the conv weights instead."""
        m = self.pixel_mean[None]
        s = self.pixel_std[None]
        return [(jnp.asarray(seq["images"], jnp.float32) - m) / s for seq in batched_inputs]

    # ----- fixed quadrant ROI average-pooling matrix ------------------------
    def _pool_matrix(self, H, W):
        key = (H, W)
        if key not in self._pool_mats:
            pr = self.pool_res
            qh, qw = H // 2, W // 2
            ph, pw = qh // pr, qw // pr
            assert ph >= 1 and pw >= 1, "image too small for pool_res"
            P = np.zeros((4 * pr * pr, H * W), np.float32)
            for qy in range(2):
                for qx in range(2):
                    box = qy * 2 + qx
                    for py in range(pr):
                        for px in range(pr):
                            r = box * pr * pr + py * pr + px
                            for dy in range(ph):
                                for dx in range(pw):
                                    h = qy * qh + py * ph + dy
                                    w = qx * qw + px * pw + dx
                                    P[r, h * W + w] = 1.0 / (ph * pw)
            self._pool_mats[key] = jnp.asarray(P, jnp.bfloat16)
        return self._pool_mats[key]

    # ----- batched prediction over ALL images (jitted) ----------------------
    def _predict_all(self, images):
        N, C, H, W = images.shape
        assert C == self.in_channels
        pr = self.pool_res

        # NHWC, padded with the per-channel RAW mean so that, after the
        # normalization fold, border taps behave exactly like zero-padded
        # *normalized* pixels (matches normalize-then-zero-pad semantics).
        x = jnp.transpose(images.astype(jnp.float32), (0, 2, 3, 1))
        mean = self.pixel_mean.reshape(1, 1, 1, C)
        canvas = jnp.broadcast_to(mean, (N, H + 2, W + 2, C))
        xp = canvas.at[:, 1:H + 1, 1:W + 1, :].set(x)

        # TODO(synk): for production-size images do the im2col in-kernel (9 shifted
        # matmuls on a VMEM-resident tile) instead of materializing the 9x patch
        # tensor in HBM; at these toy sizes the patch tensor is a few hundred KB.
        patches = jnp.stack([xp[:, dy:dy + H, dx:dx + W, :]
                             for dy in range(3) for dx in range(3)], axis=3)  # (N,H,W,9,C)
        K = 9 * C
        a = patches.reshape(N, H * W, K)
        a = jnp.pad(a, ((0, 0), (0, 0), (0, self.K_PAD - K))).astype(jnp.bfloat16)

        pool_mat = self._pool_matrix(H, W)
        pooled = conv_pool_features(a, self.w_mat, self.b_vec, pool_mat,
                                    imgs_per_step=self.SUB_BATCH)            # (N, 4*pr*pr, 128)
        pooled = pooled.reshape(N, 4, pr * pr, self.COUT_PAD)
        pooled = pooled.reshape(N * 4, pr * pr * self.COUT_PAD)              # (N*4, 2048) lane-dense

        embs = contrastive_embed(pooled.astype(jnp.bfloat16), self.proj_mat)  # (N*4, 128)
        embs = embs[:, :self.emb_dim].reshape(N, 4, self.emb_dim)

        qh, qw = H // 2, W // 2
        boxes = jnp.asarray([[qx * qw, qy * qh, (qx + 1) * qw, (qy + 1) * qh]
                             for qy in range(2) for qx in range(2)], jnp.float32)
        boxes = jnp.broadcast_to(boxes[None], (N, 4, 4))
        return boxes, embs

    # ----- forward ----------------------------------------------------------
    def forward(self, batched_inputs):
        # All sequences / sub-batches are concatenated and processed by exactly
        # two pallas_calls; results are split back per sequence afterwards.
        # TODO(synk): ImageList.from_tensors size-divisibility padding is not
        # modelled; all images are assumed to share (C, H, W).
        seq_lens = [int(seq["images"].shape[0]) for seq in batched_inputs]
        images = jnp.concatenate([jnp.asarray(seq["images"], jnp.float32)
                                  for seq in batched_inputs], axis=0)
        boxes, embs = self._predict(images)

        all_results = []
        off = 0
        for L in seq_lens:
            proposals = [{"pred_boxes": boxes[off + i], "input_viz_embs": embs[off + i]}
                         for i in range(L)]
            all_results.append({"proposals": proposals})
            off += L
        return all_results


# --------------------------------------------------------------------------
if __name__ == "__main__":
    key = jax.random.PRNGKey(0)
    k_model, k_img0, k_img1 = jax.random.split(key, 3)

    B, S, C, H, W = 2, 8, 3, 16, 16
    batched_inputs = [
        {"images": jax.random.uniform(k_img0, (S, C, H, W), jnp.float32) * 255.0},
        {"images": jax.random.uniform(k_img1, (S, C, H, W), jnp.float32) * 255.0},
    ]

    model = FullSeqPredictorPallas(k_model, in_channels=C, hidden=32, pool_res=4, emb_dim=32)
    results = model.forward(batched_inputs)
    jax.block_until_ready(results)

    # sanity on shapes
    assert len(results) == B
    assert len(results[0]["proposals"]) == S
    assert results[0]["proposals"][0]["input_viz_embs"].shape == (4, 32)
    assert results[0]["proposals"][0]["pred_boxes"].shape == (4, 4)
    print("KERNEL_OK")
</pallas_src>

<mosaic_0001>
module attributes {stable_mosaic.version = 11 : i64} {
  func.func @_conv_pool_kernel(%arg0: i32, %arg1: memref<4x256x32xbf16, #tpu.memory_space<vmem>>, %arg2: memref<32x128xbf16, #tpu.memory_space<vmem>>, %arg3: memref<1x128xf32, #tpu.memory_space<vmem>>, %arg4: memref<64x256xbf16, #tpu.memory_space<vmem>>, %arg5: memref<4x64x128xf32, #tpu.memory_space<vmem>>) attributes {dimension_semantics = [#tpu.dimension_semantics<parallel>], iteration_bounds = array<i64: 4>, scalar_prefetch = 0 : i64, scratch_operands = 0 : i64, tpu.core_type = #tpu.core_type<tc>, window_params = [{transform_indices = @transform_0, window_bounds = array<i64: 4, 256, 32>}, {pipeline_mode = #tpu.pipeline_mode<synchronous>, transform_indices = @transform_1, window_bounds = array<i64: 32, 128>}, {pipeline_mode = #tpu.pipeline_mode<synchronous>, transform_indices = @transform_2, window_bounds = array<i64: 1, 128>}, {pipeline_mode = #tpu.pipeline_mode<synchronous>, transform_indices = @transform_3, window_bounds = array<i64: 64, 256>}, {transform_indices = @transform_4, window_bounds = array<i64: 4, 64, 128>}]} {
    %c0 = arith.constant 0 : index
    %c0_0 = arith.constant 0 : index
    %0 = vector.load %arg2[%c0, %c0_0] : memref<32x128xbf16, #tpu.memory_space<vmem>>, vector<32x128xbf16>
    %c0_1 = arith.constant 0 : index
    %c0_2 = arith.constant 0 : index
    %1 = vector.load %arg3[%c0_1, %c0_2] : memref<1x128xf32, #tpu.memory_space<vmem>>, vector<1x128xf32>
    %c0_3 = arith.constant 0 : index
    %c0_4 = arith.constant 0 : index
    %2 = vector.load %arg4[%c0_3, %c0_4] : memref<64x256xbf16, #tpu.memory_space<vmem>>, vector<64x256xbf16>
    %c0_5 = arith.constant 0 : index
    %c0_6 = arith.constant 0 : index
    %c0_7 = arith.constant 0 : index
    %3 = vector.load %arg1[%c0_5, %c0_6, %c0_7] : memref<4x256x32xbf16, #tpu.memory_space<vmem>>, vector<1x256x32xbf16>
    %4 = vector.shape_cast %3 : vector<1x256x32xbf16> to vector<256x32xbf16>
    %cst = arith.constant dense<0.000000e+00> : vector<256x128xf32>
    %5 = tpu.matmul %4, %0, %cst {dimension_numbers = #tpu.dot_dimension_numbers<[1], [0], [0], [1], [0, 0, 1, 1], [], []>} : vector<256x32xbf16>, vector<32x128xbf16>, vector<256x128xf32> -> vector<256x128xf32>
    %6 = vector.broadcast %1 : vector<1x128xf32> to vector<256x128xf32>
    %7 = arith.addf %5, %6 : vector<256x128xf32>
    %cst_8 = arith.constant 0.000000e+00 : f32
    %8 = vector.broadcast %cst_8 : f32 to vector<256x128xf32>
    %9 = arith.maximumf %7, %8 : vector<256x128xf32>
    %10 = arith.truncf %9 : vector<256x128xf32> to vector<256x128xbf16>
    %cst_9 = arith.constant dense<0.000000e+00> : vector<64x128xf32>
    %11 = tpu.matmul %2, %10, %cst_9 {dimension_numbers = #tpu.dot_dimension_numbers<[1], [0], [0], [1], [0, 0, 1, 1], [], []>} : vector<64x256xbf16>, vector<256x128xbf16>, vector<64x128xf32> -> vector<64x128xf32>
    %c0_10 = arith.constant 0 : index
    %c0_11 = arith.constant 0 : index
    %c0_12 = arith.constant 0 : index
    %12 = vector.load %arg5[%c0_10, %c0_11, %c0_12] : memref<4x64x128xf32, #tpu.memory_space<vmem>>, vector<1x64x128xf32>
    %13 = vector.shape_cast %12 : vector<1x64x128xf32> to vector<64x128xf32>
    %14 = vector.shape_cast %11 : vector<64x128xf32> to vector<1x64x128xf32>
    tpu.vector_store %arg5[%c0_10, %c0_11, %c0_12], %14 {strides = array<i32>} : memref<4x64x128xf32, #tpu.memory_space<vmem>>, vector<1x64x128xf32>,
    %c1 = arith.constant 1 : index
    %c0_13 = arith.constant 0 : index
    %c0_14 = arith.constant 0 : index
    %15 = vector.load %arg1[%c1, %c0_13, %c0_14] : memref<4x256x32xbf16, #tpu.memory_space<vmem>>, vector<1x256x32xbf16>
    %16 = vector.shape_cast %15 : vector<1x256x32xbf16> to vector<256x32xbf16>
    %cst_15 = arith.constant dense<0.000000e+00> : vector<256x128xf32>
    %17 = tpu.matmul %16, %0, %cst_15 {dimension_numbers = #tpu.dot_dimension_numbers<[1], [0], [0], [1], [0, 0, 1, 1], [], []>} : vector<256x32xbf16>, vector<32x128xbf16>, vector<256x128xf32> -> vector<256x128xf32>
    %18 = vector.broadcast %1 : vector<1x128xf32> to vector<256x128xf32>
    %19 = arith.addf %17, %18 : vector<256x128xf32>
    %cst_16 = arith.constant 0.000000e+00 : f32
    %20 = vector.broadcast %cst_16 : f32 to vector<256x128xf32>
    %21 = arith.maximumf %19, %20 : vector<256x128xf32>
    %22 = arith.truncf %21 : vector<256x128xf32> to vector<256x128xbf16>
    %cst_17 = arith.constant dense<0.000000e+00> : vector<64x128xf32>
    %23 = tpu.matmul %2, %22, %cst_17 {dimension_numbers = #tpu.dot_dimension_numbers<[1], [0], [0], [1], [0, 0, 1, 1], [], []>} : vector<64x256xbf16>, vector<256x128xbf16>, vector<64x128xf32> -> vector<64x128xf32>
    %c1_18 = arith.constant 1 : index
    %c0_19 = arith.constant 0 : index
    %c0_20 = arith.constant 0 : index
    %24 = vector.load %arg5[%c1_18, %c0_19, %c0_20] : memref<4x64x128xf32, #tpu.memory_space<vmem>>, vector<1x64x128xf32>
    %25 = vector.shape_cast %24 : vector<1x64x128xf32> to vector<64x128xf32>
    %26 = vector.shape_cast %23 : vector<64x128xf32> to vector<1x64x128xf32>
    tpu.vector_store %arg5[%c1_18, %c0_19, %c0_20], %26 {strides = array<i32>} : memref<4x64x128xf32, #tpu.memory_space<vmem>>, vector<1x64x128xf32>,
    %c2 = arith.constant 2 : index
    %c0_21 = arith.constant 0 : index
    %c0_22 = arith.constant 0 : index
    %27 = vector.load %arg1[%c2, %c0_21, %c0_22] : memref<4x256x32xbf16, #tpu.memory_space<vmem>>, vector<1x256x32xbf16>
    %28 = vector.shape_cast %27 : vector<1x256x32xbf16> to vector<256x32xbf16>
    %cst_23 = arith.constant dense<0.000000e+00> : vector<256x128xf32>
    %29 = tpu.matmul %28, %0, %cst_23 {dimension_numbers = #tpu.dot_dimension_numbers<[1], [0], [0], [1], [0, 0, 1, 1], [], []>} : vector<256x32xbf16>, vector<32x128xbf16>, vector<256x128xf32> -> vector<256x128xf32>
    %30 = vector.broadcast %1 : vector<1x128xf32> to vector<256x128xf32>
    %31 = arith.addf %29, %30 : vector<256x128xf32>
    %cst_24 = arith.constant 0.000000e+00 : f32
    %32 = vector.broadcast %cst_24 : f32 to vector<256x128xf32>
    %33 = arith.maximumf %31, %32 : vector<256x128xf32>
    %34 = arith.truncf %33 : vector<256x128xf32> to vector<256x128xbf16>
    %cst_25 = arith.constant dense<0.000000e+00> : vector<64x128xf32>
    %35 = tpu.matmul %2, %34, %cst_25 {dimension_numbers = #tpu.dot_dimension_numbers<[1], [0], [0], [1], [0, 0, 1, 1], [], []>} : vector<64x256xbf16>, vector<256x128xbf16>, vector<64x128xf32> -> vector<64x128xf32>
    %c2_26 = arith.constant 2 : index
    %c0_27 = arith.constant 0 : index
    %c0_28 = arith.constant 0 : index
    %36 = vector.load %arg5[%c2_26, %c0_27, %c0_28] : memref<4x64x128xf32, #tpu.memory_space<vmem>>, vector<1x64x128xf32>
    %37 = vector.shape_cast %36 : vector<1x64x128xf32> to vector<64x128xf32>
    %38 = vector.shape_cast %35 : vector<64x128xf32> to vector<1x64x128xf32>
    tpu.vector_store %arg5[%c2_26, %c0_27, %c0_28], %38 {strides = array<i32>} : memref<4x64x128xf32, #tpu.memory_space<vmem>>, vector<1x64x128xf32>,
    %c3 = arith.constant 3 : index
    %c0_29 = arith.constant 0 : index
    %c0_30 = arith.constant 0 : index
    %39 = vector.load %arg1[%c3, %c0_29, %c0_30] : memref<4x256x32xbf16, #tpu.memory_space<vmem>>, vector<1x256x32xbf16>
    %40 = vector.shape_cast %39 : vector<1x256x32xbf16> to vector<256x32xbf16>
    %cst_31 = arith.constant dense<0.000000e+00> : vector<256x128xf32>
    %41 = tpu.matmul %40, %0, %cst_31 {dimension_numbers = #tpu.dot_dimension_numbers<[1], [0], [0], [1], [0, 0, 1, 1], [], []>} : vector<256x32xbf16>, vector<32x128xbf16>, vector<256x128xf32> -> vector<256x128xf32>
    %42 = vector.broadcast %1 : vector<1x128xf32> to vector<256x128xf32>
    %43 = arith.addf %41, %42 : vector<256x128xf32>
    %cst_32 = arith.constant 0.000000e+00 : f32
    %44 = vector.broadcast %cst_32 : f32 to vector<256x128xf32>
    %45 = arith.maximumf %43, %44 : vector<256x128xf32>
    %46 = arith.truncf %45 : vector<256x128xf32> to vector<256x128xbf16>
    %cst_33 = arith.constant dense<0.000000e+00> : vector<64x128xf32>
    %47 = tpu.matmul %2, %46, %cst_33 {dimension_numbers = #tpu.dot_dimension_numbers<[1], [0], [0], [1], [0, 0, 1, 1], [], []>} : vector<64x256xbf16>, vector<256x128xbf16>, vector<64x128xf32> -> vector<64x128xf32>
    %c3_34 = arith.constant 3 : index
    %c0_35 = arith.constant 0 : index
    %c0_36 = arith.constant 0 : index
    %48 = vector.load %arg5[%c3_34, %c0_35, %c0_36] : memref<4x64x128xf32, #tpu.memory_space<vmem>>, vector<1x64x128xf32>
    %49 = vector.shape_cast %48 : vector<1x64x128xf32> to vector<64x128xf32>
    %50 = vector.shape_cast %47 : vector<64x128xf32> to vector<1x64x128xf32>
    tpu.vector_store %arg5[%c3_34, %c0_35, %c0_36], %50 {strides = array<i32>} : memref<4x64x128xf32, #tpu.memory_space<vmem>>, vector<1x64x128xf32>,
    return
  }
  func.func @transform_0(%arg0: i32) -> (i32, i32, i32) {
    %c0_i32 = arith.constant 0 : i32
    %c0_i32_0 = arith.constant 0 : i32
    %c0_i32_1 = arith.constant 0 : i32
    return %arg0, %c0_i32, %c0_i32_0 : i32, i32, i32
  }
  func.func @transform_1(%arg0: i32) -> (i32, i32) {
    %c0_i32 = arith.constant 0 : i32
    %c0_i32_0 = arith.constant 0 : i32
    %c0_i32_1 = arith.constant 0 : i32
    return %c0_i32, %c0_i32_0 : i32, i32
  }
  func.func @transform_2(%arg0: i32) -> (i32, i32) {
    %c0_i32 = arith.constant 0 : i32
    %c0_i32_0 = arith.constant 0 : i32
    %c0_i32_1 = arith.constant 0 : i32
    return %c0_i32, %c0_i32_0 : i32, i32
  }
  func.func @transform_3(%arg0: i32) -> (i32, i32) {
    %c0_i32 = arith.constant 0 : i32
    %c0_i32_0 = arith.constant 0 : i32
    %c0_i32_1 = arith.constant 0 : i32
    return %c0_i32, %c0_i32_0 : i32, i32
  }
  func.func @transform_4(%arg0: i32) -> (i32, i32, i32) {
    %c0_i32 = arith.constant 0 : i32
    %c0_i32_0 = arith.constant 0 : i32
    %c0_i32_1 = arith.constant 0 : i32
    return %arg0, %c0_i32, %c0_i32_0 : i32, i32, i32
  }
}

module attributes {stable_mosaic.version = 11 : i64} {
  func.func @_embed_kernel(%arg0: i32, %arg1: memref<64x2048xbf16, #tpu.memory_space<vmem>>, %arg2: memref<2048x128xbf16, #tpu.memory_space<vmem>>, %arg3: memref<64x128xf32, #tpu.memory_space<vmem>>) attributes {dimension_semantics = [#tpu.dimension_semantics<parallel>], iteration_bounds = array<i64: 1>, scalar_prefetch = 0 : i64, scratch_operands = 0 : i64, tpu.core_type = #tpu.core_type<tc>, window_params = [{transform_indices = @transform_0, window_bounds = array<i64: 64, 2048>}, {pipeline_mode = #tpu.pipeline_mode<synchronous>, transform_indices = @transform_1, window_bounds = array<i64: 2048, 128>}, {transform_indices = @transform_2, window_bounds = array<i64: 64, 128>}]} {
    %c0 = arith.constant 0 : index
    %c0_0 = arith.constant 0 : index
    %0 = vector.load %arg1[%c0, %c0_0] : memref<64x2048xbf16, #tpu.memory_space<vmem>>, vector<64x2048xbf16>
    %c0_1 = arith.constant 0 : index
    %c0_2 = arith.constant 0 : index
    %1 = vector.load %arg2[%c0_1, %c0_2] : memref<2048x128xbf16, #tpu.memory_space<vmem>>, vector<2048x128xbf16>
    %cst = arith.constant dense<0.000000e+00> : vector<64x128xf32>
    %2 = tpu.matmul %0, %1, %cst {dimension_numbers = #tpu.dot_dimension_numbers<[1], [0], [0], [1], [0, 0, 1, 1], [], []>} : vector<64x2048xbf16>, vector<2048x128xbf16>, vector<64x128xf32> -> vector<64x128xf32>
    %3 = arith.mulf %2, %2 : vector<64x128xf32>
    %cst_3 = arith.constant dense<0.000000e+00> : vector<64xf32>
    %4 = vector.multi_reduction <add>, %3, %cst_3 [1] : vector<64x128xf32> to vector<64xf32>
    %5 = vector.shape_cast %4 : vector<64xf32> to vector<64x1xf32>
    %cst_4 = arith.constant 9.99999997E-7 : f32
    %6 = vector.broadcast %cst_4 : f32 to vector<64x1xf32>
    %7 = arith.addf %5, %6 : vector<64x1xf32>
    %8 = math.rsqrt %7 : vector<64x1xf32>
    %9 = vector.broadcast %8 : vector<64x1xf32> to vector<64x128xf32>
    %10 = arith.mulf %2, %9 : vector<64x128xf32>
    %c0_5 = arith.constant 0 : index
    %c0_6 = arith.constant 0 : index
    %11 = vector.load %arg3[%c0_5, %c0_6] : memref<64x128xf32, #tpu.memory_space<vmem>>, vector<64x128xf32>
    tpu.vector_store %arg3[%c0_5, %c0_6], %10 {strides = array<i32>} : memref<64x128xf32, #tpu.memory_space<vmem>>, vector<64x128xf32>,
    return
  }
  func.func @transform_0(%arg0: i32) -> (i32, i32) {
    %c0_i32 = arith.constant 0 : i32
    %c0_i32_0 = arith.constant 0 : i32
    return %arg0, %c0_i32 : i32, i32
  }
  func.func @transform_1(%arg0: i32) -> (i32, i32) {
    %c0_i32 = arith.constant 0 : i32
    %c0_i32_0 = arith.constant 0 : i32
    %c0_i32_1 = arith.constant 0 : i32
    return %c0_i32, %c0_i32_0 : i32, i32
  }
  func.func @transform_2(%arg0: i32) -> (i32, i32) {
    %c0_i32 = arith.constant 0 : i32
    %c0_i32_0 = arith.constant 0 : i32
    return %arg0, %c0_i32 : i32, i32
  }
}

</mosaic_0001>

<llo_original>
// kernel: _predict_all.2
$region0: #{_predict_all.2}
  #allocation0 [shape = 'u32[]', space=smem, size = 0x4, offset = 0x4, fixed_abs, tag = 'smem constant byte address 0x4 - core index']
  #allocation1 [shape = 'u32[144,128]{1,0:T(1,128)}', space=vmem, size = 0x12000, scoped, tag = 'internal scratch']
  %s0 = inlined_call_operand.vmem [shape: bf16[16,256,32], index: 0, kind: input, shape index: {}]
  %s1 = inlined_call_operand.vmem [shape: bf16[32,128], index: 1, kind: input, shape index: {}]
  %s2 = inlined_call_operand.vmem [shape: f32[1,128], index: 2, kind: input, shape index: {}]
  %s3 = inlined_call_operand.vmem [shape: bf16[64,256], index: 3, kind: input, shape index: {}]
  %s4 = inlined_call_operand.vmem [shape: f32[16,64,128], index: 4, kind: output, shape index: {}]
  %s5 = sld [smem:[#allocation0]]
  $region49: #{_predict_all.2} parent=0
    _
  %s7 = ssub.s32 1, %s5
  %s8 = scalar_select 0, %s7, %s5
  loop: start=0, step=1, limit=6
  $region2: #{_predict_all.2} parent=0 // loop_pre_header
    _
  $region3: #{_predict_all.2} parent=0 // loop_header
    %s10 = sphi 0, %s14
    %p11 = scmp.ge.s32.totalorder %s10, 6
    %s20 = sphi 0, %s22
    %s23 = sphi 0, %s20
    %s24 = sphi 0, %s23
    %s40 = sphi 0, %s24
    %s44 = sphi 0, %s44
    %s46 = sphi 0, %s44
    %s47 = sphi 0, %s46
    %s61 = sphi 0, %s47
    %s65 = sphi 0, %s65
    %s67 = sphi 0, %s65
    %s68 = sphi 0, %s67
    %s82 = sphi 0, %s68
    %s86 = sphi 0, %s86
    %s88 = sphi 0, %s86
    %s89 = sphi 0, %s88
    %s103 = sphi 0, %s89
    %s109 = sphi 0, %s111
    %s112 = sphi 0, %s109
    %s113 = sphi 0, %s112
    %s129 = sphi 0, %s113
  $region4: #{_predict_all.2} parent=0 // loop_header_branch
    %13 = sbr.rel (%p11) target = $region8
  $region5: #{_predict_all.2} parent=0 // loop_body
    %s15 = ssub.s32 %s10, 1
    %s16 = ssub.s32 %s10, 2
    %s17 = sadd.s32 %s10, 1
    %s18 = ssub.s32 %s10, %s17
    %p19 = scmp.eq.s32.totalorder %s18, 0
    %s21 = sadd.s32 %s20, 1
    %s22 = scalar_select %p19, %s20, %s21
    %p25 = pneg %p19
    %p26 = scmp.eq.s32.totalorder %s10, 3
    %p27 = por %p25, %p26
    %p28 = scmp.ne.s32.totalorder %s20, %s23
    %p29 = scmp.eq.s32.totalorder %s10, 0
    %p30 = por %p28, %p29
    %p31 = scmp.ne.s32.totalorder %s20, %s23
    %p32 = scmp.eq.s32.totalorder %s15, 3
    %p33 = por %p31, %p32
    %p34 = scmp.ne.s32.totalorder %s23, %s24
    %p35 = scmp.eq.s32.totalorder %s15, 0
    %p36 = por %p34, %p35
    %p37 = scmp.ne.s32.totalorder %s23, %s24
    %p38 = scmp.eq.s32.totalorder %s16, 3
    %p39 = por %p37, %p38
    %p41 = scmp.ne.s32.totalorder %s24, %s40
    %p42 = scmp.eq.s32.totalorder %s16, 0
    %p43 = por %p41, %p42
    %s45 = sadd.s32 %s44, 1
    %p48 = scmp.eq.s32.totalorder %s10, 3
    %p49 = scmp.ne.s32.totalorder %s44, %s46
    %p50 = scmp.eq.s32.totalorder %s10, 0
    %p51 = por %p49, %p50
    %p52 = scmp.ne.s32.totalorder %s44, %s46
    %p53 = scmp.eq.s32.totalorder %s15, 3
    %p54 = por %p52, %p53
    %p55 = scmp.ne.s32.totalorder %s46, %s47
    %p56 = scmp.eq.s32.totalorder %s15, 0
    %p57 = por %p55, %p56
    %p58 = scmp.ne.s32.totalorder %s46, %s47
    %p59 = scmp.eq.s32.totalorder %s16, 3
    %p60 = por %p58, %p59
    %p62 = scmp.ne.s32.totalorder %s47, %s61
    %p63 = scmp.eq.s32.totalorder %s16, 0
    %p64 = por %p62, %p63
    %s66 = sadd.s32 %s65, 1
    %p69 = scmp.eq.s32.totalorder %s10, 3
    %p70 = scmp.ne.s32.totalorder %s65, %s67
    %p71 = scmp.eq.s32.totalorder %s10, 0
    %p72 = por %p70, %p71
    %p73 = scmp.ne.s32.totalorder %s65, %s67
    %p74 = scmp.eq.s32.totalorder %s15, 3
    %p75 = por %p73, %p74
    %p76 = scmp.ne.s32.totalorder %s67, %s68
    %p77 = scmp.eq.s32.totalorder %s15, 0
    %p78 = por %p76, %p77
    %p79 = scmp.ne.s32.totalorder %s67, %s68
    %p80 = scmp.eq.s32.totalorder %s16, 3
    %p81 = por %p79, %p80
    %p83 = scmp.ne.s32.totalorder %s68, %s82
    %p84 = scmp.eq.s32.totalorder %s16, 0
    %p85 = por %p83, %p84
    %s87 = sadd.s32 %s86, 1
    %p90 = scmp.eq.s32.totalorder %s10, 3
    %p91 = scmp.ne.s32.totalorder %s86, %s88
    %p92 = scmp.eq.s32.totalorder %s10, 0
    %p93 = por %p91, %p92
    %p94 = scmp.ne.s32.totalorder %s86, %s88
    %p95 = scmp.eq.s32.totalorder %s15, 3
    %p96 = por %p94, %p95
    %p97 = scmp.ne.s32.totalorder %s88, %s89
    %p98 = scmp.eq.s32.totalorder %s15, 0
    %p99 = por %p97, %p98
    %p100 = scmp.ne.s32.totalorder %s88, %s89
    %p101 = scmp.eq.s32.totalorder %s16, 3
    %p102 = por %p100, %p101
    %p104 = scmp.ne.s32.totalorder %s89, %s103
    %p105 = scmp.eq.s32.totalorder %s16, 0
    %p106 = por %p104, %p105
    %s107 = ssub.s32 %s10, %s17
    %p108 = scmp.eq.s32.totalorder %s107, 0
    %s110 = sadd.s32 %s109, 1
    %s111 = scalar_select %p108, %s109, %s110
    %p114 = pneg %p108
    %p115 = scmp.eq.s32.totalorder %s10, 3
    %p116 = por %p114, %p115
    %p117 = scmp.ne.s32.totalorder %s109, %s112
    %p118 = scmp.eq.s32.totalorder %s10, 0
    %p119 = por %p117, %p118
    %p120 = scmp.ne.s32.totalorder %s109, %s112
    %p121 = scmp.eq.s32.totalorder %s15, 3
    %p122 = por %p120, %p121
    %p123 = scmp.ne.s32.totalorder %s112, %s113
    %p124 = scmp.eq.s32.totalorder %s15, 0
    %p125 = por %p123, %p124
    %p126 = scmp.ne.s32.totalorder %s112, %s113
    %p127 = scmp.eq.s32.totalorder %s16, 3
    %p128 = por %p126, %p127
    %p130 = scmp.ne.s32.totalorder %s113, %s129
    %p131 = scmp.eq.s32.totalorder %s16, 0
    %p132 = por %p130, %p131
    %p133 = scmp.le.s32.totalorder 1, %s10
    %p134 = scmp.lt.s32.totalorder %s10, 5
    %p135 = pnand %p133, %p134
    %p136 = pneg %p135
    // Predicated region
    $region9: #{_predict_all.2} parent=5 // pred_check
      _
    $region10: #{_predict_all.2} parent=5 // pred_check_branch
      %138 = sbr.rel (%p135) target = $region12
    $region11: #{_predict_all.2} parent=5 // pred_region
      %s139 = ssub.s32 %s10, 1
      // Predicated region
      $region13: #{_predict_all.2} parent=11 // pred_check
        %p140 = pneg %p57
      $region14: #{_predict_all.2} parent=11 // pred_check_branch
        %142 = sbr.rel (%p140) target = $region16
      $region15: #{_predict_all.2} parent=11 // pred_region
        _
      $region16: #{_predict_all.2} parent=11 // pred_fallthru
        _
      // Predicated region
      $region17: #{_predict_all.2} parent=11 // pred_check
        %p143 = pneg %p78
      $region18: #{_predict_all.2} parent=11 // pred_check_branch
        %145 = sbr.rel (%p143) target = $region20
      $region19: #{_predict_all.2} parent=11 // pred_region
        _
      $region20: #{_predict_all.2} parent=11 // pred_fallthru
        _
      // Predicated region
      $region21: #{_predict_all.2} parent=11 // pred_check
        %p146 = pneg %p99
      $region22: #{_predict_all.2} parent=11 // pred_check_branch
        %148 = sbr.rel (%p146) target = $region24
      $region23: #{_predict_all.2} parent=11 // pred_region
        _
      $region24: #{_predict_all.2} parent=11 // pred_fallthru
        _
    $region12: #{_predict_all.2} parent=5 // pred_fallthru
      _
    %p149 = scmp.lt.s32.totalorder %s10, 4
    // Predicated region
    $region25: #{_predict_all.2} parent=5 // pred_check
      %p150 = pneg %p149
    $region26: #{_predict_all.2} parent=5 // pred_check_branch
      %152 = sbr.rel (%p150) target = $region28
    $region27: #{_predict_all.2} parent=5 // pred_region
      // Predicated region
      $region29: #{_predict_all.2} parent=27 // pred_check
        %p153 = pneg %p30
      $region30: #{_predict_all.2} parent=27 // pred_check_branch
        %155 = sbr.rel (%p153) target = $region32
      $region31: #{_predict_all.2} parent=27 // pred_region
        %s156 = smul.u32 4, %s10
        %p157 = scmp.lt.s32.totalorder %s156, 15
        %s158 = scalar_select %p157, %s156, 15
        %s159 = smul.addr %s158, 32
        %s160 = smul.addr %s159, 4
        %s161 = scalar_lea.vmem %s0, %s160
        %s162 = smul.u32 4, %s10
      $region32: #{_predict_all.2} parent=27 // pred_fallthru
        _
    $region28: #{_predict_all.2} parent=5 // pred_fallthru
      _
    %p163 = scmp.le.s32.totalorder 1, %s10
    %p164 = scmp.lt.s32.totalorder %s10, 5
    %p165 = pnand %p163, %p164
    %p166 = pneg %p165
    // Predicated region
    $region33: #{_predict_all.2} parent=5 // pred_check
      _
    $region34: #{_predict_all.2} parent=5 // pred_check_branch
      %168 = sbr.rel (%p165) target = $region36
    $region35: #{_predict_all.2} parent=5 // pred_region
      %s169 = ssub.s32 %s10, 1
      %s170 = smul.u32 4, %s15
      %p171 = scmp.lt.s32.totalorder %s170, 15
      %s172 = scalar_select %p171, %s170, 15
      %s173 = smul.addr %s172, 32
      %s174 = smul.addr %s173, 4
      %s175 = scalar_lea.vmem %s0, %s174
      %p176 = pneg %p36
      %p177 = pneg %p33
      %p178 = pneg %p57
      %p179 = pneg %p54
      %p180 = pneg %p78
      %p181 = pneg %p75
      %p182 = pneg %p99
      %p183 = pneg %p96
      %p184 = pneg %p125
      %p185 = pneg %p122
      %s186 = smul.u32 4, %s15
      %p187 = scmp.lt.s32.totalorder %s186, 15
      %s188 = scalar_select %p187, %s186, 15
      %s189 = smul.addr %s188, 8
      %s190 = smul.addr %s189, 8
      %s191 = scalar_lea.vmem %s4, %s190
      %s192 = smul.u32 4, %s15
      %p193 = scmp.lt.s32.totalorder %s192, 15
      %s194 = scalar_select %p193, %s192, 15
      %s195 = smul.addr %s194, 32
      %s196 = smul.addr %s195, 4
      %s197 = scalar_lea.vmem %s0, %s196
      %s198 = smul.u32 4, %s15
      %s199 = smul.u32 4, %s15
      %p200 = scmp.lt.s32.totalorder %s199, 15
      %s201 = scalar_select %p200, %s199, 15
      %s202 = smul.addr %s201, 8
      %s203 = smul.addr %s202, 8
      %s204 = scalar_lea.vmem %s4, %s203
      %s205 = smul.u32 4, %s15
      %v207 = vld [vmem:[%s1] sm:$0xf]
      %v208 = vld [vmem:[%s1 + $0x4] sm:$0xf]
      %v209 = vld [vmem:[%s1 + $0x8] sm:$0xf]
      %v210 = vld [vmem:[%s1 + $0xc] sm:$0xf]
      %v211 = vld [vmem:[%s2] sm:$0x1]
      %v212 = vld [vmem:[%s3] sm:$0xff]
      %v213 = vld [vmem:[%s3 + $0x8] sm:$0xff]
      %v214 = vld [vmem:[%s3 + $0x10] sm:$0xff]
      %v215 = vld [vmem:[%s3 + $0x18] sm:$0xff]
      %v216 = vld [vmem:[%s3 + $0x20] sm:$0xff]
      %v217 = vld [vmem:[%s3 + $0x28] sm:$0xff]
      %v218 = vld [vmem:[%s3 + $0x30] sm:$0xff]
      %v219 = vld [vmem:[%s3 + $0x38] sm:$0xff]
      %v220 = vld [vmem:[%s197] sm:$0xf]
      %v221 = vld [vmem:[%s197 + $0x4] sm:$0xf]
      %v222 = vld [vmem:[%s197 + $0x8] sm:$0xf]
      %v223 = vld [vmem:[%s197 + $0xc] sm:$0xf]
      %v224 = vld [vmem:[%s197 + $0x10] sm:$0xf]
      %v225 = vld [vmem:[%s197 + $0x14] sm:$0xf]
      %v226 = vld [vmem:[%s197 + $0x18] sm:$0xf]
      %v227 = vld [vmem:[%s197 + $0x1c] sm:$0xf]
      %v228 = vld [vmem:[%s197 + $0x20] sm:$0xf]
      %v229 = vld [vmem:[%s197 + $0x24] sm:$0xf]
      %v230 = vld [vmem:[%s197 + $0x28] sm:$0xf]
      %v231 = vld [vmem:[%s197 + $0x2c] sm:$0xf]
      %v232 = vld [vmem:[%s197 + $0x30] sm:$0xf]
      %v233 = vld [vmem:[%s197 + $0x34] sm:$0xf]
      %v234 = vld [vmem:[%s197 + $0x38] sm:$0xf]
      %v235 = vld [vmem:[%s197 + $0x3c] sm:$0xf]
      %v236 = vld [vmem:[%s197 + $0x40] sm:$0xf]
      %v237 = vld [vmem:[%s197 + $0x44] sm:$0xf]
      %v238 = vld [vmem:[%s197 + $0x48] sm:$0xf]
      %v239 = vld [vmem:[%s197 + $0x4c] sm:$0xf]
      %v240 = vld [vmem:[%s197 + $0x50] sm:$0xf]
      %v241 = vld [vmem:[%s197 + $0x54] sm:$0xf]
      %v242 = vld [vmem:[%s197 + $0x58] sm:$0xf]
      %v243 = vld [vmem:[%s197 + $0x5c] sm:$0xf]
      %v244 = vld [vmem:[%s197 + $0x60] sm:$0xf]
      %v245 = vld [vmem:[%s197 + $0x64] sm:$0xf]
      %v246 = vld [vmem:[%s197 + $0x68] sm:$0xf]
      %v247 = vld [vmem:[%s197 + $0x6c] sm:$0xf]
      %v248 = vld [vmem:[%s197 + $0x70] sm:$0xf]
      %v249 = vld [vmem:[%s197 + $0x74] sm:$0xf]
      %v250 = vld [vmem:[%s197 + $0x78] sm:$0xf]
      %v251 = vld [vmem:[%s197 + $0x7c] sm:$0xf]
      %v253 = vlaneseq
      %v254 = vshrl.u32 %v253, 7
      %v255 = vsub.s32 0, %v254
      %v256 = vrot.slane %v211, %v255
      %v290 = vunpack.c.l.b16 %v220
      %v291 = vunpack.c.l.b16 %v221
      %v292 = vunpack.c.l.b16 %v222
      %v293 = vunpack.c.l.b16 %v223
      %v294 = vunpack.c.l.b16 %v224
      %v295 = vunpack.c.l.b16 %v225
      %v296 = vunpack.c.l.b16 %v226
      %v297 = vunpack.c.l.b16 %v227
      %v298 = vunpack.c.l.b16 %v228
      %v299 = vunpack.c.l.b16 %v229
      %v300 = vunpack.c.l.b16 %v230
      %v301 = vunpack.c.l.b16 %v231
      %v302 = vunpack.c.l.b16 %v232
      %v303 = vunpack.c.l.b16 %v233
      %v304 = vunpack.c.l.b16 %v234
      %v305 = vunpack.c.l.b16 %v235
      %v306 = vunpack.c.l.b16 %v236
      %v307 = vunpack.c.l.b16 %v237
      %v308 = vunpack.c.l.b16 %v238
      %v309 = vunpack.c.l.b16 %v239
      %v310 = vunpack.c.l.b16 %v240
      %v311 = vunpack.c.l.b16 %v241
      %v312 = vunpack.c.l.b16 %v242
      %v313 = vunpack.c.l.b16 %v243
      %v314 = vunpack.c.l.b16 %v244
      %v315 = vunpack.c.l.b16 %v245
      %v316 = vunpack.c.l.b16 %v246
      %v317 = vunpack.c.l.b16 %v247
      %v318 = vunpack.c.l.b16 %v248
      %v319 = vunpack.c.l.b16 %v249
      %v320 = vunpack.c.l.b16 %v250
      %v321 = vunpack.c.l.b16 %v251
      %v322 = vpack.c.b16 %v291, %v290
      %v323 = vpack.c.b16 %v293, %v292
      %v324 = vpack.c.b16 %v295, %v294
      %v325 = vpack.c.b16 %v297, %v296
      %v326 = vpack.c.b16 %v299, %v298
      %v327 = vpack.c.b16 %v301, %v300
      %v328 = vpack.c.b16 %v303, %v302
      %v329 = vpack.c.b16 %v305, %v304
      %v330 = vpack.c.b16 %v307, %v306
      %v331 = vpack.c.b16 %v309, %v308
      %v332 = vpack.c.b16 %v311, %v310
      %v333 = vpack.c.b16 %v313, %v312
      %v334 = vpack.c.b16 %v315, %v314
      %v335 = vpack.c.b16 %v317, %v316
      %v336 = vpack.c.b16 %v319, %v318
      %v337 = vpack.c.b16 %v321, %v320
      %v342 = vunpack.c.l.b16 %v207
      %v343 = vunpack.c.l.b16 %v208
      %v344 = vunpack.c.l.b16 %v209
      %v345 = vunpack.c.l.b16 %v210
      %v346 = vpack.c.b16 %v343, %v342
      %v347 = vpack.c.b16 %v345, %v344
      %vm350 = vcmask 261120
      %v352 = vsel %vm350, %v322, 0
      %v355 = vsel %vm350, %v323, 0
      %v358 = vsel %vm350, %v324, 0
      %v361 = vsel %vm350, %v325, 0
      %v364 = vsel %vm350, %v326, 0
      %v367 = vsel %vm350, %v327, 0
      %v370 = vsel %vm350, %v328, 0
      %v373 = vsel %vm350, %v329, 0
      %v376 = vsel %vm350, %v330, 0
      %v379 = vsel %vm350, %v331, 0
      %v382 = vsel %vm350, %v332, 0
      %v385 = vsel %vm350, %v333, 0
      %v388 = vsel %vm350, %v334, 0
      %v391 = vsel %vm350, %v335, 0
      %v394 = vsel %vm350, %v336, 0
      %v397 = vsel %vm350, %v337, 0
      %399 = vmatprep.subr.bf16.mxu0 0
      %400 = vmatpush1.bf16.msra.mxu0 0
      %401 = vmatprep.subr.bf16.mxu0 0
      %402 = vmatpush1.bf16.msra.mxu0 0
      %403 = vmatprep.subr.bf16.mxu0 0
      %404 = vmatpush1.bf16.msra.mxu0 0
      %405 = vmatprep.subr.bf16.mxu0 0
      %406 = vmatpush1.bf16.msra.mxu0 0
      %407 = vmatprep.subr.bf16.mxu0 0
      %408 = vmatpush1.bf16.msra.mxu0 0
      %409 = vmatprep.subr.bf16.mxu0 0
      %410 = vmatpush1.bf16.msra.mxu0 0
      %411 = vmatprep.subr.bf16.mxu0 0
      %412 = vmatpush1.bf16.msra.mxu0 %v347
      %413 = vmatprep.subr.bf16.mxu0 0
      %414 = vmatpush1.bf16.msra.mxu0 %v346
      %415 = vmatprep.subr.bf16.mxu0 0
      %416 = vmatpush2.bf16.msra.mxu0 0
      %417 = vmatprep.subr.bf16.mxu0 0
      %418 = vmatpush2.bf16.msra.mxu0 0
      %419 = vmatprep.subr.bf16.mxu0 0
      %420 = vmatpush2.bf16.msra.mxu0 0
      %421 = vmatprep.subr.bf16.mxu0 0
      %422 = vmatpush2.bf16.msra.mxu0 0
      %423 = vmatprep.subr.bf16.mxu0 0
      %424 = vmatpush2.bf16.msra.mxu0 0
      %425 = vmatprep.subr.bf16.mxu0 0
      %426 = vmatpush2.bf16.msra.mxu0 0
      %427 = vmatprep.subr.bf16.mxu0 0
      %428 = vmatpush2.bf16.msra.mxu0 0
      %429 = vmatprep.subr.bf16.mxu0 0
      %430 = vmatpush2.bf16.msra.mxu0 0
      %431 = vmatprep.mubr.bf16.mxu0 0
      %432 = vmatmul.mubr.bf16.gmra.mxu0 %v352
      %v433 = vpop.f32.mrf.mxu0
      %v434 = vadd.f32 %v256, %v433
      %v435 = vpop.f32.mrf.mxu0
      %v436 = vpop.f32.mrf.mxu0
      %v437 = vadd.f32 %v256, %v436
      %v438 = vpop.f32.mrf.mxu0
      %439 = vmatprep.mubr.bf16.mxu0 0
      %440 = vmatmul.mubr.bf16.gmra.mxu0 %v355
      %v441 = vpop.f32.mrf.mxu0
      %v442 = vadd.f32 %v256, %v441
      %v443 = vpop.f32.mrf.mxu0
      %v444 = vpop.f32.mrf.mxu0
      %v445 = vadd.f32 %v256, %v444
      %v446 = vpop.f32.mrf.mxu0
      %447 = vmatprep.mubr.bf16.mxu0 0
      %448 = vmatmul.mubr.bf16.gmra.mxu0 %v358
      %v449 = vpop.f32.mrf.mxu0
      %v450 = vadd.f32 %v256, %v449
      %v451 = vpop.f32.mrf.mxu0
      %v452 = vpop.f32.mrf.mxu0
      %v453 = vadd.f32 %v256, %v452
      %v454 = vpop.f32.mrf.mxu0
      %455 = vmatprep.mubr.bf16.mxu0 0
      %456 = vmatmul.mubr.bf16.gmra.mxu0 %v361
      %v457 = vpop.f32.mrf.mxu0
      %v458 = vadd.f32 %v256, %v457
      %v459 = vpop.f32.mrf.mxu0
      %v460 = vpop.f32.mrf.mxu0
      %v461 = vadd.f32 %v256, %v460
      %v462 = vpop.f32.mrf.mxu0
      %463 = vmatprep.mubr.bf16.mxu0 0
      %464 = vmatmul.mubr.bf16.gmra.mxu0 %v364
      %v465 = vpop.f32.mrf.mxu0
      %v466 = vadd.f32 %v256, %v465
      %v467 = vpop.f32.mrf.mxu0
      %v468 = vpop.f32.mrf.mxu0
      %v469 = vadd.f32 %v256, %v468
      %v470 = vpop.f32.mrf.mxu0
      %471 = vmatprep.mubr.bf16.mxu0 0
      %472 = vmatmul.mubr.bf16.gmra.mxu0 %v367
      %v473 = vpop.f32.mrf.mxu0
      %v474 = vadd.f32 %v256, %v473
      %v475 = vpop.f32.mrf.mxu0
      %v476 = vpop.f32.mrf.mxu0
      %v477 = vadd.f32 %v256, %v476
      %v478 = vpop.f32.mrf.mxu0
      %479 = vmatprep.mubr.bf16.mxu0 0
      %480 = vmatmul.mubr.bf16.gmra.mxu0 %v370
      %v481 = vpop.f32.mrf.mxu0
      %v482 = vadd.f32 %v256, %v481
      %v483 = vpop.f32.mrf.mxu0
      %v484 = vpop.f32.mrf.mxu0
      %v485 = vadd.f32 %v256, %v484
      %v486 = vpop.f32.mrf.mxu0
      %487 = vmatprep.mubr.bf16.mxu0 0
      %488 = vmatmul.mubr.bf16.gmra.mxu0 %v373
      %v489 = vpop.f32.mrf.mxu0
      %v490 = vadd.f32 %v256, %v489
      %v491 = vpop.f32.mrf.mxu0
      %v492 = vpop.f32.mrf.mxu0
      %v493 = vadd.f32 %v256, %v492
      %v494 = vpop.f32.mrf.mxu0
      %495 = vmatprep.mubr.bf16.mxu0 0
      %496 = vmatmul.mubr.bf16.gmra.mxu0 %v376
      %v497 = vpop.f32.mrf.mxu0
      %v498 = vadd.f32 %v256, %v497
      %v499 = vpop.f32.mrf.mxu0
      %v500 = vpop.f32.mrf.mxu0
      %v501 = vadd.f32 %v256, %v500
      %v502 = vpop.f32.mrf.mxu0
      %503 = vmatprep.mubr.bf16.mxu0 0
      %504 = vmatmul.mubr.bf16.gmra.mxu0 %v379
      %v505 = vpop.f32.mrf.mxu0
      %v506 = vadd.f32 %v256, %v505
      %v507 = vpop.f32.mrf.mxu0
      %v508 = vpop.f32.mrf.mxu0
      %v509 = vadd.f32 %v256, %v508
      %v510 = vpop.f32.mrf.mxu0
      %511 = vmatprep.mubr.bf16.mxu0 0
      %512 = vmatmul.mubr.bf16.gmra.mxu0 %v382
      %v513 = vpop.f32.mrf.mxu0
      %v514 = vadd.f32 %v256, %v513
      %v515 = vpop.f32.mrf.mxu0
      %v516 = vpop.f32.mrf.mxu0
      %v517 = vadd.f32 %v256, %v516
      %v518 = vpop.f32.mrf.mxu0
      %519 = vmatprep.mubr.bf16.mxu0 0
      %520 = vmatmul.mubr.bf16.gmra.mxu0 %v385
      %v521 = vpop.f32.mrf.mxu0
      %v522 = vadd.f32 %v256, %v521
      %v523 = vpop.f32.mrf.mxu0
      %v524 = vpop.f32.mrf.mxu0
      %v525 = vadd.f32 %v256, %v524
      %v526 = vpop.f32.mrf.mxu0
      %527 = vmatprep.mubr.bf16.mxu0 0
      %528 = vmatmul.mubr.bf16.gmra.mxu0 %v388
      %v529 = vpop.f32.mrf.mxu0
      %v530 = vadd.f32 %v256, %v529
      %v531 = vpop.f32.mrf.mxu0
      %v532 = vpop.f32.mrf.mxu0
      %v533 = vadd.f32 %v256, %v532
      %v534 = vpop.f32.mrf.mxu0
      %535 = vmatprep.mubr.bf16.mxu0 0
      %536 = vmatmul.mubr.bf16.gmra.mxu0 %v391
      %v537 = vpop.f32.mrf.mxu0
      %v538 = vadd.f32 %v256, %v537
      %v539 = vpop.f32.mrf.mxu0
      %v540 = vpop.f32.mrf.mxu0
      %v541 = vadd.f32 %v256, %v540
      %v542 = vpop.f32.mrf.mxu0
      %543 = vmatprep.mubr.bf16.mxu0 0
      %544 = vmatmul.mubr.bf16.gmra.mxu0 %v394
      %v545 = vpop.f32.mrf.mxu0
      %v546 = vadd.f32 %v256, %v545
      %v547 = vpop.f32.mrf.mxu0
      %v548 = vpop.f32.mrf.mxu0
      %v549 = vadd.f32 %v256, %v548
      %v550 = vpop.f32.mrf.mxu0
      %551 = vmatprep.mubr.bf16.mxu0 0
      %552 = vmatmul.mubr.bf16.gmra.mxu0 %v397
      %v553 = vpop.f32.mrf.mxu0
      %v554 = vadd.f32 %v256, %v553
      %v555 = vpop.f32.mrf.mxu0
      %v556 = vpop.f32.mrf.mxu0
      %v557 = vadd.f32 %v256, %v556
      %v558 = vpop.f32.mrf.mxu0
      %559 = vdwg.mxu0
      %v560 = vmax.f32 %v434, 0.0
      %v561 = vmax.f32 %v437, 0.0
      %v562 = vmax.f32 %v442, 0.0
      %v563 = vmax.f32 %v445, 0.0
      %v564 = vmax.f32 %v450, 0.0
      %v565 = vmax.f32 %v453, 0.0
      %v566 = vmax.f32 %v458, 0.0
      %v567 = vmax.f32 %v461, 0.0
      %v568 = vmax.f32 %v466, 0.0
      %v569 = vmax.f32 %v469, 0.0
      %v570 = vmax.f32 %v474, 0.0
      %v571 = vmax.f32 %v477, 0.0
      %v572 = vmax.f32 %v482, 0.0
      %v573 = vmax.f32 %v485, 0.0
      %v574 = vmax.f32 %v490, 0.0
      %v575 = vmax.f32 %v493, 0.0
      %v576 = vmax.f32 %v498, 0.0
      %v577 = vmax.f32 %v501, 0.0
      %v578 = vmax.f32 %v506, 0.0
      %v579 = vmax.f32 %v509, 0.0
      %v580 = vmax.f32 %v514, 0.0
      %v581 = vmax.f32 %v517, 0.0
      %v582 = vmax.f32 %v522, 0.0
      %v583 = vmax.f32 %v525, 0.0
      %v584 = vmax.f32 %v530, 0.0
      %v585 = vmax.f32 %v533, 0.0
      %v586 = vmax.f32 %v538, 0.0
      %v587 = vmax.f32 %v541, 0.0
      %v588 = vmax.f32 %v546, 0.0
      %v589 = vmax.f32 %v549, 0.0
      %v590 = vmax.f32 %v554, 0.0
      %v591 = vmax.f32 %v557, 0.0
      %v592 = vpack.c.bf16 %v561, %v560
      %v593 = vpack.c.bf16 %v563, %v562
      %v594 = vpack.c.bf16 %v565, %v564
      %v595 = vpack.c.bf16 %v567, %v566
      %v596 = vpack.c.bf16 %v569, %v568
      %v597 = vpack.c.bf16 %v571, %v570
      %v598 = vpack.c.bf16 %v573, %v572
      %v599 = vpack.c.bf16 %v575, %v574
      %v600 = vpack.c.bf16 %v577, %v576
      %v601 = vpack.c.bf16 %v579, %v578
      %v602 = vpack.c.bf16 %v581, %v580
      %v603 = vpack.c.bf16 %v583, %v582
      %v604 = vpack.c.bf16 %v585, %v584
      %v605 = vpack.c.bf16 %v587, %v586
      %v606 = vpack.c.bf16 %v589, %v588
      %v607 = vpack.c.bf16 %v591, %v590
      %v616 = vunpack.c.l.b16 %v212
      %v617 = vunpack.c.h.b16 %v212
      %v618 = vunpack.c.l.b16 %v213
      %v619 = vunpack.c.h.b16 %v213
      %v620 = vunpack.c.l.b16 %v214
      %v621 = vunpack.c.h.b16 %v214
      %v622 = vunpack.c.l.b16 %v215
      %v623 = vunpack.c.h.b16 %v215
      %v624 = vunpack.c.l.b16 %v216
      %v625 = vunpack.c.h.b16 %v216
      %v626 = vunpack.c.l.b16 %v217
      %v627 = vunpack.c.h.b16 %v217
      %v628 = vunpack.c.l.b16 %v218
      %v629 = vunpack.c.h.b16 %v218
      %v630 = vunpack.c.l.b16 %v219
      %v631 = vunpack.c.h.b16 %v219
      %v632 = vpack.c.b16 %v618, %v616
      %v633 = vpack.c.b16 %v619, %v617
      %v634 = vpack.c.b16 %v622, %v620
      %v635 = vpack.c.b16 %v623, %v621
      %v636 = vpack.c.b16 %v626, %v624
      %v637 = vpack.c.b16 %v627, %v625
      %v638 = vpack.c.b16 %v630, %v628
      %v639 = vpack.c.b16 %v631, %v629
      %648 = vmatprep.subr.bf16.mxu0 0
      %649 = vmatpush1.bf16.msra.mxu0 %v599
      %650 = vmatprep.subr.bf16.mxu0 0
      %651 = vmatpush1.bf16.msra.mxu0 %v598
      %652 = vmatprep.subr.bf16.mxu0 0
      %653 = vmatpush1.bf16.msra.mxu0 %v597
      %654 = vmatprep.subr.bf16.mxu0 0
      %655 = vmatpush1.bf16.msra.mxu0 %v596
      %656 = vmatprep.subr.bf16.mxu0 0
      %657 = vmatpush1.bf16.msra.mxu0 %v595
      %658 = vmatprep.subr.bf16.mxu0 0
      %659 = vmatpush1.bf16.msra.mxu0 %v594
      %660 = vmatprep.subr.bf16.mxu0 0
      %661 = vmatpush1.bf16.msra.mxu0 %v593
      %662 = vmatprep.subr.bf16.mxu0 0
      %663 = vmatpush1.bf16.msra.mxu0 %v592
      %664 = vmatprep.subr.bf16.mxu0 0
      %665 = vmatpush2.bf16.msra.mxu0 %v607
      %666 = vmatprep.subr.bf16.mxu0 0
      %667 = vmatpush2.bf16.msra.mxu0 %v606
      %668 = vmatprep.subr.bf16.mxu0 0
      %669 = vmatpush2.bf16.msra.mxu0 %v605
      %670 = vmatprep.subr.bf16.mxu0 0
      %671 = vmatpush2.bf16.msra.mxu0 %v604
      %672 = vmatprep.subr.bf16.mxu0 0
      %673 = vmatpush2.bf16.msra.mxu0 %v603
      %674 = vmatprep.subr.bf16.mxu0 0
      %675 = vmatpush2.bf16.msra.mxu0 %v602
      %676 = vmatprep.subr.bf16.mxu0 0
      %677 = vmatpush2.bf16.msra.mxu0 %v601
      %678 = vmatprep.subr.bf16.mxu0 0
      %679 = vmatpush2.bf16.msra.mxu0 %v600
      %680 = vmatprep.mubr.bf16.mxu0 %v633
      %681 = vmatmul.mubr.bf16.gmra.mxu0 %v632
      %v682 = vpop.f32.mrf.mxu0
      %v683 = vadd.f32 0.0, %v682
      %v684 = vpop.f32.mrf.mxu0
      %v685 = vpop.f32.mrf.mxu0
      %v686 = vadd.f32 0.0, %v685
      %v687 = vpop.f32.mrf.mxu0
      %688 = vmatprep.mubr.bf16.mxu0 %v635
      %689 = vmatmul.mubr.bf16.gmra.mxu0 %v634
      %v690 = vpop.f32.mrf.mxu0
      %v691 = vadd.f32 0.0, %v690
      %v692 = vpop.f32.mrf.mxu0
      %v693 = vpop.f32.mrf.mxu0
      %v694 = vadd.f32 0.0, %v693
      %v695 = vpop.f32.mrf.mxu0
      %696 = vmatprep.mubr.bf16.mxu0 %v637
      %697 = vmatmul.mubr.bf16.gmra.mxu0 %v636
      %v698 = vpop.f32.mrf.mxu0
      %v699 = vadd.f32 0.0, %v698
      %v700 = vpop.f32.mrf.mxu0
      %v701 = vpop.f32.mrf.mxu0
      %v702 = vadd.f32 0.0, %v701
      %v703 = vpop.f32.mrf.mxu0
      %704 = vmatprep.mubr.bf16.mxu0 %v639
      %705 = vmatmul.mubr.bf16.gmra.mxu0 %v638
      %v706 = vpop.f32.mrf.mxu0
      %v707 = vadd.f32 0.0, %v706
      %v708 = vpop.f32.mrf.mxu0
      %v709 = vpop.f32.mrf.mxu0
      %v710 = vadd.f32 0.0, %v709
      %v711 = vpop.f32.mrf.mxu0
      %712 = vdwg.mxu0
      %713 = vst [vmem:[%s204] sm:$0xff] %v683
      %714 = vst [vmem:[%s204 + $0x8] sm:$0xff] %v686
      %715 = vst [vmem:[%s204 + $0x10] sm:$0xff] %v691
      %716 = vst [vmem:[%s204 + $0x18] sm:$0xff] %v694
      %717 = vst [vmem:[%s204 + $0x20] sm:$0xff] %v699
      %718 = vst [vmem:[%s204 + $0x28] sm:$0xff] %v702
      %719 = vst [vmem:[%s204 + $0x30] sm:$0xff] %v707
      %720 = vst [vmem:[%s204 + $0x38] sm:$0xff] %v710
      %s721 = scalar_lea.vmem %s197, 128
      %v722 = vld [vmem:[%s721] sm:$0xf]
      %v723 = vld [vmem:[%s721 + $0x4] sm:$0xf]
      %v724 = vld [vmem:[%s721 + $0x8] sm:$0xf]
      %v725 = vld [vmem:[%s721 + $0xc] sm:$0xf]
      %v726 = vld [vmem:[%s721 + $0x10] sm:$0xf]
      %v727 = vld [vmem:[%s721 + $0x14] sm:$0xf]
      %v728 = vld [vmem:[%s721 + $0x18] sm:$0xf]
      %v729 = vld [vmem:[%s721 + $0x1c] sm:$0xf]
      %v730 = vld [vmem:[%s721 + $0x20] sm:$0xf]
      %v731 = vld [vmem:[%s721 + $0x24] sm:$0xf]
      %v732 = vld [vmem:[%s721 + $0x28] sm:$0xf]
      %v733 = vld [vmem:[%s721 + $0x2c] sm:$0xf]
      %v734 = vld [vmem:[%s721 + $0x30] sm:$0xf]
      %v735 = vld [vmem:[%s721 + $0x34] sm:$0xf]
      %v736 = vld [vmem:[%s721 + $0x38] sm:$0xf]
      %v737 = vld [vmem:[%s721 + $0x3c] sm:$0xf]
      %v738 = vld [vmem:[%s721 + $0x40] sm:$0xf]
      %v739 = vld [vmem:[%s721 + $0x44] sm:$0xf]
      %v740 = vld [vmem:[%s721 + $0x48] sm:$0xf]
      %v741 = vld [vmem:[%s721 + $0x4c] sm:$0xf]
      %v742 = vld [vmem:[%s721 + $0x50] sm:$0xf]
      %v743 = vld [vmem:[%s721 + $0x54] sm:$0xf]
      %v744 = vld [vmem:[%s721 + $0x58] sm:$0xf]
      %v745 = vld [vmem:[%s721 + $0x5c] sm:$0xf]
      %v746 = vld [vmem:[%s721 + $0x60] sm:$0xf]
      %v747 = vld [vmem:[%s721 + $0x64] sm:$0xf]
      %v748 = vld [vmem:[%s721 + $0x68] sm:$0xf]
      %v749 = vld [vmem:[%s721 + $0x6c] sm:$0xf]
      %v750 = vld [vmem:[%s721 + $0x70] sm:$0xf]
      %v751 = vld [vmem:[%s721 + $0x74] sm:$0xf]
      %v752 = vld [vmem:[%s721 + $0x78] sm:$0xf]
      %v753 = vld [vmem:[%s721 + $0x7c] sm:$0xf]
      %v786 = vunpack.c.l.b16 %v722
      %v787 = vunpack.c.l.b16 %v723
      %v788 = vunpack.c.l.b16 %v724
      %v789 = vunpack.c.l.b16 %v725
      %v790 = vunpack.c.l.b16 %v726
      %v791 = vunpack.c.l.b16 %v727
      %v792 = vunpack.c.l.b16 %v728
      %v793 = vunpack.c.l.b16 %v729
      %v794 = vunpack.c.l.b16 %v730
      %v795 = vunpack.c.l.b16 %v731
      %v796 = vunpack.c.l.b16 %v732
      %v797 = vunpack.c.l.b16 %v733
      %v798 = vunpack.c.l.b16 %v734
      %v799 = vunpack.c.l.b16 %v735
      %v800 = vunpack.c.l.b16 %v736
      %v801 = vunpack.c.l.b16 %v737
      %v802 = vunpack.c.l.b16 %v738
      %v803 = vunpack.c.l.b16 %v739
      %v804 = vunpack.c.l.b16 %v740
      %v805 = vunpack.c.l.b16 %v741
      %v806 = vunpack.c.l.b16 %v742
      %v807 = vunpack.c.l.b16 %v743
      %v808 = vunpack.c.l.b16 %v744
      %v809 = vunpack.c.l.b16 %v745
      %v810 = vunpack.c.l.b16 %v746
      %v811 = vunpack.c.l.b16 %v747
      %v812 = vunpack.c.l.b16 %v748
      %v813 = vunpack.c.l.b16 %v749
      %v814 = vunpack.c.l.b16 %v750
      %v815 = vunpack.c.l.b16 %v751
      %v816 = vunpack.c.l.b16 %v752
      %v817 = vunpack.c.l.b16 %v753
      %v818 = vpack.c.b16 %v787, %v786
      %v819 = vpack.c.b16 %v789, %v788
      %v820 = vpack.c.b16 %v791, %v790
      %v821 = vpack.c.b16 %v793, %v792
      %v822 = vpack.c.b16 %v795, %v794
      %v823 = vpack.c.b16 %v797, %v796
      %v824 = vpack.c.b16 %v799, %v798
      %v825 = vpack.c.b16 %v801, %v800
      %v826 = vpack.c.b16 %v803, %v802
      %v827 = vpack.c.b16 %v805, %v804
      %v828 = vpack.c.b16 %v807, %v806
      %v829 = vpack.c.b16 %v809, %v808
      %v830 = vpack.c.b16 %v811, %v810
      %v831 = vpack.c.b16 %v813, %v812
      %v832 = vpack.c.b16 %v815, %v814
      %v833 = vpack.c.b16 %v817, %v816
      %v835 = vsel %vm350, %v818, 0
      %v838 = vsel %vm350, %v819, 0
      %v841 = vsel %vm350, %v820, 0
      %v844 = vsel %vm350, %v821, 0
      %v847 = vsel %vm350, %v822, 0
      %v850 = vsel %vm350, %v823, 0
      %v853 = vsel %vm350, %v824, 0
      %v856 = vsel %vm350, %v825, 0
      %v859 = vsel %vm350, %v826, 0
      %v862 = vsel %vm350, %v827, 0
      %v865 = vsel %vm350, %v828, 0
      %v868 = vsel %vm350, %v829, 0
      %v871 = vsel %vm350, %v830, 0
      %v874 = vsel %vm350, %v831, 0
      %v877 = vsel %vm350, %v832, 0
      %v880 = vsel %vm350, %v833, 0
      %882 = vmatprep.subr.bf16.mxu0 0
      %883 = vmatpush1.bf16.msra.mxu0 0
      %884 = vmatprep.subr.bf16.mxu0 0
      %885 = vmatpush1.bf16.msra.mxu0 0
      %886 = vmatprep.subr.bf16.mxu0 0
      %887 = vmatpush1.bf16.msra.mxu0 0
      %888 = vmatprep.subr.bf16.mxu0 0
      %889 = vmatpush1.bf16.msra.mxu0 0
      %890 = vmatprep.subr.bf16.mxu0 0
      %891 = vmatpush1.bf16.msra.mxu0 0
      %892 = vmatprep.subr.bf16.mxu0 0
      %893 = vmatpush1.bf16.msra.mxu0 0
      %894 = vmatprep.subr.bf16.mxu0 0
      %895 = vmatpush1.bf16.msra.mxu0 %v347
      %896 = vmatprep.subr.bf16.mxu0 0
      %897 = vmatpush1.bf16.msra.mxu0 %v346
      %898 = vmatprep.subr.bf16.mxu0 0
      %899 = vmatpush2.bf16.msra.mxu0 0
      %900 = vmatprep.subr.bf16.mxu0 0
      %901 = vmatpush2.bf16.msra.mxu0 0
      %902 = vmatprep.subr.bf16.mxu0 0
      %903 = vmatpush2.bf16.msra.mxu0 0
      %904 = vmatprep.subr.bf16.mxu0 0
      %905 = vmatpush2.bf16.msra.mxu0 0
      %906 = vmatprep.subr.bf16.mxu0 0
      %907 = vmatpush2.bf16.msra.mxu0 0
      %908 = vmatprep.subr.bf16.mxu0 0
      %909 = vmatpush2.bf16.msra.mxu0 0
      %910 = vmatprep.subr.bf16.mxu0 0
      %911 = vmatpush2.bf16.msra.mxu0 0
      %912 = vmatprep.subr.bf16.mxu0 0
      %913 = vmatpush2.bf16.msra.mxu0 0
      %914 = vmatprep.mubr.bf16.mxu0 0
      %915 = vmatmul.mubr.bf16.gmra.mxu0 %v835
      %v916 = vpop.f32.mrf.mxu0
      %v917 = vadd.f32 %v256, %v916
      %v918 = vpop.f32.mrf.mxu0
      %v919 = vpop.f32.mrf.mxu0
      %v920 = vadd.f32 %v256, %v919
      %v921 = vpop.f32.mrf.mxu0
      %922 = vmatprep.mubr.bf16.mxu0 0
      %923 = vmatmul.mubr.bf16.gmra.mxu0 %v838
      %v924 = vpop.f32.mrf.mxu0
      %v925 = vadd.f32 %v256, %v924
      %v926 = vpop.f32.mrf.mxu0
      %v927 = vpop.f32.mrf.mxu0
      %v928 = vadd.f32 %v256, %v927
      %v929 = vpop.f32.mrf.mxu0
      %930 = vmatprep.mubr.bf16.mxu0 0
      %931 = vmatmul.mubr.bf16.gmra.mxu0 %v841
      %v932 = vpop.f32.mrf.mxu0
      %v933 = vadd.f32 %v256, %v932
      %v934 = vpop.f32.mrf.mxu0
      %v935 = vpop.f32.mrf.mxu0
      %v936 = vadd.f32 %v256, %v935
      %v937 = vpop.f32.mrf.mxu0
      %938 = vmatprep.mubr.bf16.mxu0 0
      %939 = vmatmul.mubr.bf16.gmra.mxu0 %v844
      %v940 = vpop.f32.mrf.mxu0
      %v941 = vadd.f32 %v256, %v940
      %v942 = vpop.f32.mrf.mxu0
      %v943 = vpop.f32.mrf.mxu0
      %v944 = vadd.f32 %v256, %v943
      %v945 = vpop.f32.mrf.mxu0
      %946 = vmatprep.mubr.bf16.mxu0 0
      %947 = vmatmul.mubr.bf16.gmra.mxu0 %v847
      %v948 = vpop.f32.mrf.mxu0
      %v949 = vadd.f32 %v256, %v948
      %v950 = vpop.f32.mrf.mxu0
      %v951 = vpop.f32.mrf.mxu0
      %v952 = vadd.f32 %v256, %v951
      %v953 = vpop.f32.mrf.mxu0
      %954 = vmatprep.mubr.bf16.mxu0 0
      %955 = vmatmul.mubr.bf16.gmra.mxu0 %v850
      %v956 = vpop.f32.mrf.mxu0
      %v957 = vadd.f32 %v256, %v956
      %v958 = vpop.f32.mrf.mxu0
      %v959 = vpop.f32.mrf.mxu0
      %v960 = vadd.f32 %v256, %v959
      %v961 = vpop.f32.mrf.mxu0
      %962 = vmatprep.mubr.bf16.mxu0 0
      %963 = vmatmul.mubr.bf16.gmra.mxu0 %v853
      %v964 = vpop.f32.mrf.mxu0
      %v965 = vadd.f32 %v256, %v964
      %v966 = vpop.f32.mrf.mxu0
      %v967 = vpop.f32.mrf.mxu0
      %v968 = vadd.f32 %v256, %v967
      %v969 = vpop.f32.mrf.mxu0
      %970 = vmatprep.mubr.bf16.mxu0 0
      %971 = vmatmul.mubr.bf16.gmra.mxu0 %v856
      %v972 = vpop.f32.mrf.mxu0
      %v973 = vadd.f32 %v256, %v972
      %v974 = vpop.f32.mrf.mxu0
      %v975 = vpop.f32.mrf.mxu0
      %v976 = vadd.f32 %v256, %v975
      %v977 = vpop.f32.mrf.mxu0
      %978 = vmatprep.mubr.bf16.mxu0 0
      %979 = vmatmul.mubr.bf16.gmra.mxu0 %v859
      %v980 = vpop.f32.mrf.mxu0
      %v981 = vadd.f32 %v256, %v980
      %v982 = vpop.f32.mrf.mxu0
      %v983 = vpop.f32.mrf.mxu0
      %v984 = vadd.f32 %v256, %v983
      %v985 = vpop.f32.mrf.mxu0
      %986 = vmatprep.mubr.bf16.mxu0 0
      %987 = vmatmul.mubr.bf16.gmra.mxu0 %v862
      %v988 = vpop.f32.mrf.mxu0
      %v989 = vadd.f32 %v256, %v988
      %v990 = vpop.f32.mrf.mxu0
      %v991 = vpop.f32.mrf.mxu0
      %v992 = vadd.f32 %v256, %v991
      %v993 = vpop.f32.mrf.mxu0
      %994 = vmatprep.mubr.bf16.mxu0 0
      %995 = vmatmul.mubr.bf16.gmra.mxu0 %v865
      %v996 = vpop.f32.mrf.mxu0
      %v997 = vadd.f32 %v256, %v996
      %v998 = vpop.f32.mrf.mxu0
      %v999 = vpop.f32.mrf.mxu0
      %v1000 = vadd.f32 %v256, %v999
      %v1001 = vpop.f32.mrf.mxu0
      %1002 = vmatprep.mubr.bf16.mxu0 0
      %1003 = vmatmul.mubr.bf16.gmra.mxu0 %v868
      %v1004 = vpop.f32.mrf.mxu0
      %v1005 = vadd.f32 %v256, %v1004
      %v1006 = vpop.f32.mrf.mxu0
      %v1007 = vpop.f32.mrf.mxu0
      %v1008 = vadd.f32 %v256, %v1007
      %v1009 = vpop.f32.mrf.mxu0
      %1010 = vmatprep.mubr.bf16.mxu0 0
      %1011 = vmatmul.mubr.bf16.gmra.mxu0 %v871
      %v1012 = vpop.f32.mrf.mxu0
      %v1013 = vadd.f32 %v256, %v1012
      %v1014 = vpop.f32.mrf.mxu0
      %v1015 = vpop.f32.mrf.mxu0
      %v1016 = vadd.f32 %v256, %v1015
      %v1017 = vpop.f32.mrf.mxu0
      %1018 = vmatprep.mubr.bf16.mxu0 0
      %1019 = vmatmul.mubr.bf16.gmra.mxu0 %v874
      %v1020 = vpop.f32.mrf.mxu0
      %v1021 = vadd.f32 %v256, %v1020
      %v1022 = vpop.f32.mrf.mxu0
      %v1023 = vpop.f32.mrf.mxu0
      %v1024 = vadd.f32 %v256, %v1023
      %v1025 = vpop.f32.mrf.mxu0
      %1026 = vmatprep.mubr.bf16.mxu0 0
      %1027 = vmatmul.mubr.bf16.gmra.mxu0 %v877
      %v1028 = vpop.f32.mrf.mxu0
      %v1029 = vadd.f32 %v256, %v1028
      %v1030 = vpop.f32.mrf.mxu0
      %v1031 = vpop.f32.mrf.mxu0
      %v1032 = vadd.f32 %v256, %v1031
      %v1033 = vpop.f32.mrf.mxu0
      %1034 = vmatprep.mubr.bf16.mxu0 0
      %1035 = vmatmul.mubr.bf16.gmra.mxu0 %v880
      %v1036 = vpop.f32.mrf.mxu0
      %v1037 = vadd.f32 %v256, %v1036
      %v1038 = vpop.f32.mrf.mxu0
      %v1039 = vpop.f32.mrf.mxu0
      %v1040 = vadd.f32 %v256, %v1039
      %v1041 = vpop.f32.mrf.mxu0
      %1042 = vdwg.mxu0
      %v1043 = vmax.f32 %v917, 0.0
      %v1044 = vmax.f32 %v920, 0.0
      %v1045 = vmax.f32 %v925, 0.0
      %v1046 = vmax.f32 %v928, 0.0
      %v1047 = vmax.f32 %v933, 0.0
      %v1048 = vmax.f32 %v936, 0.0
      %v1049 = vmax.f32 %v941, 0.0
      %v1050 = vmax.f32 %v944, 0.0
      %v1051 = vmax.f32 %v949, 0.0
      %v1052 = vmax.f32 %v952, 0.0
      %v1053 = vmax.f32 %v957, 0.0
      %v1054 = vmax.f32 %v960, 0.0
      %v1055 = vmax.f32 %v965, 0.0
      %v1056 = vmax.f32 %v968, 0.0
      %v1057 = vmax.f32 %v973, 0.0
      %v1058 = vmax.f32 %v976, 0.0
      %v1059 = vmax.f32 %v981, 0.0
      %v1060 = vmax.f32 %v984, 0.0
      %v1061 = vmax.f32 %v989, 0.0
      %v1062 = vmax.f32 %v992, 0.0
      %v1063 = vmax.f32 %v997, 0.0
      %v1064 = vmax.f32 %v1000, 0.0
      %v1065 = vmax.f32 %v1005, 0.0
      %v1066 = vmax.f32 %v1008, 0.0
      %v1067 = vmax.f32 %v1013, 0.0
      %v1068 = vmax.f32 %v1016, 0.0
      %v1069 = vmax.f32 %v1021, 0.0
      %v1070 = vmax.f32 %v1024, 0.0
      %v1071 = vmax.f32 %v1029, 0.0
      %v1072 = vmax.f32 %v1032, 0.0
      %v1073 = vmax.f32 %v1037, 0.0
      %v1074 = vmax.f32 %v1040, 0.0
      %v1075 = vpack.c.bf16 %v1044, %v1043
      %v1076 = vpack.c.bf16 %v1046, %v1045
      %v1077 = vpack.c.bf16 %v1048, %v1047
      %v1078 = vpack.c.bf16 %v1050, %v1049
      %v1079 = vpack.c.bf16 %v1052, %v1051
      %v1080 = vpack.c.bf16 %v1054, %v1053
      %v1081 = vpack.c.bf16 %v1056, %v1055
      %v1082 = vpack.c.bf16 %v1058, %v1057
      %v1083 = vpack.c.bf16 %v1060, %v1059
      %v1084 = vpack.c.bf16 %v1062, %v1061
      %v1085 = vpack.c.bf16 %v1064, %v1063
      %v1086 = vpack.c.bf16 %v1066, %v1065
      %v1087 = vpack.c.bf16 %v1068, %v1067
      %v1088 = vpack.c.bf16 %v1070, %v1069
      %v1089 = vpack.c.bf16 %v1072, %v1071
      %v1090 = vpack.c.bf16 %v1074, %v1073
      %1091 = vmatprep.subr.bf16.mxu0 0
      %1092 = vmatpush1.bf16.msra.mxu0 %v1082
      %1093 = vmatprep.subr.bf16.mxu0 0
      %1094 = vmatpush1.bf16.msra.mxu0 %v1081
      %1095 = vmatprep.subr.bf16.mxu0 0
      %1096 = vmatpush1.bf16.msra.mxu0 %v1080
      %1097 = vmatprep.subr.bf16.mxu0 0
      %1098 = vmatpush1.bf16.msra.mxu0 %v1079
      %1099 = vmatprep.subr.bf16.mxu0 0
      %1100 = vmatpush1.bf16.msra.mxu0 %v1078
      %1101 = vmatprep.subr.bf16.mxu0 0
      %1102 = vmatpush1.bf16.msra.mxu0 %v1077
      %1103 = vmatprep.subr.bf16.mxu0 0
      %1104 = vmatpush1.bf16.msra.mxu0 %v1076
      %1105 = vmatprep.subr.bf16.mxu0 0
      %1106 = vmatpush1.bf16.msra.mxu0 %v1075
      %1107 = vmatprep.subr.bf16.mxu0 0
      %1108 = vmatpush2.bf16.msra.mxu0 %v1090
      %1109 = vmatprep.subr.bf16.mxu0 0
      %1110 = vmatpush2.bf16.msra.mxu0 %v1089
      %1111 = vmatprep.subr.bf16.mxu0 0
      %1112 = vmatpush2.bf16.msra.mxu0 %v1088
      %1113 = vmatprep.subr.bf16.mxu0 0
      %1114 = vmatpush2.bf16.msra.mxu0 %v1087
      %1115 = vmatprep.subr.bf16.mxu0 0
      %1116 = vmatpush2.bf16.msra.mxu0 %v1086
      %1117 = vmatprep.subr.bf16.mxu0 0
      %1118 = vmatpush2.bf16.msra.mxu0 %v1085
      %1119 = vmatprep.subr.bf16.mxu0 0
      %1120 = vmatpush2.bf16.msra.mxu0 %v1084
      %1121 = vmatprep.subr.bf16.mxu0 0
      %1122 = vmatpush2.bf16.msra.mxu0 %v1083
      %1123 = vmatprep.mubr.bf16.mxu0 %v633
      %1124 = vmatmul.mubr.bf16.gmra.mxu0 %v632
      %v1125 = vpop.f32.mrf.mxu0
      %v1126 = vadd.f32 0.0, %v1125
      %v1127 = vpop.f32.mrf.mxu0
      %v1128 = vpop.f32.mrf.mxu0
      %v1129 = vadd.f32 0.0, %v1128
      %v1130 = vpop.f32.mrf.mxu0
      %1131 = vmatprep.mubr.bf16.mxu0 %v635
      %1132 = vmatmul.mubr.bf16.gmra.mxu0 %v634
      %v1133 = vpop.f32.mrf.mxu0
      %v1134 = vadd.f32 0.0, %v1133
      %v1135 = vpop.f32.mrf.mxu0
      %v1136 = vpop.f32.mrf.mxu0
      %v1137 = vadd.f32 0.0, %v1136
      %v1138 = vpop.f32.mrf.mxu0
      %1139 = vmatprep.mubr.bf16.mxu0 %v637
      %1140 = vmatmul.mubr.bf16.gmra.mxu0 %v636
      %v1141 = vpop.f32.mrf.mxu0
      %v1142 = vadd.f32 0.0, %v1141
      %v1143 = vpop.f32.mrf.mxu0
      %v1144 = vpop.f32.mrf.mxu0
      %v1145 = vadd.f32 0.0, %v1144
      %v1146 = vpop.f32.mrf.mxu0
      %1147 = vmatprep.mubr.bf16.mxu0 %v639
      %1148 = vmatmul.mubr.bf16.gmra.mxu0 %v638
      %v1149 = vpop.f32.mrf.mxu0
      %v1150 = vadd.f32 0.0, %v1149
      %v1151 = vpop.f32.mrf.mxu0
      %v1152 = vpop.f32.mrf.mxu0
      %v1153 = vadd.f32 0.0, %v1152
      %v1154 = vpop.f32.mrf.mxu0
      %1155 = vdwg.mxu0
      %s1156 = scalar_lea.vmem %s204, 64
      %1157 = vst [vmem:[%s1156] sm:$0xff] %v1126
      %1158 = vst [vmem:[%s1156 + $0x8] sm:$0xff] %v1129
      %1159 = vst [vmem:[%s1156 + $0x10] sm:$0xff] %v1134
      %1160 = vst [vmem:[%s1156 + $0x18] sm:$0xff] %v1137
      %1161 = vst [vmem:[%s1156 + $0x20] sm:$0xff] %v1142
      %1162 = vst [vmem:[%s1156 + $0x28] sm:$0xff] %v1145
      %1163 = vst [vmem:[%s1156 + $0x30] sm:$0xff] %v1150
      %1164 = vst [vmem:[%s1156 + $0x38] sm:$0xff] %v1153
      %s1165 = scalar_lea.vmem %s197, 256
      %v1166 = vld [vmem:[%s1165] sm:$0xf]
      %v1167 = vld [vmem:[%s1165 + $0x4] sm:$0xf]
      %v1168 = vld [vmem:[%s1165 + $0x8] sm:$0xf]
      %v1169 = vld [vmem:[%s1165 + $0xc] sm:$0xf]
      %v1170 = vld [vmem:[%s1165 + $0x10] sm:$0xf]
      %v1171 = vld [vmem:[%s1165 + $0x14] sm:$0xf]
      %v1172 = vld [vmem:[%s1165 + $0x18] sm:$0xf]
      %v1173 = vld [vmem:[%s1165 + $0x1c] sm:$0xf]
      %v1174 = vld [vmem:[%s1165 + $0x20] sm:$0xf]
      %v1175 = vld [vmem:[%s1165 + $0x24] sm:$0xf]
      %v1176 = vld [vmem:[%s1165 + $0x28] sm:$0xf]
      %v1177 = vld [vmem:[%s1165 + $0x2c] sm:$0xf]
      %v1178 = vld [vmem:[%s1165 + $0x30] sm:$0xf]
      %v1179 = vld [vmem:[%s1165 + $0x34] sm:$0xf]
      %v1180 = vld [vmem:[%s1165 + $0x38] sm:$0xf]
      %v1181 = vld [vmem:[%s1165 + $0x3c] sm:$0xf]
      %v1182 = vld [vmem:[%s1165 + $0x40] sm:$0xf]
      %v1183 = vld [vmem:[%s1165 + $0x44] sm:$0xf]
      %v1184 = vld [vmem:[%s1165 + $0x48] sm:$0xf]
      %v1185 = vld [vmem:[%s1165 + $0x4c] sm:$0xf]
      %v1186 = vld [vmem:[%s1165 + $0x50] sm:$0xf]
      %v1187 = vld [vmem:[%s1165 + $0x54] sm:$0xf]
      %v1188 = vld [vmem:[%s1165 + $0x58] sm:$0xf]
      %v1189 = vld [vmem:[%s1165 + $0x5c] sm:$0xf]
      %v1190 = vld [vmem:[%s1165 + $0x60] sm:$0xf]
      %v1191 = vld [vmem:[%s1165 + $0x64] sm:$0xf]
      %v1192 = vld [vmem:[%s1165 + $0x68] sm:$0xf]
      %v1193 = vld [vmem:[%s1165 + $0x6c] sm:$0xf]
      %v1194 = vld [vmem:[%s1165 + $0x70] sm:$0xf]
      %v1195 = vld [vmem:[%s1165 + $0x74] sm:$0xf]
      %v1196 = vld [vmem:[%s1165 + $0x78] sm:$0xf]
      %v1197 = vld [vmem:[%s1165 + $0x7c] sm:$0xf]
      %v1230 = vunpack.c.l.b16 %v1166
      %v1231 = vunpack.c.l.b16 %v1167
      %v1232 = vunpack.c.l.b16 %v1168
      %v1233 = vunpack.c.l.b16 %v1169
      %v1234 = vunpack.c.l.b16 %v1170
      %v1235 = vunpack.c.l.b16 %v1171
      %v1236 = vunpack.c.l.b16 %v1172
      %v1237 = vunpack.c.l.b16 %v1173
      %v1238 = vunpack.c.l.b16 %v1174
      %v1239 = vunpack.c.l.b16 %v1175
      %v1240 = vunpack.c.l.b16 %v1176
      %v1241 = vunpack.c.l.b16 %v1177
      %v1242 = vunpack.c.l.b16 %v1178
      %v1243 = vunpack.c.l.b16 %v1179
      %v1244 = vunpack.c.l.b16 %v1180
      %v1245 = vunpack.c.l.b16 %v1181
      %v1246 = vunpack.c.l.b16 %v1182
      %v1247 = vunpack.c.l.b16 %v1183
      %v1248 = vunpack.c.l.b16 %v1184
      %v1249 = vunpack.c.l.b16 %v1185
      %v1250 = vunpack.c.l.b16 %v1186
      %v1251 = vunpack.c.l.b16 %v1187
      %v1252 = vunpack.c.l.b16 %v1188
      %v1253 = vunpack.c.l.b16 %v1189
      %v1254 = vunpack.c.l.b16 %v1190
      %v1255 = vunpack.c.l.b16 %v1191
      %v1256 = vunpack.c.l.b16 %v1192
      %v1257 = vunpack.c.l.b16 %v1193
      %v1258 = vunpack.c.l.b16 %v1194
      %v1259 = vunpack.c.l.b16 %v1195
      %v1260 = vunpack.c.l.b16 %v1196
      %v1261 = vunpack.c.l.b16 %v1197
      %v1262 = vpack.c.b16 %v1231, %v1230
      %v1263 = vpack.c.b16 %v1233, %v1232
      %v1264 = vpack.c.b16 %v1235, %v1234
      %v1265 = vpack.c.b16 %v1237, %v1236
      %v1266 = vpack.c.b16 %v1239, %v1238
      %v1267 = vpack.c.b16 %v1241, %v1240
      %v1268 = vpack.c.b16 %v1243, %v1242
      %v1269 = vpack.c.b16 %v1245, %v1244
      %v1270 = vpack.c.b16 %v1247, %v1246
      %v1271 = vpack.c.b16 %v1249, %v1248
      %v1272 = vpack.c.b16 %v1251, %v1250
      %v1273 = vpack.c.b16 %v1253, %v1252
      %v1274 = vpack.c.b16 %v1255, %v1254
      %v1275 = vpack.c.b16 %v1257, %v1256
      %v1276 = vpack.c.b16 %v1259, %v1258
      %v1277 = vpack.c.b16 %v1261, %v1260
      %v1279 = vsel %vm350, %v1262, 0
      %v1282 = vsel %vm350, %v1263, 0
      %v1285 = vsel %vm350, %v1264, 0
      %v1288 = vsel %vm350, %v1265, 0
      %v1291 = vsel %vm350, %v1266, 0
      %v1294 = vsel %vm350, %v1267, 0
      %v1297 = vsel %vm350, %v1268, 0
      %v1300 = vsel %vm350, %v1269, 0
      %v1303 = vsel %vm350, %v1270, 0
      %v1306 = vsel %vm350, %v1271, 0
      %v1309 = vsel %vm350, %v1272, 0
      %v1312 = vsel %vm350, %v1273, 0
      %v1315 = vsel %vm350, %v1274, 0
      %v1318 = vsel %vm350, %v1275, 0
      %v1321 = vsel %vm350, %v1276, 0
      %v1324 = vsel %vm350, %v1277, 0
      %1326 = vmatprep.subr.bf16.mxu0 0
      %1327 = vmatpush1.bf16.msra.mxu0 0
      %1328 = vmatprep.subr.bf16.mxu0 0
      %1329 = vmatpush1.bf16.msra.mxu0 0
      %1330 = vmatprep.subr.bf16.mxu0 0
      %1331 = vmatpush1.bf16.msra.mxu0 0
      %1332 = vmatprep.subr.bf16.mxu0 0
      %1333 = vmatpush1.bf16.msra.mxu0 0
      %1334 = vmatprep.subr.bf16.mxu0 0
      %1335 = vmatpush1.bf16.msra.mxu0 0
      %1336 = vmatprep.subr.bf16.mxu0 0
      %1337 = vmatpush1.bf16.msra.mxu0 0
      %1338 = vmatprep.subr.bf16.mxu0 0
      %1339 = vmatpush1.bf16.msra.mxu0 %v347
      %1340 = vmatprep.subr.bf16.mxu0 0
      %1341 = vmatpush1.bf16.msra.mxu0 %v346
      %1342 = vmatprep.subr.bf16.mxu0 0
      %1343 = vmatpush2.bf16.msra.mxu0 0
      %1344 = vmatprep.subr.bf16.mxu0 0
      %1345 = vmatpush2.bf16.msra.mxu0 0
      %1346 = vmatprep.subr.bf16.mxu0 0
      %1347 = vmatpush2.bf16.msra.mxu0 0
      %1348 = vmatprep.subr.bf16.mxu0 0
      %1349 = vmatpush2.bf16.msra.mxu0 0
      %1350 = vmatprep.subr.bf16.mxu0 0
      %1351 = vmatpush2.bf16.msra.mxu0 0
      %1352 = vmatprep.subr.bf16.mxu0 0
      %1353 = vmatpush2.bf16.msra.mxu0 0
      %1354 = vmatprep.subr.bf16.mxu0 0
      %1355 = vmatpush2.bf16.msra.mxu0 0
      %1356 = vmatprep.subr.bf16.mxu0 0
      %1357 = vmatpush2.bf16.msra.mxu0 0
      %1358 = vmatprep.mubr.bf16.mxu0 0
      %1359 = vmatmul.mubr.bf16.gmra.mxu0 %v1279
      %v1360 = vpop.f32.mrf.mxu0
      %v1361 = vadd.f32 %v256, %v1360
      %v1362 = vpop.f32.mrf.mxu0
      %v1363 = vpop.f32.mrf.mxu0
      %v1364 = vadd.f32 %v256, %v1363
      %v1365 = vpop.f32.mrf.mxu0
      %1366 = vmatprep.mubr.bf16.mxu0 0
      %1367 = vmatmul.mubr.bf16.gmra.mxu0 %v1282
      %v1368 = vpop.f32.mrf.mxu0
      %v1369 = vadd.f32 %v256, %v1368
      %v1370 = vpop.f32.mrf.mxu0
      %v1371 = vpop.f32.mrf.mxu0
      %v1372 = vadd.f32 %v256, %v1371
      %v1373 = vpop.f32.mrf.mxu0
      %1374 = vmatprep.mubr.bf16.mxu0 0
      %1375 = vmatmul.mubr.bf16.gmra.mxu0 %v1285
      %v1376 = vpop.f32.mrf.mxu0
      %v1377 = vadd.f32 %v256, %v1376
      %v1378 = vpop.f32.mrf.mxu0
      %v1379 = vpop.f32.mrf.mxu0
      %v1380 = vadd.f32 %v256, %v1379
      %v1381 = vpop.f32.mrf.mxu0
      %1382 = vmatprep.mubr.bf16.mxu0 0
      %1383 = vmatmul.mubr.bf16.gmra.mxu0 %v1288
      %v1384 = vpop.f32.mrf.mxu0
      %v1385 = vadd.f32 %v256, %v1384
      %v1386 = vpop.f32.mrf.mxu0
      %v1387 = vpop.f32.mrf.mxu0
      %v1388 = vadd.f32 %v256, %v1387
      %v1389 = vpop.f32.mrf.mxu0
      %1390 = vmatprep.mubr.bf16.mxu0 0
      %1391 = vmatmul.mubr.bf16.gmra.mxu0 %v1291
      %v1392 = vpop.f32.mrf.mxu0
      %v1393 = vadd.f32 %v256, %v1392
      %v1394 = vpop.f32.mrf.mxu0
      %v1395 = vpop.f32.mrf.mxu0
      %v1396 = vadd.f32 %v256, %v1395
      %v1397 = vpop.f32.mrf.mxu0
      %1398 = vmatprep.mubr.bf16.mxu0 0
      %1399 = vmatmul.mubr.bf16.gmra.mxu0 %v1294
      %v1400 = vpop.f32.mrf.mxu0
      %v1401 = vadd.f32 %v256, %v1400
      %v1402 = vpop.f32.mrf.mxu0
      %v1403 = vpop.f32.mrf.mxu0
      %v1404 = vadd.f32 %v256, %v1403
      %v1405 = vpop.f32.mrf.mxu0
      %1406 = vmatprep.mubr.bf16.mxu0 0
      %1407 = vmatmul.mubr.bf16.gmra.mxu0 %v1297
      %v1408 = vpop.f32.mrf.mxu0
      %v1409 = vadd.f32 %v256, %v1408
      %v1410 = vpop.f32.mrf.mxu0
      %v1411 = vpop.f32.mrf.mxu0
      %v1412 = vadd.f32 %v256, %v1411
      %v1413 = vpop.f32.mrf.mxu0
      %1414 = vmatprep.mubr.bf16.mxu0 0
      %1415 = vmatmul.mubr.bf16.gmra.mxu0 %v1300
      %v1416 = vpop.f32.mrf.mxu0
      %v1417 = vadd.f32 %v256, %v1416
      %v1418 = vpop.f32.mrf.mxu0
      %v1419 = vpop.f32.mrf.mxu0
      %v1420 = vadd.f32 %v256, %v1419
      %v1421 = vpop.f32.mrf.mxu0
      %1422 = vmatprep.mubr.bf16.mxu0 0
      %1423 = vmatmul.mubr.bf16.gmra.mxu0 %v1303
      %v1424 = vpop.f32.mrf.mxu0
      %v1425 = vadd.f32 %v256, %v1424
      %v1426 = vpop.f32.mrf.mxu0
      %v1427 = vpop.f32.mrf.mxu0
      %v1428 = vadd.f32 %v256, %v1427
      %v1429 = vpop.f32.mrf.mxu0
      %1430 = vmatprep.mubr.bf16.mxu0 0
      %1431 = vmatmul.mubr.bf16.gmra.mxu0 %v1306
      %v1432 = vpop.f32.mrf.mxu0
      %v1433 = vadd.f32 %v256, %v1432
      %v1434 = vpop.f32.mrf.mxu0
      %v1435 = vpop.f32.mrf.mxu0
      %v1436 = vadd.f32 %v256, %v1435
      %v1437 = vpop.f32.mrf.mxu0
      %1438 = vmatprep.mubr.bf16.mxu0 0
      %1439 = vmatmul.mubr.bf16.gmra.mxu0 %v1309
      %v1440 = vpop.f32.mrf.mxu0
      %v1441 = vadd.f32 %v256, %v1440
      %v1442 = vpop.f32.mrf.mxu0
      %v1443 = vpop.f32.mrf.mxu0
      %v1444 = vadd.f32 %v256, %v1443
      %v1445 = vpop.f32.mrf.mxu0
      %1446 = vmatprep.mubr.bf16.mxu0 0
      %1447 = vmatmul.mubr.bf16.gmra.mxu0 %v1312
      %v1448 = vpop.f32.mrf.mxu0
      %v1449 = vadd.f32 %v256, %v1448
      %v1450 = vpop.f32.mrf.mxu0
      %v1451 = vpop.f32.mrf.mxu0
      %v1452 = vadd.f32 %v256, %v1451
      %v1453 = vpop.f32.mrf.mxu0
      %1454 = vmatprep.mubr.bf16.mxu0 0
      %1455 = vmatmul.mubr.bf16.gmra.mxu0 %v1315
      %v1456 = vpop.f32.mrf.mxu0
      %v1457 = vadd.f32 %v256, %v1456
      %v1458 = vpop.f32.mrf.mxu0
      %v1459 = vpop.f32.mrf.mxu0
      %v1460 = vadd.f32 %v256, %v1459
      %v1461 = vpop.f32.mrf.mxu0
      %1462 = vmatprep.mubr.bf16.mxu0 0
      %1463 = vmatmul.mubr.bf16.gmra.mxu0 %v1318
      %v1464 = vpop.f32.mrf.mxu0
      %v1465 = vadd.f32 %v256, %v1464
      %v1466 = vpop.f32.mrf.mxu0
      %v1467 = vpop.f32.mrf.mxu0
      %v1468 = vadd.f32 %v256, %v1467
      %v1469 = vpop.f32.mrf.mxu0
      %1470 = vmatprep.mubr.bf16.mxu0 0
      %1471 = vmatmul.mubr.bf16.gmra.mxu0 %v1321
      %v1472 = vpop.f32.mrf.mxu0
      %v1473 = vadd.f32 %v256, %v1472
      %v1474 = vpop.f32.mrf.mxu0
      %v1475 = vpop.f32.mrf.mxu0
      %v1476 = vadd.f32 %v256, %v1475
      %v1477 = vpop.f32.mrf.mxu0
      %1478 = vmatprep.mubr.bf16.mxu0 0
      %1479 = vmatmul.mubr.bf16.gmra.mxu0 %v1324
      %v1480 = vpop.f32.mrf.mxu0
      %v1481 = vadd.f32 %v256, %v1480
      %v1482 = vpop.f32.mrf.mxu0
      %v1483 = vpop.f32.mrf.mxu0
      %v1484 = vadd.f32 %v256, %v1483
      %v1485 = vpop.f32.mrf.mxu0
      %1486 = vdwg.mxu0
      %v1487 = vmax.f32 %v1361, 0.0
      %v1488 = vmax.f32 %v1364, 0.0
      %v1489 = vmax.f32 %v1369, 0.0
      %v1490 = vmax.f32 %v1372, 0.0
      %v1491 = vmax.f32 %v1377, 0.0
      %v1492 = vmax.f32 %v1380, 0.0
      %v1493 = vmax.f32 %v1385, 0.0
      %v1494 = vmax.f32 %v1388, 0.0
      %v1495 = vmax.f32 %v1393, 0.0
      %v1496 = vmax.f32 %v1396, 0.0
      %v1497 = vmax.f32 %v1401, 0.0
      %v1498 = vmax.f32 %v1404, 0.0
      %v1499 = vmax.f32 %v1409, 0.0
      %v1500 = vmax.f32 %v1412, 0.0
      %v1501 = vmax.f32 %v1417, 0.0
      %v1502 = vmax.f32 %v1420, 0.0
      %v1503 = vmax.f32 %v1425, 0.0
      %v1504 = vmax.f32 %v1428, 0.0
      %v1505 = vmax.f32 %v1433, 0.0
      %v1506 = vmax.f32 %v1436, 0.0
      %v1507 = vmax.f32 %v1441, 0.0
      %v1508 = vmax.f32 %v1444, 0.0
      %v1509 = vmax.f32 %v1449, 0.0
      %v1510 = vmax.f32 %v1452, 0.0
      %v1511 = vmax.f32 %v1457, 0.0
      %v1512 = vmax.f32 %v1460, 0.0
      %v1513 = vmax.f32 %v1465, 0.0
      %v1514 = vmax.f32 %v1468, 0.0
      %v1515 = vmax.f32 %v1473, 0.0
      %v1516 = vmax.f32 %v1476, 0.0
      %v1517 = vmax.f32 %v1481, 0.0
      %v1518 = vmax.f32 %v1484, 0.0
      %v1519 = vpack.c.bf16 %v1488, %v1487
      %v1520 = vpack.c.bf16 %v1490, %v1489
      %v1521 = vpack.c.bf16 %v1492, %v1491
      %v1522 = vpack.c.bf16 %v1494, %v1493
      %v1523 = vpack.c.bf16 %v1496, %v1495
      %v1524 = vpack.c.bf16 %v1498, %v1497
      %v1525 = vpack.c.bf16 %v1500, %v1499
      %v1526 = vpack.c.bf16 %v1502, %v1501
      %v1527 = vpack.c.bf16 %v1504, %v1503
      %v1528 = vpack.c.bf16 %v1506, %v1505
      %v1529 = vpack.c.bf16 %v1508, %v1507
      %v1530 = vpack.c.bf16 %v1510, %v1509
      %v1531 = vpack.c.bf16 %v1512, %v1511
      %v1532 = vpack.c.bf16 %v1514, %v1513
      %v1533 = vpack.c.bf16 %v1516, %v1515
      %v1534 = vpack.c.bf16 %v1518, %v1517
      %1535 = vmatprep.subr.bf16.mxu0 0
      %1536 = vmatpush1.bf16.msra.mxu0 %v1526
      %1537 = vmatprep.subr.bf16.mxu0 0
      %1538 = vmatpush1.bf16.msra.mxu0 %v1525
      %1539 = vmatprep.subr.bf16.mxu0 0
      %1540 = vmatpush1.bf16.msra.mxu0 %v1524
      %1541 = vmatprep.subr.bf16.mxu0 0
      %1542 = vmatpush1.bf16.msra.mxu0 %v1523
      %1543 = vmatprep.subr.bf16.mxu0 0
      %1544 = vmatpush1.bf16.msra.mxu0 %v1522
      %1545 = vmatprep.subr.bf16.mxu0 0
      %1546 = vmatpush1.bf16.msra.mxu0 %v1521
      %1547 = vmatprep.subr.bf16.mxu0 0
      %1548 = vmatpush1.bf16.msra.mxu0 %v1520
      %1549 = vmatprep.subr.bf16.mxu0 0
      %1550 = vmatpush1.bf16.msra.mxu0 %v1519
      %1551 = vmatprep.subr.bf16.mxu0 0
      %1552 = vmatpush2.bf16.msra.mxu0 %v1534
      %1553 = vmatprep.subr.bf16.mxu0 0
      %1554 = vmatpush2.bf16.msra.mxu0 %v1533
      %1555 = vmatprep.subr.bf16.mxu0 0
      %1556 = vmatpush2.bf16.msra.mxu0 %v1532
      %1557 = vmatprep.subr.bf16.mxu0 0
      %1558 = vmatpush2.bf16.msra.mxu0 %v1531
      %1559 = vmatprep.subr.bf16.mxu0 0
      %1560 = vmatpush2.bf16.msra.mxu0 %v1530
      %1561 = vmatprep.subr.bf16.mxu0 0
      %1562 = vmatpush2.bf16.msra.mxu0 %v1529
      %1563 = vmatprep.subr.bf16.mxu0 0
      %1564 = vmatpush2.bf16.msra.mxu0 %v1528
      %1565 = vmatprep.subr.bf16.mxu0 0
      %1566 = vmatpush2.bf16.msra.mxu0 %v1527
      %1567 = vmatprep.mubr.bf16.mxu0 %v633
      %1568 = vmatmul.mubr.bf16.gmra.mxu0 %v632
      %v1569 = vpop.f32.mrf.mxu0
      %v1570 = vadd.f32 0.0, %v1569
      %v1571 = vpop.f32.mrf.mxu0
      %v1572 = vpop.f32.mrf.mxu0
      %v1573 = vadd.f32 0.0, %v1572
      %v1574 = vpop.f32.mrf.mxu0
      %1575 = vmatprep.mubr.bf16.mxu0 %v635
      %1576 = vmatmul.mubr.bf16.gmra.mxu0 %v634
      %v1577 = vpop.f32.mrf.mxu0
      %v1578 = vadd.f32 0.0, %v1577
      %v1579 = vpop.f32.mrf.mxu0
      %v1580 = vpop.f32.mrf.mxu0
      %v1581 = vadd.f32 0.0, %v1580
      %v1582 = vpop.f32.mrf.mxu0
      %1583 = vmatprep.mubr.bf16.mxu0 %v637
      %1584 = vmatmul.mubr.bf16.gmra.mxu0 %v636
      %v1585 = vpop.f32.mrf.mxu0
      %v1586 = vadd.f32 0.0, %v1585
      %v1587 = vpop.f32.mrf.mxu0
      %v1588 = vpop.f32.mrf.mxu0
      %v1589 = vadd.f32 0.0, %v1588
      %v1590 = vpop.f32.mrf.mxu0
      %1591 = vmatprep.mubr.bf16.mxu0 %v639
      %1592 = vmatmul.mubr.bf16.gmra.mxu0 %v638
      %v1593 = vpop.f32.mrf.mxu0
      %v1594 = vadd.f32 0.0, %v1593
      %v1595 = vpop.f32.mrf.mxu0
      %v1596 = vpop.f32.mrf.mxu0
      %v1597 = vadd.f32 0.0, %v1596
      %v1598 = vpop.f32.mrf.mxu0
      %1599 = vdwg.mxu0
      %s1600 = scalar_lea.vmem %s204, 128
      %1601 = vst [vmem:[%s1600] sm:$0xff] %v1570
      %1602 = vst [vmem:[%s1600 + $0x8] sm:$0xff] %v1573
      %1603 = vst [vmem:[%s1600 + $0x10] sm:$0xff] %v1578
      %1604 = vst [vmem:[%s1600 + $0x18] sm:$0xff] %v1581
      %1605 = vst [vmem:[%s1600 + $0x20] sm:$0xff] %v1586
      %1606 = vst [vmem:[%s1600 + $0x28] sm:$0xff] %v1589
      %1607 = vst [vmem:[%s1600 + $0x30] sm:$0xff] %v1594
      %1608 = vst [vmem:[%s1600 + $0x38] sm:$0xff] %v1597
      %s1609 = scalar_lea.vmem %s197, 384
      %v1610 = vld [vmem:[%s1609] sm:$0xf]
      %v1611 = vld [vmem:[%s1609 + $0x4] sm:$0xf]
      %v1612 = vld [vmem:[%s1609 + $0x8] sm:$0xf]
      %v1613 = vld [vmem:[%s1609 + $0xc] sm:$0xf]
      %v1614 = vld [vmem:[%s1609 + $0x10] sm:$0xf]
      %v1615 = vld [vmem:[%s1609 + $0x14] sm:$0xf]
      %v1616 = vld [vmem:[%s1609 + $0x18] sm:$0xf]
      %v1617 = vld [vmem:[%s1609 + $0x1c] sm:$0xf]
      %v1618 = vld [vmem:[%s1609 + $0x20] sm:$0xf]
      %v1619 = vld [vmem:[%s1609 + $0x24] sm:$0xf]
      %v1620 = vld [vmem:[%s1609 + $0x28] sm:$0xf]
      %v1621 = vld [vmem:[%s1609 + $0x2c] sm:$0xf]
      %v1622 = vld [vmem:[%s1609 + $0x30] sm:$0xf]
      %v1623 = vld [vmem:[%s1609 + $0x34] sm:$0xf]
      %v1624 = vld [vmem:[%s1609 + $0x38] sm:$0xf]
      %v1625 = vld [vmem:[%s1609 + $0x3c] sm:$0xf]
      %v1626 = vld [vmem:[%s1609 + $0x40] sm:$0xf]
      %v1627 = vld [vmem:[%s1609 + $0x44] sm:$0xf]
      %v1628 = vld [vmem:[%s1609 + $0x48] sm:$0xf]
      %v1629 = vld [vmem:[%s1609 + $0x4c] sm:$0xf]
      %v1630 = vld [vmem:[%s1609 + $0x50] sm:$0xf]
      %v1631 = vld [vmem:[%s1609 + $0x54] sm:$0xf]
      %v1632 = vld [vmem:[%s1609 + $0x58] sm:$0xf]
      %v1633 = vld [vmem:[%s1609 + $0x5c] sm:$0xf]
      %v1634 = vld [vmem:[%s1609 + $0x60] sm:$0xf]
      %v1635 = vld [vmem:[%s1609 + $0x64] sm:$0xf]
      %v1636 = vld [vmem:[%s1609 + $0x68] sm:$0xf]
      %v1637 = vld [vmem:[%s1609 + $0x6c] sm:$0xf]
      %v1638 = vld [vmem:[%s1609 + $0x70] sm:$0xf]
      %v1639 = vld [vmem:[%s1609 + $0x74] sm:$0xf]
      %v1640 = vld [vmem:[%s1609 + $0x78] sm:$0xf]
      %v1641 = vld [vmem:[%s1609 + $0x7c] sm:$0xf]
      %v1674 = vunpack.c.l.b16 %v1610
      %v1675 = vunpack.c.l.b16 %v1611
      %v1676 = vunpack.c.l.b16 %v1612
      %v1677 = vunpack.c.l.b16 %v1613
      %v1678 = vunpack.c.l.b16 %v1614
      %v1679 = vunpack.c.l.b16 %v1615
      %v1680 = vunpack.c.l.b16 %v1616
      %v1681 = vunpack.c.l.b16 %v1617
      %v1682 = vunpack.c.l.b16 %v1618
      %v1683 = vunpack.c.l.b16 %v1619
      %v1684 = vunpack.c.l.b16 %v1620
      %v1685 = vunpack.c.l.b16 %v1621
      %v1686 = vunpack.c.l.b16 %v1622
      %v1687 = vunpack.c.l.b16 %v1623
      %v1688 = vunpack.c.l.b16 %v1624
      %v1689 = vunpack.c.l.b16 %v1625
      %v1690 = vunpack.c.l.b16 %v1626
      %v1691 = vunpack.c.l.b16 %v1627
      %v1692 = vunpack.c.l.b16 %v1628
      %v1693 = vunpack.c.l.b16 %v1629
      %v1694 = vunpack.c.l.b16 %v1630
      %v1695 = vunpack.c.l.b16 %v1631
      %v1696 = vunpack.c.l.b16 %v1632
      %v1697 = vunpack.c.l.b16 %v1633
      %v1698 = vunpack.c.l.b16 %v1634
      %v1699 = vunpack.c.l.b16 %v1635
      %v1700 = vunpack.c.l.b16 %v1636
      %v1701 = vunpack.c.l.b16 %v1637
      %v1702 = vunpack.c.l.b16 %v1638
      %v1703 = vunpack.c.l.b16 %v1639
      %v1704 = vunpack.c.l.b16 %v1640
      %v1705 = vunpack.c.l.b16 %v1641
      %v1706 = vpack.c.b16 %v1675, %v1674
      %v1707 = vpack.c.b16 %v1677, %v1676
      %v1708 = vpack.c.b16 %v1679, %v1678
      %v1709 = vpack.c.b16 %v1681, %v1680
      %v1710 = vpack.c.b16 %v1683, %v1682
      %v1711 = vpack.c.b16 %v1685, %v1684
      %v1712 = vpack.c.b16 %v1687, %v1686
      %v1713 = vpack.c.b16 %v1689, %v1688
      %v1714 = vpack.c.b16 %v1691, %v1690
      %v1715 = vpack.c.b16 %v1693, %v1692
      %v1716 = vpack.c.b16 %v1695, %v1694
      %v1717 = vpack.c.b16 %v1697, %v1696
      %v1718 = vpack.c.b16 %v1699, %v1698
      %v1719 = vpack.c.b16 %v1701, %v1700
      %v1720 = vpack.c.b16 %v1703, %v1702
      %v1721 = vpack.c.b16 %v1705, %v1704
      %v1723 = vsel %vm350, %v1706, 0
      %v1726 = vsel %vm350, %v1707, 0
      %v1729 = vsel %vm350, %v1708, 0
      %v1732 = vsel %vm350, %v1709, 0
      %v1735 = vsel %vm350, %v1710, 0
      %v1738 = vsel %vm350, %v1711, 0
      %v1741 = vsel %vm350, %v1712, 0
      %v1744 = vsel %vm350, %v1713, 0
      %v1747 = vsel %vm350, %v1714, 0
      %v1750 = vsel %vm350, %v1715, 0
      %v1753 = vsel %vm350, %v1716, 0
      %v1756 = vsel %vm350, %v1717, 0
      %v1759 = vsel %vm350, %v1718, 0
      %v1762 = vsel %vm350, %v1719, 0
      %v1765 = vsel %vm350, %v1720, 0
      %v1768 = vsel %vm350, %v1721, 0
      %1770 = vmatprep.subr.bf16.mxu0 0
      %1771 = vmatpush1.bf16.msra.mxu0 0
      %1772 = vmatprep.subr.bf16.mxu0 0
      %1773 = vmatpush1.bf16.msra.mxu0 0
      %1774 = vmatprep.subr.bf16.mxu0 0
      %1775 = vmatpush1.bf16.msra.mxu0 0
      %1776 = vmatprep.subr.bf16.mxu0 0
      %1777 = vmatpush1.bf16.msra.mxu0 0
      %1778 = vmatprep.subr.bf16.mxu0 0
      %1779 = vmatpush1.bf16.msra.mxu0 0
      %1780 = vmatprep.subr.bf16.mxu0 0
      %1781 = vmatpush1.bf16.msra.mxu0 0
      %1782 = vmatprep.subr.bf16.mxu0 0
      %1783 = vmatpush1.bf16.msra.mxu0 %v347
      %1784 = vmatprep.subr.bf16.mxu0 0
      %1785 = vmatpush1.bf16.msra.mxu0 %v346
      %1786 = vmatprep.subr.bf16.mxu0 0
      %1787 = vmatpush2.bf16.msra.mxu0 0
      %1788 = vmatprep.subr.bf16.mxu0 0
      %1789 = vmatpush2.bf16.msra.mxu0 0
      %1790 = vmatprep.subr.bf16.mxu0 0
      %1791 = vmatpush2.bf16.msra.mxu0 0
      %1792 = vmatprep.subr.bf16.mxu0 0
      %1793 = vmatpush2.bf16.msra.mxu0 0
      %1794 = vmatprep.subr.bf16.mxu0 0
      %1795 = vmatpush2.bf16.msra.mxu0 0
      %1796 = vmatprep.subr.bf16.mxu0 0
      %1797 = vmatpush2.bf16.msra.mxu0 0
      %1798 = vmatprep.subr.bf16.mxu0 0
      %1799 = vmatpush2.bf16.msra.mxu0 0
      %1800 = vmatprep.subr.bf16.mxu0 0
      %1801 = vmatpush2.bf16.msra.mxu0 0
      %1802 = vmatprep.mubr.bf16.mxu0 0
      %1803 = vmatmul.mubr.bf16.gmra.mxu0 %v1723
      %v1804 = vpop.f32.mrf.mxu0
      %v1805 = vadd.f32 %v256, %v1804
      %v1806 = vpop.f32.mrf.mxu0
      %v1807 = vpop.f32.mrf.mxu0
      %v1808 = vadd.f32 %v256, %v1807
      %v1809 = vpop.f32.mrf.mxu0
      %1810 = vmatprep.mubr.bf16.mxu0 0
      %1811 = vmatmul.mubr.bf16.gmra.mxu0 %v1726
      %v1812 = vpop.f32.mrf.mxu0
      %v1813 = vadd.f32 %v256, %v1812
      %v1814 = vpop.f32.mrf.mxu0
      %v1815 = vpop.f32.mrf.mxu0
      %v1816 = vadd.f32 %v256, %v1815
      %v1817 = vpop.f32.mrf.mxu0
      %1818 = vmatprep.mubr.bf16.mxu0 0
      %1819 = vmatmul.mubr.bf16.gmra.mxu0 %v1729
      %v1820 = vpop.f32.mrf.mxu0
      %v1821 = vadd.f32 %v256, %v1820
      %v1822 = vpop.f32.mrf.mxu0
      %v1823 = vpop.f32.mrf.mxu0
      %v1824 = vadd.f32 %v256, %v1823
      %v1825 = vpop.f32.mrf.mxu0
      %1826 = vmatprep.mubr.bf16.mxu0 0
      %1827 = vmatmul.mubr.bf16.gmra.mxu0 %v1732
      %v1828 = vpop.f32.mrf.mxu0
      %v1829 = vadd.f32 %v256, %v1828
      %v1830 = vpop.f32.mrf.mxu0
      %v1831 = vpop.f32.mrf.mxu0
      %v1832 = vadd.f32 %v256, %v1831
      %v1833 = vpop.f32.mrf.mxu0
      %1834 = vmatprep.mubr.bf16.mxu0 0
      %1835 = vmatmul.mubr.bf16.gmra.mxu0 %v1735
      %v1836 = vpop.f32.mrf.mxu0
      %v1837 = vadd.f32 %v256, %v1836
      %v1838 = vpop.f32.mrf.mxu0
      %v1839 = vpop.f32.mrf.mxu0
      %v1840 = vadd.f32 %v256, %v1839
      %v1841 = vpop.f32.mrf.mxu0
      %1842 = vmatprep.mubr.bf16.mxu0 0
      %1843 = vmatmul.mubr.bf16.gmra.mxu0 %v1738
      %v1844 = vpop.f32.mrf.mxu0
      %v1845 = vadd.f32 %v256, %v1844
      %v1846 = vpop.f32.mrf.mxu0
      %v1847 = vpop.f32.mrf.mxu0
      %v1848 = vadd.f32 %v256, %v1847
      %v1849 = vpop.f32.mrf.mxu0
      %1850 = vmatprep.mubr.bf16.mxu0 0
      %1851 = vmatmul.mubr.bf16.gmra.mxu0 %v1741
      %v1852 = vpop.f32.mrf.mxu0
      %v1853 = vadd.f32 %v256, %v1852
      %v1854 = vpop.f32.mrf.mxu0
      %v1855 = vpop.f32.mrf.mxu0
      %v1856 = vadd.f32 %v256, %v1855
      %v1857 = vpop.f32.mrf.mxu0
      %1858 = vmatprep.mubr.bf16.mxu0 0
      %1859 = vmatmul.mubr.bf16.gmra.mxu0 %v1744
      %v1860 = vpop.f32.mrf.mxu0
      %v1861 = vadd.f32 %v256, %v1860
      %v1862 = vpop.f32.mrf.mxu0
      %v1863 = vpop.f32.mrf.mxu0
      %v1864 = vadd.f32 %v256, %v1863
      %v1865 = vpop.f32.mrf.mxu0
      %1866 = vmatprep.mubr.bf16.mxu0 0
      %1867 = vmatmul.mubr.bf16.gmra.mxu0 %v1747
      %v1868 = vpop.f32.mrf.mxu0
      %v1869 = vadd.f32 %v256, %v1868
      %v1870 = vpop.f32.mrf.mxu0
      %v1871 = vpop.f32.mrf.mxu0
      %v1872 = vadd.f32 %v256, %v1871
      %v1873 = vpop.f32.mrf.mxu0
      %1874 = vmatprep.mubr.bf16.mxu0 0
      %1875 = vmatmul.mubr.bf16.gmra.mxu0 %v1750
      %v1876 = vpop.f32.mrf.mxu0
      %v1877 = vadd.f32 %v256, %v1876
      %v1878 = vpop.f32.mrf.mxu0
      %v1879 = vpop.f32.mrf.mxu0
      %v1880 = vadd.f32 %v256, %v1879
      %v1881 = vpop.f32.mrf.mxu0
      %1882 = vmatprep.mubr.bf16.mxu0 0
      %1883 = vmatmul.mubr.bf16.gmra.mxu0 %v1753
      %v1884 = vpop.f32.mrf.mxu0
      %v1885 = vadd.f32 %v256, %v1884
      %v1886 = vpop.f32.mrf.mxu0
      %v1887 = vpop.f32.mrf.mxu0
      %v1888 = vadd.f32 %v256, %v1887
      %v1889 = vpop.f32.mrf.mxu0
      %1890 = vmatprep.mubr.bf16.mxu0 0
      %1891 = vmatmul.mubr.bf16.gmra.mxu0 %v1756
      %v1892 = vpop.f32.mrf.mxu0
      %v1893 = vadd.f32 %v256, %v1892
      %v1894 = vpop.f32.mrf.mxu0
      %v1895 = vpop.f32.mrf.mxu0
      %v1896 = vadd.f32 %v256, %v1895
      %v1897 = vpop.f32.mrf.mxu0
      %1898 = vmatprep.mubr.bf16.mxu0 0
      %1899 = vmatmul.mubr.bf16.gmra.mxu0 %v1759
      %v1900 = vpop.f32.mrf.mxu0
      %v1901 = vadd.f32 %v256, %v1900
      %v1902 = vpop.f32.mrf.mxu0
      %v1903 = vpop.f32.mrf.mxu0
      %v1904 = vadd.f32 %v256, %v1903
      %v1905 = vpop.f32.mrf.mxu0
      %1906 = vmatprep.mubr.bf16.mxu0 0
      %1907 = vmatmul.mubr.bf16.gmra.mxu0 %v1762
      %v1908 = vpop.f32.mrf.mxu0
      %v1909 = vadd.f32 %v256, %v1908
      %v1910 = vpop.f32.mrf.mxu0
      %v1911 = vpop.f32.mrf.mxu0
      %v1912 = vadd.f32 %v256, %v1911
      %v1913 = vpop.f32.mrf.mxu0
      %1914 = vmatprep.mubr.bf16.mxu0 0
      %1915 = vmatmul.mubr.bf16.gmra.mxu0 %v1765
      %v1916 = vpop.f32.mrf.mxu0
      %v1917 = vadd.f32 %v256, %v1916
      %v1918 = vpop.f32.mrf.mxu0
      %v1919 = vpop.f32.mrf.mxu0
      %v1920 = vadd.f32 %v256, %v1919
      %v1921 = vpop.f32.mrf.mxu0
      %1922 = vmatprep.mubr.bf16.mxu0 0
      %1923 = vmatmul.mubr.bf16.gmra.mxu0 %v1768
      %v1924 = vpop.f32.mrf.mxu0
      %v1925 = vadd.f32 %v256, %v1924
      %v1926 = vpop.f32.mrf.mxu0
      %v1927 = vpop.f32.mrf.mxu0
      %v1928 = vadd.f32 %v256, %v1927
      %v1929 = vpop.f32.mrf.mxu0
      %1930 = vdwg.mxu0
      %v1931 = vmax.f32 %v1805, 0.0
      %v1932 = vmax.f32 %v1808, 0.0
      %v1933 = vmax.f32 %v1813, 0.0
      %v1934 = vmax.f32 %v1816, 0.0
      %v1935 = vmax.f32 %v1821, 0.0
      %v1936 = vmax.f32 %v1824, 0.0
      %v1937 = vmax.f32 %v1829, 0.0
      %v1938 = vmax.f32 %v1832, 0.0
      %v1939 = vmax.f32 %v1837, 0.0
      %v1940 = vmax.f32 %v1840, 0.0
      %v1941 = vmax.f32 %v1845, 0.0
      %v1942 = vmax.f32 %v1848, 0.0
      %v1943 = vmax.f32 %v1853, 0.0
      %v1944 = vmax.f32 %v1856, 0.0
      %v1945 = vmax.f32 %v1861, 0.0
      %v1946 = vmax.f32 %v1864, 0.0
      %v1947 = vmax.f32 %v1869, 0.0
      %v1948 = vmax.f32 %v1872, 0.0
      %v1949 = vmax.f32 %v1877, 0.0
      %v1950 = vmax.f32 %v1880, 0.0
      %v1951 = vmax.f32 %v1885, 0.0
      %v1952 = vmax.f32 %v1888, 0.0
      %v1953 = vmax.f32 %v1893, 0.0
      %v1954 = vmax.f32 %v1896, 0.0
      %v1955 = vmax.f32 %v1901, 0.0
      %v1956 = vmax.f32 %v1904, 0.0
      %v1957 = vmax.f32 %v1909, 0.0
      %v1958 = vmax.f32 %v1912, 0.0
      %v1959 = vmax.f32 %v1917, 0.0
      %v1960 = vmax.f32 %v1920, 0.0
      %v1961 = vmax.f32 %v1925, 0.0
      %v1962 = vmax.f32 %v1928, 0.0
      %v1963 = vpack.c.bf16 %v1932, %v1931
      %v1964 = vpack.c.bf16 %v1934, %v1933
      %v1965 = vpack.c.bf16 %v1936, %v1935
      %v1966 = vpack.c.bf16 %v1938, %v1937
      %v1967 = vpack.c.bf16 %v1940, %v1939
      %v1968 = vpack.c.bf16 %v1942, %v1941
      %v1969 = vpack.c.bf16 %v1944, %v1943
      %v1970 = vpack.c.bf16 %v1946, %v1945
      %v1971 = vpack.c.bf16 %v1948, %v1947
      %v1972 = vpack.c.bf16 %v1950, %v1949
      %v1973 = vpack.c.bf16 %v1952, %v1951
      %v1974 = vpack.c.bf16 %v1954, %v1953
      %v1975 = vpack.c.bf16 %v1956, %v1955
      %v1976 = vpack.c.bf16 %v1958, %v1957
      %v1977 = vpack.c.bf16 %v1960, %v1959
      %v1978 = vpack.c.bf16 %v1962, %v1961
      %1979 = vmatprep.subr.bf16.mxu0 0
      %1980 = vmatpush1.bf16.msra.mxu0 %v1970
      %1981 = vmatprep.subr.bf16.mxu0 0
      %1982 = vmatpush1.bf16.msra.mxu0 %v1969
      %1983 = vmatprep.subr.bf16.mxu0 0
      %1984 = vmatpush1.bf16.msra.mxu0 %v1968
      %1985 = vmatprep.subr.bf16.mxu0 0
      %1986 = vmatpush1.bf16.msra.mxu0 %v1967
      %1987 = vmatprep.subr.bf16.mxu0 0
      %1988 = vmatpush1.bf16.msra.mxu0 %v1966
      %1989 = vmatprep.subr.bf16.mxu0 0
      %1990 = vmatpush1.bf16.msra.mxu0 %v1965
      %1991 = vmatprep.subr.bf16.mxu0 0
      %1992 = vmatpush1.bf16.msra.mxu0 %v1964
      %1993 = vmatprep.subr.bf16.mxu0 0
      %1994 = vmatpush1.bf16.msra.mxu0 %v1963
      %1995 = vmatprep.subr.bf16.mxu0 0
      %1996 = vmatpush2.bf16.msra.mxu0 %v1978
      %1997 = vmatprep.subr.bf16.mxu0 0
      %1998 = vmatpush2.bf16.msra.mxu0 %v1977
      %1999 = vmatprep.subr.bf16.mxu0 0
      %2000 = vmatpush2.bf16.msra.mxu0 %v1976
      %2001 = vmatprep.subr.bf16.mxu0 0
      %2002 = vmatpush2.bf16.msra.mxu0 %v1975
      %2003 = vmatprep.subr.bf16.mxu0 0
      %2004 = vmatpush2.bf16.msra.mxu0 %v1974
      %2005 = vmatprep.subr.bf16.mxu0 0
      %2006 = vmatpush2.bf16.msra.mxu0 %v1973
      %2007 = vmatprep.subr.bf16.mxu0 0
      %2008 = vmatpush2.bf16.msra.mxu0 %v1972
      %2009 = vmatprep.subr.bf16.mxu0 0
      %2010 = vmatpush2.bf16.msra.mxu0 %v1971
      %2011 = vmatprep.mubr.bf16.mxu0 %v633
      %2012 = vmatmul.mubr.bf16.gmra.mxu0 %v632
      %v2013 = vpop.f32.mrf.mxu0
      %v2014 = vadd.f32 0.0, %v2013
      %v2015 = vpop.f32.mrf.mxu0
      %v2016 = vpop.f32.mrf.mxu0
      %v2017 = vadd.f32 0.0, %v2016
      %v2018 = vpop.f32.mrf.mxu0
      %2019 = vmatprep.mubr.bf16.mxu0 %v635
      %2020 = vmatmul.mubr.bf16.gmra.mxu0 %v634
      %v2021 = vpop.f32.mrf.mxu0
      %v2022 = vadd.f32 0.0, %v2021
      %v2023 = vpop.f32.mrf.mxu0
      %v2024 = vpop.f32.mrf.mxu0
      %v2025 = vadd.f32 0.0, %v2024
      %v2026 = vpop.f32.mrf.mxu0
      %2027 = vmatprep.mubr.bf16.mxu0 %v637
      %2028 = vmatmul.mubr.bf16.gmra.mxu0 %v636
      %v2029 = vpop.f32.mrf.mxu0
      %v2030 = vadd.f32 0.0, %v2029
      %v2031 = vpop.f32.mrf.mxu0
      %v2032 = vpop.f32.mrf.mxu0
      %v2033 = vadd.f32 0.0, %v2032
      %v2034 = vpop.f32.mrf.mxu0
      %2035 = vmatprep.mubr.bf16.mxu0 %v639
      %2036 = vmatmul.mubr.bf16.gmra.mxu0 %v638
      %v2037 = vpop.f32.mrf.mxu0
      %v2038 = vadd.f32 0.0, %v2037
      %v2039 = vpop.f32.mrf.mxu0
      %v2040 = vpop.f32.mrf.mxu0
      %v2041 = vadd.f32 0.0, %v2040
      %v2042 = vpop.f32.mrf.mxu0
      %2043 = vdwg.mxu0
      %s2044 = scalar_lea.vmem %s204, 192
      %2045 = vst [vmem:[%s2044] sm:$0xff] %v2014
      %2046 = vst [vmem:[%s2044 + $0x8] sm:$0xff] %v2017
      %2047 = vst [vmem:[%s2044 + $0x10] sm:$0xff] %v2022
      %2048 = vst [vmem:[%s2044 + $0x18] sm:$0xff] %v2025
      %2049 = vst [vmem:[%s2044 + $0x20] sm:$0xff] %v2030
      %2050 = vst [vmem:[%s2044 + $0x28] sm:$0xff] %v2033
      %2051 = vst [vmem:[%s2044 + $0x30] sm:$0xff] %v2038
      %2052 = vst [vmem:[%s2044 + $0x38] sm:$0xff] %v2041
      %s2053 = smul.u32 4, %s15
      %p2054 = scmp.lt.s32.totalorder %s2053, 15
      %s2055 = scalar_select %p2054, %s2053, 15
      %s2056 = smul.addr %s2055, 8
      %s2057 = smul.addr %s2056, 8
      %s2058 = scalar_lea.vmem %s4, %s2057
      // Predicated region
      $region37: #{_predict_all.2} parent=35 // pred_check
        %p2059 = pneg %p122
      $region38: #{_predict_all.2} parent=35 // pred_check_branch
        %2061 = sbr.rel (%p2059) target = $region40
      $region39: #{_predict_all.2} parent=35 // pred_region
        %s2062 = smul.u32 4, %s15
      $region40: #{_predict_all.2} parent=35 // pred_fallthru
        _
    $region36: #{_predict_all.2} parent=5 // pred_fallthru
      _
    %p2063 = scmp.le.s32.totalorder 2, %s10
    // Predicated region
    $region41: #{_predict_all.2} parent=5 // pred_check
      %p2064 = pneg %p2063
    $region42: #{_predict_all.2} parent=5 // pred_check_branch
      %2066 = sbr.rel (%p2064) target = $region44
    $region43: #{_predict_all.2} parent=5 // pred_region
      %s2067 = ssub.s32 %s10, 2
      // Predicated region
      $region45: #{_predict_all.2} parent=43 // pred_check
        %p2068 = pneg %p128
      $region46: #{_predict_all.2} parent=43 // pred_check_branch
        %2070 = sbr.rel (%p2068) target = $region48
      $region47: #{_predict_all.2} parent=43 // pred_region
        %s2071 = smul.u32 4, %s16
        %p2072 = scmp.lt.s32.totalorder %s2071, 15
        %s2073 = scalar_select %p2072, %s2071, 15
        %s2074 = smul.addr %s2073, 8
        %s2075 = smul.addr %s2074, 8
        %s2076 = scalar_lea.vmem %s4, %s2075
      $region48: #{_predict_all.2} parent=43 // pred_fallthru
        _
    $region44: #{_predict_all.2} parent=5 // pred_fallthru
      _
  $region6: #{_predict_all.2} parent=0 // loop_footer
    %s14 = sadd.s32 1, %s10
  $region7: #{_predict_all.2} parent=0 // loop_footer_branch
    %9 = sbr.rel target = $region3
  $region8: #{_predict_all.2} parent=0 // loop_exit
    _

// kernel: _predict_all.3
$region0: #{_predict_all.3}
  #allocation0 [shape = 'u32[]', space=smem, size = 0x4, offset = 0x4, fixed_abs, tag = 'smem constant byte address 0x4 - core index']
  #allocation1 [shape = 'u32[144,128]{1,0:T(1,128)}', space=vmem, size = 0x12000, scoped, tag = 'internal scratch']
  %s0 = inlined_call_operand.vmem [shape: bf16[64,2048], index: 0, kind: input, shape index: {}]
  %s1 = inlined_call_operand.vmem [shape: bf16[2048,128], index: 1, kind: input, shape index: {}]
  %s2 = inlined_call_operand.hbm [shape: f32[64,128], index: 2, kind: output, shape index: {}]
  %s3 = sld [smem:[#allocation0]]
  $region18: #{_predict_all.3} parent=0
    _
  %s5 = ssub.s32 1, %s3
  %s6 = scalar_select 0, %s5, %s3
  $region1: #{_predict_all.3} parent=0
    #allocation2 [shape = 'u8[32768]{0}', space=vmem, size = 0x8000, scoped, tag = 'output window, operand 0, single buffered']
    #allocation3 [shape = 's32[1]{0}', space=sflag, size = 0x4, scoped, tag = 'scoped memory for _predict_all.3']
    %7 = vsyncpa [#allocation3], 0
    // Predicated region
    $region2: #{_predict_all.3} parent=1 // pred_check
      _
    $region3: #{_predict_all.3} parent=1 // pred_check_branch
      %9 = sbr.rel (0) target = $region5
    $region4: #{_predict_all.3} parent=1 // pred_region
      _
    $region5: #{_predict_all.3} parent=1 // pred_fallthru
      _
    // Predicated region
    $region6: #{_predict_all.3} parent=1 // pred_check
      _
    $region7: #{_predict_all.3} parent=1 // pred_check_branch
      %11 = sbr.rel (0) target = $region9
    $region8: #{_predict_all.3} parent=1 // pred_region
      _
    $region9: #{_predict_all.3} parent=1 // pred_fallthru
      _
    %v13 = vld [vmem:[%s0] sm:$0xff]
    %v14 = vld [vmem:[%s0 + $0x8] sm:$0xff]
    %v15 = vld [vmem:[%s0 + $0x10] sm:$0xff]
    %v16 = vld [vmem:[%s0 + $0x18] sm:$0xff]
    %v17 = vld [vmem:[%s0 + $0x20] sm:$0xff]
    %v18 = vld [vmem:[%s0 + $0x28] sm:$0xff]
    %v19 = vld [vmem:[%s0 + $0x30] sm:$0xff]
    %v20 = vld [vmem:[%s0 + $0x38] sm:$0xff]
    %v21 = vld [vmem:[%s0 + $0x40] sm:$0xff]
    %v22 = vld [vmem:[%s0 + $0x48] sm:$0xff]
    %v23 = vld [vmem:[%s0 + $0x50] sm:$0xff]
    %v24 = vld [vmem:[%s0 + $0x58] sm:$0xff]
    %v25 = vld [vmem:[%s0 + $0x60] sm:$0xff]
    %v26 = vld [vmem:[%s0 + $0x68] sm:$0xff]
    %v27 = vld [vmem:[%s0 + $0x70] sm:$0xff]
    %v28 = vld [vmem:[%s0 + $0x78] sm:$0xff]
    %v29 = vld [vmem:[%s0 + $0x80] sm:$0xff]
    %v30 = vld [vmem:[%s0 + $0x88] sm:$0xff]
    %v31 = vld [vmem:[%s0 + $0x90] sm:$0xff]
    %v32 = vld [vmem:[%s0 + $0x98] sm:$0xff]
    %v33 = vld [vmem:[%s0 + $0xa0] sm:$0xff]
    %v34 = vld [vmem:[%s0 + $0xa8] sm:$0xff]
    %v35 = vld [vmem:[%s0 + $0xb0] sm:$0xff]
    %v36 = vld [vmem:[%s0 + $0xb8] sm:$0xff]
    %v37 = vld [vmem:[%s0 + $0xc0] sm:$0xff]
    %v38 = vld [vmem:[%s0 + $0xc8] sm:$0xff]
    %v39 = vld [vmem:[%s0 + $0xd0] sm:$0xff]
    %v40 = vld [vmem:[%s0 + $0xd8] sm:$0xff]
    %v41 = vld [vmem:[%s0 + $0xe0] sm:$0xff]
    %v42 = vld [vmem:[%s0 + $0xe8] sm:$0xff]
    %v43 = vld [vmem:[%s0 + $0xf0] sm:$0xff]
    %v44 = vld [vmem:[%s0 + $0xf8] sm:$0xff]
    %v45 = vld [vmem:[%s0 + $0x100] sm:$0xff]
    %v46 = vld [vmem:[%s0 + $0x108] sm:$0xff]
    %v47 = vld [vmem:[%s0 + $0x110] sm:$0xff]
    %v48 = vld [vmem:[%s0 + $0x118] sm:$0xff]
    %v49 = vld [vmem:[%s0 + $0x120] sm:$0xff]
    %v50 = vld [vmem:[%s0 + $0x128] sm:$0xff]
    %v51 = vld [vmem:[%s0 + $0x130] sm:$0xff]
    %v52 = vld [vmem:[%s0 + $0x138] sm:$0xff]
    %v53 = vld [vmem:[%s0 + $0x140] sm:$0xff]
    %v54 = vld [vmem:[%s0 + $0x148] sm:$0xff]
    %v55 = vld [vmem:[%s0 + $0x150] sm:$0xff]
    %v56 = vld [vmem:[%s0 + $0x158] sm:$0xff]
    %v57 = vld [vmem:[%s0 + $0x160] sm:$0xff]
    %v58 = vld [vmem:[%s0 + $0x168] sm:$0xff]
    %v59 = vld [vmem:[%s0 + $0x170] sm:$0xff]
    %v60 = vld [vmem:[%s0 + $0x178] sm:$0xff]
    %v61 = vld [vmem:[%s0 + $0x180] sm:$0xff]
    %v62 = vld [vmem:[%s0 + $0x188] sm:$0xff]
    %v63 = vld [vmem:[%s0 + $0x190] sm:$0xff]
    %v64 = vld [vmem:[%s0 + $0x198] sm:$0xff]
    %v65 = vld [vmem:[%s0 + $0x1a0] sm:$0xff]
    %v66 = vld [vmem:[%s0 + $0x1a8] sm:$0xff]
    %v67 = vld [vmem:[%s0 + $0x1b0] sm:$0xff]
    %v68 = vld [vmem:[%s0 + $0x1b8] sm:$0xff]
    %v69 = vld [vmem:[%s0 + $0x1c0] sm:$0xff]
    %v70 = vld [vmem:[%s0 + $0x1c8] sm:$0xff]
    %v71 = vld [vmem:[%s0 + $0x1d0] sm:$0xff]
    %v72 = vld [vmem:[%s0 + $0x1d8] sm:$0xff]
    %v73 = vld [vmem:[%s0 + $0x1e0] sm:$0xff]
    %v74 = vld [vmem:[%s0 + $0x1e8] sm:$0xff]
    %v75 = vld [vmem:[%s0 + $0x1f0] sm:$0xff]
    %v76 = vld [vmem:[%s0 + $0x1f8] sm:$0xff]
    %v77 = vld [vmem:[%s1] sm:$0xf]
    %v78 = vld [vmem:[%s1 + $0x4] sm:$0xf]
    %v79 = vld [vmem:[%s1 + $0x8] sm:$0xf]
    %v80 = vld [vmem:[%s1 + $0xc] sm:$0xf]
    %v81 = vld [vmem:[%s1 + $0x10] sm:$0xf]
    %v82 = vld [vmem:[%s1 + $0x14] sm:$0xf]
    %v83 = vld [vmem:[%s1 + $0x18] sm:$0xf]
    %v84 = vld [vmem:[%s1 + $0x1c] sm:$0xf]
    %v85 = vld [vmem:[%s1 + $0x20] sm:$0xf]
    %v86 = vld [vmem:[%s1 + $0x24] sm:$0xf]
    %v87 = vld [vmem:[%s1 + $0x28] sm:$0xf]
    %v88 = vld [vmem:[%s1 + $0x2c] sm:$0xf]
    %v89 = vld [vmem:[%s1 + $0x30] sm:$0xf]
    %v90 = vld [vmem:[%s1 + $0x34] sm:$0xf]
    %v91 = vld [vmem:[%s1 + $0x38] sm:$0xf]
    %v92 = vld [vmem:[%s1 + $0x3c] sm:$0xf]
    %v93 = vld [vmem:[%s1 + $0x40] sm:$0xf]
    %v94 = vld [vmem:[%s1 + $0x44] sm:$0xf]
    %v95 = vld [vmem:[%s1 + $0x48] sm:$0xf]
    %v96 = vld [vmem:[%s1 + $0x4c] sm:$0xf]
    %v97 = vld [vmem:[%s1 + $0x50] sm:$0xf]
    %v98 = vld [vmem:[%s1 + $0x54] sm:$0xf]
    %v99 = vld [vmem:[%s1 + $0x58] sm:$0xf]
    %v100 = vld [vmem:[%s1 + $0x5c] sm:$0xf]
    %v101 = vld [vmem:[%s1 + $0x60] sm:$0xf]
    %v102 = vld [vmem:[%s1 + $0x64] sm:$0xf]
    %v103 = vld [vmem:[%s1 + $0x68] sm:$0xf]
    %v104 = vld [vmem:[%s1 + $0x6c] sm:$0xf]
    %v105 = vld [vmem:[%s1 + $0x70] sm:$0xf]
    %v106 = vld [vmem:[%s1 + $0x74] sm:$0xf]
    %v107 = vld [vmem:[%s1 + $0x78] sm:$0xf]
    %v108 = vld [vmem:[%s1 + $0x7c] sm:$0xf]
    %v109 = vld [vmem:[%s1 + $0x80] sm:$0xf]
    %v110 = vld [vmem:[%s1 + $0x84] sm:$0xf]
    %v111 = vld [vmem:[%s1 + $0x88] sm:$0xf]
    %v112 = vld [vmem:[%s1 + $0x8c] sm:$0xf]
    %v113 = vld [vmem:[%s1 + $0x90] sm:$0xf]
    %v114 = vld [vmem:[%s1 + $0x94] sm:$0xf]
    %v115 = vld [vmem:[%s1 + $0x98] sm:$0xf]
    %v116 = vld [vmem:[%s1 + $0x9c] sm:$0xf]
    %v117 = vld [vmem:[%s1 + $0xa0] sm:$0xf]
    %v118 = vld [vmem:[%s1 + $0xa4] sm:$0xf]
    %v119 = vld [vmem:[%s1 + $0xa8] sm:$0xf]
    %v120 = vld [vmem:[%s1 + $0xac] sm:$0xf]
    %v121 = vld [vmem:[%s1 + $0xb0] sm:$0xf]
    %v122 = vld [vmem:[%s1 + $0xb4] sm:$0xf]
    %v123 = vld [vmem:[%s1 + $0xb8] sm:$0xf]
    %v124 = vld [vmem:[%s1 + $0xbc] sm:$0xf]
    %v125 = vld [vmem:[%s1 + $0xc0] sm:$0xf]
    %v126 = vld [vmem:[%s1 + $0xc4] sm:$0xf]
    %v127 = vld [vmem:[%s1 + $0xc8] sm:$0xf]
    %v128 = vld [vmem:[%s1 + $0xcc] sm:$0xf]
    %v129 = vld [vmem:[%s1 + $0xd0] sm:$0xf]
    %v130 = vld [vmem:[%s1 + $0xd4] sm:$0xf]
    %v131 = vld [vmem:[%s1 + $0xd8] sm:$0xf]
    %v132 = vld [vmem:[%s1 + $0xdc] sm:$0xf]
    %v133 = vld [vmem:[%s1 + $0xe0] sm:$0xf]
    %v134 = vld [vmem:[%s1 + $0xe4] sm:$0xf]
    %v135 = vld [vmem:[%s1 + $0xe8] sm:$0xf]
    %v136 = vld [vmem:[%s1 + $0xec] sm:$0xf]
    %v137 = vld [vmem:[%s1 + $0xf0] sm:$0xf]
    %v138 = vld [vmem:[%s1 + $0xf4] sm:$0xf]
    %v139 = vld [vmem:[%s1 + $0xf8] sm:$0xf]
    %v140 = vld [vmem:[%s1 + $0xfc] sm:$0xf]
    %v141 = vld [vmem:[%s1 + $0x100] sm:$0xf]
    %v142 = vld [vmem:[%s1 + $0x104] sm:$0xf]
    %v143 = vld [vmem:[%s1 + $0x108] sm:$0xf]
    %v144 = vld [vmem:[%s1 + $0x10c] sm:$0xf]
    %v145 = vld [vmem:[%s1 + $0x110] sm:$0xf]
    %v146 = vld [vmem:[%s1 + $0x114] sm:$0xf]
    %v147 = vld [vmem:[%s1 + $0x118] sm:$0xf]
    %v148 = vld [vmem:[%s1 + $0x11c] sm:$0xf]
    %v149 = vld [vmem:[%s1 + $0x120] sm:$0xf]
    %v150 = vld [vmem:[%s1 + $0x124] sm:$0xf]
    %v151 = vld [vmem:[%s1 + $0x128] sm:$0xf]
    %v152 = vld [vmem:[%s1 + $0x12c] sm:$0xf]
    %v153 = vld [vmem:[%s1 + $0x130] sm:$0xf]
    %v154 = vld [vmem:[%s1 + $0x134] sm:$0xf]
    %v155 = vld [vmem:[%s1 + $0x138] sm:$0xf]
    %v156 = vld [vmem:[%s1 + $0x13c] sm:$0xf]
    %v157 = vld [vmem:[%s1 + $0x140] sm:$0xf]
    %v158 = vld [vmem:[%s1 + $0x144] sm:$0xf]
    %v159 = vld [vmem:[%s1 + $0x148] sm:$0xf]
    %v160 = vld [vmem:[%s1 + $0x14c] sm:$0xf]
    %v161 = vld [vmem:[%s1 + $0x150] sm:$0xf]
    %v162 = vld [vmem:[%s1 + $0x154] sm:$0xf]
    %v163 = vld [vmem:[%s1 + $0x158] sm:$0xf]
    %v164 = vld [vmem:[%s1 + $0x15c] sm:$0xf]
    %v165 = vld [vmem:[%s1 + $0x160] sm:$0xf]
    %v166 = vld [vmem:[%s1 + $0x164] sm:$0xf]
    %v167 = vld [vmem:[%s1 + $0x168] sm:$0xf]
    %v168 = vld [vmem:[%s1 + $0x16c] sm:$0xf]
    %v169 = vld [vmem:[%s1 + $0x170] sm:$0xf]
    %v170 = vld [vmem:[%s1 + $0x174] sm:$0xf]
    %v171 = vld [vmem:[%s1 + $0x178] sm:$0xf]
    %v172 = vld [vmem:[%s1 + $0x17c] sm:$0xf]
    %v173 = vld [vmem:[%s1 + $0x180] sm:$0xf]
    %v174 = vld [vmem:[%s1 + $0x184] sm:$0xf]
    %v175 = vld [vmem:[%s1 + $0x188] sm:$0xf]
    %v176 = vld [vmem:[%s1 + $0x18c] sm:$0xf]
    %v177 = vld [vmem:[%s1 + $0x190] sm:$0xf]
    %v178 = vld [vmem:[%s1 + $0x194] sm:$0xf]
    %v179 = vld [vmem:[%s1 + $0x198] sm:$0xf]
    %v180 = vld [vmem:[%s1 + $0x19c] sm:$0xf]
    %v181 = vld [vmem:[%s1 + $0x1a0] sm:$0xf]
    %v182 = vld [vmem:[%s1 + $0x1a4] sm:$0xf]
    %v183 = vld [vmem:[%s1 + $0x1a8] sm:$0xf]
    %v184 = vld [vmem:[%s1 + $0x1ac] sm:$0xf]
    %v185 = vld [vmem:[%s1 + $0x1b0] sm:$0xf]
    %v186 = vld [vmem:[%s1 + $0x1b4] sm:$0xf]
    %v187 = vld [vmem:[%s1 + $0x1b8] sm:$0xf]
    %v188 = vld [vmem:[%s1 + $0x1bc] sm:$0xf]
    %v189 = vld [vmem:[%s1 + $0x1c0] sm:$0xf]
    %v190 = vld [vmem:[%s1 + $0x1c4] sm:$0xf]
    %v191 = vld [vmem:[%s1 + $0x1c8] sm:$0xf]
    %v192 = vld [vmem:[%s1 + $0x1cc] sm:$0xf]
    %v193 = vld [vmem:[%s1 + $0x1d0] sm:$0xf]
    %v194 = vld [vmem:[%s1 + $0x1d4] sm:$0xf]
    %v195 = vld [vmem:[%s1 + $0x1d8] sm:$0xf]
    %v196 = vld [vmem:[%s1 + $0x1dc] sm:$0xf]
    %v197 = vld [vmem:[%s1 + $0x1e0] sm:$0xf]
    %v198 = vld [vmem:[%s1 + $0x1e4] sm:$0xf]
    %v199 = vld [vmem:[%s1 + $0x1e8] sm:$0xf]
    %v200 = vld [vmem:[%s1 + $0x1ec] sm:$0xf]
    %v201 = vld [vmem:[%s1 + $0x1f0] sm:$0xf]
    %v202 = vld [vmem:[%s1 + $0x1f4] sm:$0xf]
    %v203 = vld [vmem:[%s1 + $0x1f8] sm:$0xf]
    %v204 = vld [vmem:[%s1 + $0x1fc] sm:$0xf]
    %v205 = vld [vmem:[%s1 + $0x200] sm:$0xf]
    %v206 = vld [vmem:[%s1 + $0x204] sm:$0xf]
    %v207 = vld [vmem:[%s1 + $0x208] sm:$0xf]
    %v208 = vld [vmem:[%s1 + $0x20c] sm:$0xf]
    %v209 = vld [vmem:[%s1 + $0x210] sm:$0xf]
    %v210 = vld [vmem:[%s1 + $0x214] sm:$0xf]
    %v211 = vld [vmem:[%s1 + $0x218] sm:$0xf]
    %v212 = vld [vmem:[%s1 + $0x21c] sm:$0xf]
    %v213 = vld [vmem:[%s1 + $0x220] sm:$0xf]
    %v214 = vld [vmem:[%s1 + $0x224] sm:$0xf]
    %v215 = vld [vmem:[%s1 + $0x228] sm:$0xf]
    %v216 = vld [vmem:[%s1 + $0x22c] sm:$0xf]
    %v217 = vld [vmem:[%s1 + $0x230] sm:$0xf]
    %v218 = vld [vmem:[%s1 + $0x234] sm:$0xf]
    %v219 = vld [vmem:[%s1 + $0x238] sm:$0xf]
    %v220 = vld [vmem:[%s1 + $0x23c] sm:$0xf]
    %v221 = vld [vmem:[%s1 + $0x240] sm:$0xf]
    %v222 = vld [vmem:[%s1 + $0x244] sm:$0xf]
    %v223 = vld [vmem:[%s1 + $0x248] sm:$0xf]
    %v224 = vld [vmem:[%s1 + $0x24c] sm:$0xf]
    %v225 = vld [vmem:[%s1 + $0x250] sm:$0xf]
    %v226 = vld [vmem:[%s1 + $0x254] sm:$0xf]
    %v227 = vld [vmem:[%s1 + $0x258] sm:$0xf]
    %v228 = vld [vmem:[%s1 + $0x25c] sm:$0xf]
    %v229 = vld [vmem:[%s1 + $0x260] sm:$0xf]
    %v230 = vld [vmem:[%s1 + $0x264] sm:$0xf]
    %v231 = vld [vmem:[%s1 + $0x268] sm:$0xf]
    %v232 = vld [vmem:[%s1 + $0x26c] sm:$0xf]
    %v233 = vld [vmem:[%s1 + $0x270] sm:$0xf]
    %v234 = vld [vmem:[%s1 + $0x274] sm:$0xf]
    %v235 = vld [vmem:[%s1 + $0x278] sm:$0xf]
    %v236 = vld [vmem:[%s1 + $0x27c] sm:$0xf]
    %v237 = vld [vmem:[%s1 + $0x280] sm:$0xf]
    %v238 = vld [vmem:[%s1 + $0x284] sm:$0xf]
    %v239 = vld [vmem:[%s1 + $0x288] sm:$0xf]
    %v240 = vld [vmem:[%s1 + $0x28c] sm:$0xf]
    %v241 = vld [vmem:[%s1 + $0x290] sm:$0xf]
    %v242 = vld [vmem:[%s1 + $0x294] sm:$0xf]
    %v243 = vld [vmem:[%s1 + $0x298] sm:$0xf]
    %v244 = vld [vmem:[%s1 + $0x29c] sm:$0xf]
    %v245 = vld [vmem:[%s1 + $0x2a0] sm:$0xf]
    %v246 = vld [vmem:[%s1 + $0x2a4] sm:$0xf]
    %v247 = vld [vmem:[%s1 + $0x2a8] sm:$0xf]
    %v248 = vld [vmem:[%s1 + $0x2ac] sm:$0xf]
    %v249 = vld [vmem:[%s1 + $0x2b0] sm:$0xf]
    %v250 = vld [vmem:[%s1 + $0x2b4] sm:$0xf]
    %v251 = vld [vmem:[%s1 + $0x2b8] sm:$0xf]
    %v252 = vld [vmem:[%s1 + $0x2bc] sm:$0xf]
    %v253 = vld [vmem:[%s1 + $0x2c0] sm:$0xf]
    %v254 = vld [vmem:[%s1 + $0x2c4] sm:$0xf]
    %v255 = vld [vmem:[%s1 + $0x2c8] sm:$0xf]
    %v256 = vld [vmem:[%s1 + $0x2cc] sm:$0xf]
    %v257 = vld [vmem:[%s1 + $0x2d0] sm:$0xf]
    %v258 = vld [vmem:[%s1 + $0x2d4] sm:$0xf]
    %v259 = vld [vmem:[%s1 + $0x2d8] sm:$0xf]
    %v260 = vld [vmem:[%s1 + $0x2dc] sm:$0xf]
    %v261 = vld [vmem:[%s1 + $0x2e0] sm:$0xf]
    %v262 = vld [vmem:[%s1 + $0x2e4] sm:$0xf]
    %v263 = vld [vmem:[%s1 + $0x2e8] sm:$0xf]
    %v264 = vld [vmem:[%s1 + $0x2ec] sm:$0xf]
    %v265 = vld [vmem:[%s1 + $0x2f0] sm:$0xf]
    %v266 = vld [vmem:[%s1 + $0x2f4] sm:$0xf]
    %v267 = vld [vmem:[%s1 + $0x2f8] sm:$0xf]
    %v268 = vld [vmem:[%s1 + $0x2fc] sm:$0xf]
    %v269 = vld [vmem:[%s1 + $0x300] sm:$0xf]
    %v270 = vld [vmem:[%s1 + $0x304] sm:$0xf]
    %v271 = vld [vmem:[%s1 + $0x308] sm:$0xf]
    %v272 = vld [vmem:[%s1 + $0x30c] sm:$0xf]
    %v273 = vld [vmem:[%s1 + $0x310] sm:$0xf]
    %v274 = vld [vmem:[%s1 + $0x314] sm:$0xf]
    %v275 = vld [vmem:[%s1 + $0x318] sm:$0xf]
    %v276 = vld [vmem:[%s1 + $0x31c] sm:$0xf]
    %v277 = vld [vmem:[%s1 + $0x320] sm:$0xf]
    %v278 = vld [vmem:[%s1 + $0x324] sm:$0xf]
    %v279 = vld [vmem:[%s1 + $0x328] sm:$0xf]
    %v280 = vld [vmem:[%s1 + $0x32c] sm:$0xf]
    %v281 = vld [vmem:[%s1 + $0x330] sm:$0xf]
    %v282 = vld [vmem:[%s1 + $0x334] sm:$0xf]
    %v283 = vld [vmem:[%s1 + $0x338] sm:$0xf]
    %v284 = vld [vmem:[%s1 + $0x33c] sm:$0xf]
    %v285 = vld [vmem:[%s1 + $0x340] sm:$0xf]
    %v286 = vld [vmem:[%s1 + $0x344] sm:$0xf]
    %v287 = vld [vmem:[%s1 + $0x348] sm:$0xf]
    %v288 = vld [vmem:[%s1 + $0x34c] sm:$0xf]
    %v289 = vld [vmem:[%s1 + $0x350] sm:$0xf]
    %v290 = vld [vmem:[%s1 + $0x354] sm:$0xf]
    %v291 = vld [vmem:[%s1 + $0x358] sm:$0xf]
    %v292 = vld [vmem:[%s1 + $0x35c] sm:$0xf]
    %v293 = vld [vmem:[%s1 + $0x360] sm:$0xf]
    %v294 = vld [vmem:[%s1 + $0x364] sm:$0xf]
    %v295 = vld [vmem:[%s1 + $0x368] sm:$0xf]
    %v296 = vld [vmem:[%s1 + $0x36c] sm:$0xf]
    %v297 = vld [vmem:[%s1 + $0x370] sm:$0xf]
    %v298 = vld [vmem:[%s1 + $0x374] sm:$0xf]
    %v299 = vld [vmem:[%s1 + $0x378] sm:$0xf]
    %v300 = vld [vmem:[%s1 + $0x37c] sm:$0xf]
    %v301 = vld [vmem:[%s1 + $0x380] sm:$0xf]
    %v302 = vld [vmem:[%s1 + $0x384] sm:$0xf]
    %v303 = vld [vmem:[%s1 + $0x388] sm:$0xf]
    %v304 = vld [vmem:[%s1 + $0x38c] sm:$0xf]
    %v305 = vld [vmem:[%s1 + $0x390] sm:$0xf]
    %v306 = vld [vmem:[%s1 + $0x394] sm:$0xf]
    %v307 = vld [vmem:[%s1 + $0x398] sm:$0xf]
    %v308 = vld [vmem:[%s1 + $0x39c] sm:$0xf]
    %v309 = vld [vmem:[%s1 + $0x3a0] sm:$0xf]
    %v310 = vld [vmem:[%s1 + $0x3a4] sm:$0xf]
    %v311 = vld [vmem:[%s1 + $0x3a8] sm:$0xf]
    %v312 = vld [vmem:[%s1 + $0x3ac] sm:$0xf]
    %v313 = vld [vmem:[%s1 + $0x3b0] sm:$0xf]
    %v314 = vld [vmem:[%s1 + $0x3b4] sm:$0xf]
    %v315 = vld [vmem:[%s1 + $0x3b8] sm:$0xf]
    %v316 = vld [vmem:[%s1 + $0x3bc] sm:$0xf]
    %v317 = vld [vmem:[%s1 + $0x3c0] sm:$0xf]
    %v318 = vld [vmem:[%s1 + $0x3c4] sm:$0xf]
    %v319 = vld [vmem:[%s1 + $0x3c8] sm:$0xf]
    %v320 = vld [vmem:[%s1 + $0x3cc] sm:$0xf]
    %v321 = vld [vmem:[%s1 + $0x3d0] sm:$0xf]
    %v322 = vld [vmem:[%s1 + $0x3d4] sm:$0xf]
    %v323 = vld [vmem:[%s1 + $0x3d8] sm:$0xf]
    %v324 = vld [vmem:[%s1 + $0x3dc] sm:$0xf]
    %v325 = vld [vmem:[%s1 + $0x3e0] sm:$0xf]
    %v326 = vld [vmem:[%s1 + $0x3e4] sm:$0xf]
    %v327 = vld [vmem:[%s1 + $0x3e8] sm:$0xf]
    %v328 = vld [vmem:[%s1 + $0x3ec] sm:$0xf]
    %v329 = vld [vmem:[%s1 + $0x3f0] sm:$0xf]
    %v330 = vld [vmem:[%s1 + $0x3f4] sm:$0xf]
    %v331 = vld [vmem:[%s1 + $0x3f8] sm:$0xf]
    %v332 = vld [vmem:[%s1 + $0x3fc] sm:$0xf]
    %v397 = vunpack.c.l.b16 %v13
    %v398 = vunpack.c.h.b16 %v13
    %v399 = vunpack.c.l.b16 %v14
    %v400 = vunpack.c.h.b16 %v14
    %v401 = vunpack.c.l.b16 %v15
    %v402 = vunpack.c.h.b16 %v15
    %v403 = vunpack.c.l.b16 %v16
    %v404 = vunpack.c.h.b16 %v16
    %v405 = vunpack.c.l.b16 %v17
    %v406 = vunpack.c.h.b16 %v17
    %v407 = vunpack.c.l.b16 %v18
    %v408 = vunpack.c.h.b16 %v18
    %v409 = vunpack.c.l.b16 %v19
    %v410 = vunpack.c.h.b16 %v19
    %v411 = vunpack.c.l.b16 %v20
    %v412 = vunpack.c.h.b16 %v20
    %v413 = vunpack.c.l.b16 %v21
    %v414 = vunpack.c.h.b16 %v21
    %v415 = vunpack.c.l.b16 %v22
    %v416 = vunpack.c.h.b16 %v22
    %v417 = vunpack.c.l.b16 %v23
    %v418 = vunpack.c.h.b16 %v23
    %v419 = vunpack.c.l.b16 %v24
    %v420 = vunpack.c.h.b16 %v24
    %v421 = vunpack.c.l.b16 %v25
    %v422 = vunpack.c.h.b16 %v25
    %v423 = vunpack.c.l.b16 %v26
    %v424 = vunpack.c.h.b16 %v26
    %v425 = vunpack.c.l.b16 %v27
    %v426 = vunpack.c.h.b16 %v27
    %v427 = vunpack.c.l.b16 %v28
    %v428 = vunpack.c.h.b16 %v28
    %v429 = vunpack.c.l.b16 %v29
    %v430 = vunpack.c.h.b16 %v29
    %v431 = vunpack.c.l.b16 %v30
    %v432 = vunpack.c.h.b16 %v30
    %v433 = vunpack.c.l.b16 %v31
    %v434 = vunpack.c.h.b16 %v31
    %v435 = vunpack.c.l.b16 %v32
    %v436 = vunpack.c.h.b16 %v32
    %v437 = vunpack.c.l.b16 %v33
    %v438 = vunpack.c.h.b16 %v33
    %v439 = vunpack.c.l.b16 %v34
    %v440 = vunpack.c.h.b16 %v34
    %v441 = vunpack.c.l.b16 %v35
    %v442 = vunpack.c.h.b16 %v35
    %v443 = vunpack.c.l.b16 %v36
    %v444 = vunpack.c.h.b16 %v36
    %v445 = vunpack.c.l.b16 %v37
    %v446 = vunpack.c.h.b16 %v37
    %v447 = vunpack.c.l.b16 %v38
    %v448 = vunpack.c.h.b16 %v38
    %v449 = vunpack.c.l.b16 %v39
    %v450 = vunpack.c.h.b16 %v39
    %v451 = vunpack.c.l.b16 %v40
    %v452 = vunpack.c.h.b16 %v40
    %v453 = vunpack.c.l.b16 %v41
    %v454 = vunpack.c.h.b16 %v41
    %v455 = vunpack.c.l.b16 %v42
    %v456 = vunpack.c.h.b16 %v42
    %v457 = vunpack.c.l.b16 %v43
    %v458 = vunpack.c.h.b16 %v43
    %v459 = vunpack.c.l.b16 %v44
    %v460 = vunpack.c.h.b16 %v44
    %v461 = vunpack.c.l.b16 %v45
    %v462 = vunpack.c.h.b16 %v45
    %v463 = vunpack.c.l.b16 %v46
    %v464 = vunpack.c.h.b16 %v46
    %v465 = vunpack.c.l.b16 %v47
    %v466 = vunpack.c.h.b16 %v47
    %v467 = vunpack.c.l.b16 %v48
    %v468 = vunpack.c.h.b16 %v48
    %v469 = vunpack.c.l.b16 %v49
    %v470 = vunpack.c.h.b16 %v49
    %v471 = vunpack.c.l.b16 %v50
    %v472 = vunpack.c.h.b16 %v50
    %v473 = vunpack.c.l.b16 %v51
    %v474 = vunpack.c.h.b16 %v51
    %v475 = vunpack.c.l.b16 %v52
    %v476 = vunpack.c.h.b16 %v52
    %v477 = vunpack.c.l.b16 %v53
    %v478 = vunpack.c.h.b16 %v53
    %v479 = vunpack.c.l.b16 %v54
    %v480 = vunpack.c.h.b16 %v54
    %v481 = vunpack.c.l.b16 %v55
    %v482 = vunpack.c.h.b16 %v55
    %v483 = vunpack.c.l.b16 %v56
    %v484 = vunpack.c.h.b16 %v56
    %v485 = vunpack.c.l.b16 %v57
    %v486 = vunpack.c.h.b16 %v57
    %v487 = vunpack.c.l.b16 %v58
    %v488 = vunpack.c.h.b16 %v58
    %v489 = vunpack.c.l.b16 %v59
    %v490 = vunpack.c.h.b16 %v59
    %v491 = vunpack.c.l.b16 %v60
    %v492 = vunpack.c.h.b16 %v60
    %v493 = vunpack.c.l.b16 %v61
    %v494 = vunpack.c.h.b16 %v61
    %v495 = vunpack.c.l.b16 %v62
    %v496 = vunpack.c.h.b16 %v62
    %v497 = vunpack.c.l.b16 %v63
    %v498 = vunpack.c.h.b16 %v63
    %v499 = vunpack.c.l.b16 %v64
    %v500 = vunpack.c.h.b16 %v64
    %v501 = vunpack.c.l.b16 %v65
    %v502 = vunpack.c.h.b16 %v65
    %v503 = vunpack.c.l.b16 %v66
    %v504 = vunpack.c.h.b16 %v66
    %v505 = vunpack.c.l.b16 %v67
    %v506 = vunpack.c.h.b16 %v67
    %v507 = vunpack.c.l.b16 %v68
    %v508 = vunpack.c.h.b16 %v68
    %v509 = vunpack.c.l.b16 %v69
    %v510 = vunpack.c.h.b16 %v69
    %v511 = vunpack.c.l.b16 %v70
    %v512 = vunpack.c.h.b16 %v70
    %v513 = vunpack.c.l.b16 %v71
    %v514 = vunpack.c.h.b16 %v71
    %v515 = vunpack.c.l.b16 %v72
    %v516 = vunpack.c.h.b16 %v72
    %v517 = vunpack.c.l.b16 %v73
    %v518 = vunpack.c.h.b16 %v73
    %v519 = vunpack.c.l.b16 %v74
    %v520 = vunpack.c.h.b16 %v74
    %v521 = vunpack.c.l.b16 %v75
    %v522 = vunpack.c.h.b16 %v75
    %v523 = vunpack.c.l.b16 %v76
    %v524 = vunpack.c.h.b16 %v76
    %v525 = vpack.c.b16 %v413, %v397
    %v526 = vpack.c.b16 %v414, %v398
    %v527 = vpack.c.b16 %v415, %v399
    %v528 = vpack.c.b16 %v416, %v400
    %v529 = vpack.c.b16 %v417, %v401
    %v530 = vpack.c.b16 %v418, %v402
    %v531 = vpack.c.b16 %v419, %v403
    %v532 = vpack.c.b16 %v420, %v404
    %v533 = vpack.c.b16 %v421, %v405
    %v534 = vpack.c.b16 %v422, %v406
    %v535 = vpack.c.b16 %v423, %v407
    %v536 = vpack.c.b16 %v424, %v408
    %v537 = vpack.c.b16 %v425, %v409
    %v538 = vpack.c.b16 %v426, %v410
    %v539 = vpack.c.b16 %v427, %v411
    %v540 = vpack.c.b16 %v428, %v412
    %v541 = vpack.c.b16 %v445, %v429
    %v542 = vpack.c.b16 %v446, %v430
    %v543 = vpack.c.b16 %v447, %v431
    %v544 = vpack.c.b16 %v448, %v432
    %v545 = vpack.c.b16 %v449, %v433
    %v546 = vpack.c.b16 %v450, %v434
    %v547 = vpack.c.b16 %v451, %v435
    %v548 = vpack.c.b16 %v452, %v436
    %v549 = vpack.c.b16 %v453, %v437
    %v550 = vpack.c.b16 %v454, %v438
    %v551 = vpack.c.b16 %v455, %v439
    %v552 = vpack.c.b16 %v456, %v440
    %v553 = vpack.c.b16 %v457, %v441
    %v554 = vpack.c.b16 %v458, %v442
    %v555 = vpack.c.b16 %v459, %v443
    %v556 = vpack.c.b16 %v460, %v444
    %v557 = vpack.c.b16 %v477, %v461
    %v558 = vpack.c.b16 %v478, %v462
    %v559 = vpack.c.b16 %v479, %v463
    %v560 = vpack.c.b16 %v480, %v464
    %v561 = vpack.c.b16 %v481, %v465
    %v562 = vpack.c.b16 %v482, %v466
    %v563 = vpack.c.b16 %v483, %v467
    %v564 = vpack.c.b16 %v484, %v468
    %v565 = vpack.c.b16 %v485, %v469
    %v566 = vpack.c.b16 %v486, %v470
    %v567 = vpack.c.b16 %v487, %v471
    %v568 = vpack.c.b16 %v488, %v472
    %v569 = vpack.c.b16 %v489, %v473
    %v570 = vpack.c.b16 %v490, %v474
    %v571 = vpack.c.b16 %v491, %v475
    %v572 = vpack.c.b16 %v492, %v476
    %v573 = vpack.c.b16 %v509, %v493
    %v574 = vpack.c.b16 %v510, %v494
    %v575 = vpack.c.b16 %v511, %v495
    %v576 = vpack.c.b16 %v512, %v496
    %v577 = vpack.c.b16 %v513, %v497
    %v578 = vpack.c.b16 %v514, %v498
    %v579 = vpack.c.b16 %v515, %v499
    %v580 = vpack.c.b16 %v516, %v500
    %v581 = vpack.c.b16 %v517, %v501
    %v582 = vpack.c.b16 %v518, %v502
    %v583 = vpack.c.b16 %v519, %v503
    %v584 = vpack.c.b16 %v520, %v504
    %v585 = vpack.c.b16 %v521, %v505
    %v586 = vpack.c.b16 %v522, %v506
    %v587 = vpack.c.b16 %v523, %v507
    %v588 = vpack.c.b16 %v524, %v508
    %v909 = vunpack.c.l.b16 %v77
    %v910 = vunpack.c.l.b16 %v78
    %v911 = vunpack.c.l.b16 %v79
    %v912 = vunpack.c.l.b16 %v80
    %v913 = vunpack.c.l.b16 %v81
    %v914 = vunpack.c.l.b16 %v82
    %v915 = vunpack.c.l.b16 %v83
    %v916 = vunpack.c.l.b16 %v84
    %v917 = vunpack.c.l.b16 %v85
    %v918 = vunpack.c.l.b16 %v86
    %v919 = vunpack.c.l.b16 %v87
    %v920 = vunpack.c.l.b16 %v88
    %v921 = vunpack.c.l.b16 %v89
    %v922 = vunpack.c.l.b16 %v90
    %v923 = vunpack.c.l.b16 %v91
    %v924 = vunpack.c.l.b16 %v92
    %v925 = vunpack.c.l.b16 %v93
    %v926 = vunpack.c.l.b16 %v94
    %v927 = vunpack.c.l.b16 %v95
    %v928 = vunpack.c.l.b16 %v96
    %v929 = vunpack.c.l.b16 %v97
    %v930 = vunpack.c.l.b16 %v98
    %v931 = vunpack.c.l.b16 %v99
    %v932 = vunpack.c.l.b16 %v100
    %v933 = vunpack.c.l.b16 %v101
    %v934 = vunpack.c.l.b16 %v102
    %v935 = vunpack.c.l.b16 %v103
    %v936 = vunpack.c.l.b16 %v104
    %v937 = vunpack.c.l.b16 %v105
    %v938 = vunpack.c.l.b16 %v106
    %v939 = vunpack.c.l.b16 %v107
    %v940 = vunpack.c.l.b16 %v108
    %v941 = vunpack.c.l.b16 %v109
    %v942 = vunpack.c.l.b16 %v110
    %v943 = vunpack.c.l.b16 %v111
    %v944 = vunpack.c.l.b16 %v112
    %v945 = vunpack.c.l.b16 %v113
    %v946 = vunpack.c.l.b16 %v114
    %v947 = vunpack.c.l.b16 %v115
    %v948 = vunpack.c.l.b16 %v116
    %v949 = vunpack.c.l.b16 %v117
    %v950 = vunpack.c.l.b16 %v118
    %v951 = vunpack.c.l.b16 %v119
    %v952 = vunpack.c.l.b16 %v120
    %v953 = vunpack.c.l.b16 %v121
    %v954 = vunpack.c.l.b16 %v122
    %v955 = vunpack.c.l.b16 %v123
    %v956 = vunpack.c.l.b16 %v124
    %v957 = vunpack.c.l.b16 %v125
    %v958 = vunpack.c.l.b16 %v126
    %v959 = vunpack.c.l.b16 %v127
    %v960 = vunpack.c.l.b16 %v128
    %v961 = vunpack.c.l.b16 %v129
    %v962 = vunpack.c.l.b16 %v130
    %v963 = vunpack.c.l.b16 %v131
    %v964 = vunpack.c.l.b16 %v132
    %v965 = vunpack.c.l.b16 %v133
    %v966 = vunpack.c.l.b16 %v134
    %v967 = vunpack.c.l.b16 %v135
    %v968 = vunpack.c.l.b16 %v136
    %v969 = vunpack.c.l.b16 %v137
    %v970 = vunpack.c.l.b16 %v138
    %v971 = vunpack.c.l.b16 %v139
    %v972 = vunpack.c.l.b16 %v140
    %v973 = vunpack.c.l.b16 %v141
    %v974 = vunpack.c.l.b16 %v142
    %v975 = vunpack.c.l.b16 %v143
    %v976 = vunpack.c.l.b16 %v144
    %v977 = vunpack.c.l.b16 %v145
    %v978 = vunpack.c.l.b16 %v146
    %v979 = vunpack.c.l.b16 %v147
    %v980 = vunpack.c.l.b16 %v148
    %v981 = vunpack.c.l.b16 %v149
    %v982 = vunpack.c.l.b16 %v150
    %v983 = vunpack.c.l.b16 %v151
    %v984 = vunpack.c.l.b16 %v152
    %v985 = vunpack.c.l.b16 %v153
    %v986 = vunpack.c.l.b16 %v154
    %v987 = vunpack.c.l.b16 %v155
    %v988 = vunpack.c.l.b16 %v156
    %v989 = vunpack.c.l.b16 %v157
    %v990 = vunpack.c.l.b16 %v158
    %v991 = vunpack.c.l.b16 %v159
    %v992 = vunpack.c.l.b16 %v160
    %v993 = vunpack.c.l.b16 %v161
    %v994 = vunpack.c.l.b16 %v162
    %v995 = vunpack.c.l.b16 %v163
    %v996 = vunpack.c.l.b16 %v164
    %v997 = vunpack.c.l.b16 %v165
    %v998 = vunpack.c.l.b16 %v166
    %v999 = vunpack.c.l.b16 %v167
    %v1000 = vunpack.c.l.b16 %v168
    %v1001 = vunpack.c.l.b16 %v169
    %v1002 = vunpack.c.l.b16 %v170
    %v1003 = vunpack.c.l.b16 %v171
    %v1004 = vunpack.c.l.b16 %v172
    %v1005 = vunpack.c.l.b16 %v173
    %v1006 = vunpack.c.l.b16 %v174
    %v1007 = vunpack.c.l.b16 %v175
    %v1008 = vunpack.c.l.b16 %v176
    %v1009 = vunpack.c.l.b16 %v177
    %v1010 = vunpack.c.l.b16 %v178
    %v1011 = vunpack.c.l.b16 %v179
    %v1012 = vunpack.c.l.b16 %v180
    %v1013 = vunpack.c.l.b16 %v181
    %v1014 = vunpack.c.l.b16 %v182
    %v1015 = vunpack.c.l.b16 %v183
    %v1016 = vunpack.c.l.b16 %v184
    %v1017 = vunpack.c.l.b16 %v185
    %v1018 = vunpack.c.l.b16 %v186
    %v1019 = vunpack.c.l.b16 %v187
    %v1020 = vunpack.c.l.b16 %v188
    %v1021 = vunpack.c.l.b16 %v189
    %v1022 = vunpack.c.l.b16 %v190
    %v1023 = vunpack.c.l.b16 %v191
    %v1024 = vunpack.c.l.b16 %v192
    %v1025 = vunpack.c.l.b16 %v193
    %v1026 = vunpack.c.l.b16 %v194
    %v1027 = vunpack.c.l.b16 %v195
    %v1028 = vunpack.c.l.b16 %v196
    %v1029 = vunpack.c.l.b16 %v197
    %v1030 = vunpack.c.l.b16 %v198
    %v1031 = vunpack.c.l.b16 %v199
    %v1032 = vunpack.c.l.b16 %v200
    %v1033 = vunpack.c.l.b16 %v201
    %v1034 = vunpack.c.l.b16 %v202
    %v1035 = vunpack.c.l.b16 %v203
    %v1036 = vunpack.c.l.b16 %v204
    %v1037 = vunpack.c.l.b16 %v205
    %v1038 = vunpack.c.l.b16 %v206
    %v1039 = vunpack.c.l.b16 %v207
    %v1040 = vunpack.c.l.b16 %v208
    %v1041 = vunpack.c.l.b16 %v209
    %v1042 = vunpack.c.l.b16 %v210
    %v1043 = vunpack.c.l.b16 %v211
    %v1044 = vunpack.c.l.b16 %v212
    %v1045 = vunpack.c.l.b16 %v213
    %v1046 = vunpack.c.l.b16 %v214
    %v1047 = vunpack.c.l.b16 %v215
    %v1048 = vunpack.c.l.b16 %v216
    %v1049 = vunpack.c.l.b16 %v217
    %v1050 = vunpack.c.l.b16 %v218
    %v1051 = vunpack.c.l.b16 %v219
    %v1052 = vunpack.c.l.b16 %v220
    %v1053 = vunpack.c.l.b16 %v221
    %v1054 = vunpack.c.l.b16 %v222
    %v1055 = vunpack.c.l.b16 %v223
    %v1056 = vunpack.c.l.b16 %v224
    %v1057 = vunpack.c.l.b16 %v225
    %v1058 = vunpack.c.l.b16 %v226
    %v1059 = vunpack.c.l.b16 %v227
    %v1060 = vunpack.c.l.b16 %v228
    %v1061 = vunpack.c.l.b16 %v229
    %v1062 = vunpack.c.l.b16 %v230
    %v1063 = vunpack.c.l.b16 %v231
    %v1064 = vunpack.c.l.b16 %v232
    %v1065 = vunpack.c.l.b16 %v233
    %v1066 = vunpack.c.l.b16 %v234
    %v1067 = vunpack.c.l.b16 %v235
    %v1068 = vunpack.c.l.b16 %v236
    %v1069 = vunpack.c.l.b16 %v237
    %v1070 = vunpack.c.l.b16 %v238
    %v1071 = vunpack.c.l.b16 %v239
    %v1072 = vunpack.c.l.b16 %v240
    %v1073 = vunpack.c.l.b16 %v241
    %v1074 = vunpack.c.l.b16 %v242
    %v1075 = vunpack.c.l.b16 %v243
    %v1076 = vunpack.c.l.b16 %v244
    %v1077 = vunpack.c.l.b16 %v245
    %v1078 = vunpack.c.l.b16 %v246
    %v1079 = vunpack.c.l.b16 %v247
    %v1080 = vunpack.c.l.b16 %v248
    %v1081 = vunpack.c.l.b16 %v249
    %v1082 = vunpack.c.l.b16 %v250
    %v1083 = vunpack.c.l.b16 %v251
    %v1084 = vunpack.c.l.b16 %v252
    %v1085 = vunpack.c.l.b16 %v253
    %v1086 = vunpack.c.l.b16 %v254
    %v1087 = vunpack.c.l.b16 %v255
    %v1088 = vunpack.c.l.b16 %v256
    %v1089 = vunpack.c.l.b16 %v257
    %v1090 = vunpack.c.l.b16 %v258
    %v1091 = vunpack.c.l.b16 %v259
    %v1092 = vunpack.c.l.b16 %v260
    %v1093 = vunpack.c.l.b16 %v261
    %v1094 = vunpack.c.l.b16 %v262
    %v1095 = vunpack.c.l.b16 %v263
    %v1096 = vunpack.c.l.b16 %v264
    %v1097 = vunpack.c.l.b16 %v265
    %v1098 = vunpack.c.l.b16 %v266
    %v1099 = vunpack.c.l.b16 %v267
    %v1100 = vunpack.c.l.b16 %v268
    %v1101 = vunpack.c.l.b16 %v269
    %v1102 = vunpack.c.l.b16 %v270
    %v1103 = vunpack.c.l.b16 %v271
    %v1104 = vunpack.c.l.b16 %v272
    %v1105 = vunpack.c.l.b16 %v273
    %v1106 = vunpack.c.l.b16 %v274
    %v1107 = vunpack.c.l.b16 %v275
    %v1108 = vunpack.c.l.b16 %v276
    %v1109 = vunpack.c.l.b16 %v277
    %v1110 = vunpack.c.l.b16 %v278
    %v1111 = vunpack.c.l.b16 %v279
    %v1112 = vunpack.c.l.b16 %v280
    %v1113 = vunpack.c.l.b16 %v281
    %v1114 = vunpack.c.l.b16 %v282
    %v1115 = vunpack.c.l.b16 %v283
    %v1116 = vunpack.c.l.b16 %v284
    %v1117 = vunpack.c.l.b16 %v285
    %v1118 = vunpack.c.l.b16 %v286
    %v1119 = vunpack.c.l.b16 %v287
    %v1120 = vunpack.c.l.b16 %v288
    %v1121 = vunpack.c.l.b16 %v289
    %v1122 = vunpack.c.l.b16 %v290
    %v1123 = vunpack.c.l.b16 %v291
    %v1124 = vunpack.c.l.b16 %v292
    %v1125 = vunpack.c.l.b16 %v293
    %v1126 = vunpack.c.l.b16 %v294
    %v1127 = vunpack.c.l.b16 %v295
    %v1128 = vunpack.c.l.b16 %v296
    %v1129 = vunpack.c.l.b16 %v297
    %v1130 = vunpack.c.l.b16 %v298
    %v1131 = vunpack.c.l.b16 %v299
    %v1132 = vunpack.c.l.b16 %v300
    %v1133 = vunpack.c.l.b16 %v301
    %v1134 = vunpack.c.l.b16 %v302
    %v1135 = vunpack.c.l.b16 %v303
    %v1136 = vunpack.c.l.b16 %v304
    %v1137 = vunpack.c.l.b16 %v305
    %v1138 = vunpack.c.l.b16 %v306
    %v1139 = vunpack.c.l.b16 %v307
    %v1140 = vunpack.c.l.b16 %v308
    %v1141 = vunpack.c.l.b16 %v309
    %v1142 = vunpack.c.l.b16 %v310
    %v1143 = vunpack.c.l.b16 %v311
    %v1144 = vunpack.c.l.b16 %v312
    %v1145 = vunpack.c.l.b16 %v313
    %v1146 = vunpack.c.l.b16 %v314
    %v1147 = vunpack.c.l.b16 %v315
    %v1148 = vunpack.c.l.b16 %v316
    %v1149 = vunpack.c.l.b16 %v317
    %v1150 = vunpack.c.l.b16 %v318
    %v1151 = vunpack.c.l.b16 %v319
    %v1152 = vunpack.c.l.b16 %v320
    %v1153 = vunpack.c.l.b16 %v321
    %v1154 = vunpack.c.l.b16 %v322
    %v1155 = vunpack.c.l.b16 %v323
    %v1156 = vunpack.c.l.b16 %v324
    %v1157 = vunpack.c.l.b16 %v325
    %v1158 = vunpack.c.l.b16 %v326
    %v1159 = vunpack.c.l.b16 %v327
    %v1160 = vunpack.c.l.b16 %v328
    %v1161 = vunpack.c.l.b16 %v329
    %v1162 = vunpack.c.l.b16 %v330
    %v1163 = vunpack.c.l.b16 %v331
    %v1164 = vunpack.c.l.b16 %v332
    %v1165 = vpack.c.b16 %v910, %v909
    %v1166 = vpack.c.b16 %v912, %v911
    %v1167 = vpack.c.b16 %v914, %v913
    %v1168 = vpack.c.b16 %v916, %v915
    %v1169 = vpack.c.b16 %v918, %v917
    %v1170 = vpack.c.b16 %v920, %v919
    %v1171 = vpack.c.b16 %v922, %v921
    %v1172 = vpack.c.b16 %v924, %v923
    %v1173 = vpack.c.b16 %v926, %v925
    %v1174 = vpack.c.b16 %v928, %v927
    %v1175 = vpack.c.b16 %v930, %v929
    %v1176 = vpack.c.b16 %v932, %v931
    %v1177 = vpack.c.b16 %v934, %v933
    %v1178 = vpack.c.b16 %v936, %v935
    %v1179 = vpack.c.b16 %v938, %v937
    %v1180 = vpack.c.b16 %v940, %v939
    %v1181 = vpack.c.b16 %v942, %v941
    %v1182 = vpack.c.b16 %v944, %v943
    %v1183 = vpack.c.b16 %v946, %v945
    %v1184 = vpack.c.b16 %v948, %v947
    %v1185 = vpack.c.b16 %v950, %v949
    %v1186 = vpack.c.b16 %v952, %v951
    %v1187 = vpack.c.b16 %v954, %v953
    %v1188 = vpack.c.b16 %v956, %v955
    %v1189 = vpack.c.b16 %v958, %v957
    %v1190 = vpack.c.b16 %v960, %v959
    %v1191 = vpack.c.b16 %v962, %v961
    %v1192 = vpack.c.b16 %v964, %v963
    %v1193 = vpack.c.b16 %v966, %v965
    %v1194 = vpack.c.b16 %v968, %v967
    %v1195 = vpack.c.b16 %v970, %v969
    %v1196 = vpack.c.b16 %v972, %v971
    %v1197 = vpack.c.b16 %v974, %v973
    %v1198 = vpack.c.b16 %v976, %v975
    %v1199 = vpack.c.b16 %v978, %v977
    %v1200 = vpack.c.b16 %v980, %v979
    %v1201 = vpack.c.b16 %v982, %v981
    %v1202 = vpack.c.b16 %v984, %v983
    %v1203 = vpack.c.b16 %v986, %v985
    %v1204 = vpack.c.b16 %v988, %v987
    %v1205 = vpack.c.b16 %v990, %v989
    %v1206 = vpack.c.b16 %v992, %v991
    %v1207 = vpack.c.b16 %v994, %v993
    %v1208 = vpack.c.b16 %v996, %v995
    %v1209 = vpack.c.b16 %v998, %v997
    %v1210 = vpack.c.b16 %v1000, %v999
    %v1211 = vpack.c.b16 %v1002, %v1001
    %v1212 = vpack.c.b16 %v1004, %v1003
    %v1213 = vpack.c.b16 %v1006, %v1005
    %v1214 = vpack.c.b16 %v1008, %v1007
    %v1215 = vpack.c.b16 %v1010, %v1009
    %v1216 = vpack.c.b16 %v1012, %v1011
    %v1217 = vpack.c.b16 %v1014, %v1013
    %v1218 = vpack.c.b16 %v1016, %v1015
    %v1219 = vpack.c.b16 %v1018, %v1017
    %v1220 = vpack.c.b16 %v1020, %v1019
    %v1221 = vpack.c.b16 %v1022, %v1021
    %v1222 = vpack.c.b16 %v1024, %v1023
    %v1223 = vpack.c.b16 %v1026, %v1025
    %v1224 = vpack.c.b16 %v1028, %v1027
    %v1225 = vpack.c.b16 %v1030, %v1029
    %v1226 = vpack.c.b16 %v1032, %v1031
    %v1227 = vpack.c.b16 %v1034, %v1033
    %v1228 = vpack.c.b16 %v1036, %v1035
    %v1229 = vpack.c.b16 %v1038, %v1037
    %v1230 = vpack.c.b16 %v1040, %v1039
    %v1231 = vpack.c.b16 %v1042, %v1041
    %v1232 = vpack.c.b16 %v1044, %v1043
    %v1233 = vpack.c.b16 %v1046, %v1045
    %v1234 = vpack.c.b16 %v1048, %v1047
    %v1235 = vpack.c.b16 %v1050, %v1049
    %v1236 = vpack.c.b16 %v1052, %v1051
    %v1237 = vpack.c.b16 %v1054, %v1053
    %v1238 = vpack.c.b16 %v1056, %v1055
    %v1239 = vpack.c.b16 %v1058, %v1057
    %v1240 = vpack.c.b16 %v1060, %v1059
    %v1241 = vpack.c.b16 %v1062, %v1061
    %v1242 = vpack.c.b16 %v1064, %v1063
    %v1243 = vpack.c.b16 %v1066, %v1065
    %v1244 = vpack.c.b16 %v1068, %v1067
    %v1245 = vpack.c.b16 %v1070, %v1069
    %v1246 = vpack.c.b16 %v1072, %v1071
    %v1247 = vpack.c.b16 %v1074, %v1073
    %v1248 = vpack.c.b16 %v1076, %v1075
    %v1249 = vpack.c.b16 %v1078, %v1077
    %v1250 = vpack.c.b16 %v1080, %v1079
    %v1251 = vpack.c.b16 %v1082, %v1081
    %v1252 = vpack.c.b16 %v1084, %v1083
    %v1253 = vpack.c.b16 %v1086, %v1085
    %v1254 = vpack.c.b16 %v1088, %v1087
    %v1255 = vpack.c.b16 %v1090, %v1089
    %v1256 = vpack.c.b16 %v1092, %v1091
    %v1257 = vpack.c.b16 %v1094, %v1093
    %v1258 = vpack.c.b16 %v1096, %v1095
    %v1259 = vpack.c.b16 %v1098, %v1097
    %v1260 = vpack.c.b16 %v1100, %v1099
    %v1261 = vpack.c.b16 %v1102, %v1101
    %v1262 = vpack.c.b16 %v1104, %v1103
    %v1263 = vpack.c.b16 %v1106, %v1105
    %v1264 = vpack.c.b16 %v1108, %v1107
    %v1265 = vpack.c.b16 %v1110, %v1109
    %v1266 = vpack.c.b16 %v1112, %v1111
    %v1267 = vpack.c.b16 %v1114, %v1113
    %v1268 = vpack.c.b16 %v1116, %v1115
    %v1269 = vpack.c.b16 %v1118, %v1117
    %v1270 = vpack.c.b16 %v1120, %v1119
    %v1271 = vpack.c.b16 %v1122, %v1121
    %v1272 = vpack.c.b16 %v1124, %v1123
    %v1273 = vpack.c.b16 %v1126, %v1125
    %v1274 = vpack.c.b16 %v1128, %v1127
    %v1275 = vpack.c.b16 %v1130, %v1129
    %v1276 = vpack.c.b16 %v1132, %v1131
    %v1277 = vpack.c.b16 %v1134, %v1133
    %v1278 = vpack.c.b16 %v1136, %v1135
    %v1279 = vpack.c.b16 %v1138, %v1137
    %v1280 = vpack.c.b16 %v1140, %v1139
    %v1281 = vpack.c.b16 %v1142, %v1141
    %v1282 = vpack.c.b16 %v1144, %v1143
    %v1283 = vpack.c.b16 %v1146, %v1145
    %v1284 = vpack.c.b16 %v1148, %v1147
    %v1285 = vpack.c.b16 %v1150, %v1149
    %v1286 = vpack.c.b16 %v1152, %v1151
    %v1287 = vpack.c.b16 %v1154, %v1153
    %v1288 = vpack.c.b16 %v1156, %v1155
    %v1289 = vpack.c.b16 %v1158, %v1157
    %v1290 = vpack.c.b16 %v1160, %v1159
    %v1291 = vpack.c.b16 %v1162, %v1161
    %v1292 = vpack.c.b16 %v1164, %v1163
    %1421 = vmatprep.subr.bf16.mxu0 0
    %1422 = vmatpush1.bf16.msra.mxu0 %v1172
    %1423 = vmatprep.subr.bf16.mxu0 0
    %1424 = vmatpush1.bf16.msra.mxu0 %v1171
    %1425 = vmatprep.subr.bf16.mxu0 0
    %1426 = vmatpush1.bf16.msra.mxu0 %v1170
    %1427 = vmatprep.subr.bf16.mxu0 0
    %1428 = vmatpush1.bf16.msra.mxu0 %v1169
    %1429 = vmatprep.subr.bf16.mxu0 0
    %1430 = vmatpush1.bf16.msra.mxu0 %v1168
    %1431 = vmatprep.subr.bf16.mxu0 0
    %1432 = vmatpush1.bf16.msra.mxu0 %v1167
    %1433 = vmatprep.subr.bf16.mxu0 0
    %1434 = vmatpush1.bf16.msra.mxu0 %v1166
    %1435 = vmatprep.subr.bf16.mxu0 0
    %1436 = vmatpush1.bf16.msra.mxu0 %v1165
    %1437 = vmatprep.subr.bf16.mxu0 0
    %1438 = vmatpush2.bf16.msra.mxu0 %v1180
    %1439 = vmatprep.subr.bf16.mxu0 0
    %1440 = vmatpush2.bf16.msra.mxu0 %v1179
    %1441 = vmatprep.subr.bf16.mxu0 0
    %1442 = vmatpush2.bf16.msra.mxu0 %v1178
    %1443 = vmatprep.subr.bf16.mxu0 0
    %1444 = vmatpush2.bf16.msra.mxu0 %v1177
    %1445 = vmatprep.subr.bf16.mxu0 0
    %1446 = vmatpush2.bf16.msra.mxu0 %v1176
    %1447 = vmatprep.subr.bf16.mxu0 0
    %1448 = vmatpush2.bf16.msra.mxu0 %v1175
    %1449 = vmatprep.subr.bf16.mxu0 0
    %1450 = vmatpush2.bf16.msra.mxu0 %v1174
    %1451 = vmatprep.subr.bf16.mxu0 0
    %1452 = vmatpush2.bf16.msra.mxu0 %v1173
    %1453 = vmatprep.mubr.bf16.mxu0 %v526
    %1454 = vmatmul.mubr.bf16.gmra.mxu0 %v525
    %v1455 = vpop.f32.mrf.mxu0
    %v1456 = vadd.f32 0.0, %v1455
    %v1457 = vpop.f32.mrf.mxu0
    %v1458 = vpop.f32.mrf.mxu0
    %v1459 = vadd.f32 0.0, %v1458
    %v1460 = vpop.f32.mrf.mxu0
    %1461 = vmatprep.mubr.bf16.mxu0 %v542
    %1462 = vmatmul.mubr.bf16.gmra.mxu0 %v541
    %v1463 = vpop.f32.mrf.mxu0
    %v1464 = vadd.f32 0.0, %v1463
    %v1465 = vpop.f32.mrf.mxu0
    %v1466 = vpop.f32.mrf.mxu0
    %v1467 = vadd.f32 0.0, %v1466
    %v1468 = vpop.f32.mrf.mxu0
    %1469 = vmatprep.mubr.bf16.mxu0 %v558
    %1470 = vmatmul.mubr.bf16.gmra.mxu0 %v557
    %v1471 = vpop.f32.mrf.mxu0
    %v1472 = vadd.f32 0.0, %v1471
    %v1473 = vpop.f32.mrf.mxu0
    %v1474 = vpop.f32.mrf.mxu0
    %v1475 = vadd.f32 0.0, %v1474
    %v1476 = vpop.f32.mrf.mxu0
    %1477 = vmatprep.mubr.bf16.mxu0 %v574
    %1478 = vmatmul.mubr.bf16.gmra.mxu0 %v573
    %v1479 = vpop.f32.mrf.mxu0
    %v1480 = vadd.f32 0.0, %v1479
    %v1481 = vpop.f32.mrf.mxu0
    %v1482 = vpop.f32.mrf.mxu0
    %v1483 = vadd.f32 0.0, %v1482
    %v1484 = vpop.f32.mrf.mxu0
    %1485 = vdwg.mxu0
    %1486 = vmatprep.subr.bf16.mxu0 0
    %1487 = vmatpush1.bf16.msra.mxu0 %v1188
    %1488 = vmatprep.subr.bf16.mxu0 0
    %1489 = vmatpush1.bf16.msra.mxu0 %v1187
    %1490 = vmatprep.subr.bf16.mxu0 0
    %1491 = vmatpush1.bf16.msra.mxu0 %v1186
    %1492 = vmatprep.subr.bf16.mxu0 0
    %1493 = vmatpush1.bf16.msra.mxu0 %v1185
    %1494 = vmatprep.subr.bf16.mxu0 0
    %1495 = vmatpush1.bf16.msra.mxu0 %v1184
    %1496 = vmatprep.subr.bf16.mxu0 0
    %1497 = vmatpush1.bf16.msra.mxu0 %v1183
    %1498 = vmatprep.subr.bf16.mxu0 0
    %1499 = vmatpush1.bf16.msra.mxu0 %v1182
    %1500 = vmatprep.subr.bf16.mxu0 0
    %1501 = vmatpush1.bf16.msra.mxu0 %v1181
    %1502 = vmatprep.subr.bf16.mxu0 0
    %1503 = vmatpush2.bf16.msra.mxu0 %v1196
    %1504 = vmatprep.subr.bf16.mxu0 0
    %1505 = vmatpush2.bf16.msra.mxu0 %v1195
    %1506 = vmatprep.subr.bf16.mxu0 0
    %1507 = vmatpush2.bf16.msra.mxu0 %v1194
    %1508 = vmatprep.subr.bf16.mxu0 0
    %1509 = vmatpush2.bf16.msra.mxu0 %v1193
    %1510 = vmatprep.subr.bf16.mxu0 0
    %1511 = vmatpush2.bf16.msra.mxu0 %v1192
    %1512 = vmatprep.subr.bf16.mxu0 0
    %1513 = vmatpush2.bf16.msra.mxu0 %v1191
    %1514 = vmatprep.subr.bf16.mxu0 0
    %1515 = vmatpush2.bf16.msra.mxu0 %v1190
    %1516 = vmatprep.subr.bf16.mxu0 0
    %1517 = vmatpush2.bf16.msra.mxu0 %v1189
    %1518 = vmatprep.mubr.bf16.mxu0 %v528
    %1519 = vmatmul.mubr.bf16.gmra.mxu0 %v527
    %v1520 = vpop.f32.mrf.mxu0
    %v1521 = vadd.f32 %v1456, %v1520
    %v1522 = vpop.f32.mrf.mxu0
    %v1523 = vpop.f32.mrf.mxu0
    %v1524 = vadd.f32 %v1459, %v1523
    %v1525 = vpop.f32.mrf.mxu0
    %1526 = vmatprep.mubr.bf16.mxu0 %v544
    %1527 = vmatmul.mubr.bf16.gmra.mxu0 %v543
    %v1528 = vpop.f32.mrf.mxu0
    %v1529 = vadd.f32 %v1464, %v1528
    %v1530 = vpop.f32.mrf.mxu0
    %v1531 = vpop.f32.mrf.mxu0
    %v1532 = vadd.f32 %v1467, %v1531
    %v1533 = vpop.f32.mrf.mxu0
    %1534 = vmatprep.mubr.bf16.mxu0 %v560
    %1535 = vmatmul.mubr.bf16.gmra.mxu0 %v559
    %v1536 = vpop.f32.mrf.mxu0
    %v1537 = vadd.f32 %v1472, %v1536
    %v1538 = vpop.f32.mrf.mxu0
    %v1539 = vpop.f32.mrf.mxu0
    %v1540 = vadd.f32 %v1475, %v1539
    %v1541 = vpop.f32.mrf.mxu0
    %1542 = vmatprep.mubr.bf16.mxu0 %v576
    %1543 = vmatmul.mubr.bf16.gmra.mxu0 %v575
    %v1544 = vpop.f32.mrf.mxu0
    %v1545 = vadd.f32 %v1480, %v1544
    %v1546 = vpop.f32.mrf.mxu0
    %v1547 = vpop.f32.mrf.mxu0
    %v1548 = vadd.f32 %v1483, %v1547
    %v1549 = vpop.f32.mrf.mxu0
    %1550 = vdwg.mxu0
    %1551 = vmatprep.subr.bf16.mxu0 0
    %1552 = vmatpush1.bf16.msra.mxu0 %v1204
    %1553 = vmatprep.subr.bf16.mxu0 0
    %1554 = vmatpush1.bf16.msra.mxu0 %v1203
    %1555 = vmatprep.subr.bf16.mxu0 0
    %1556 = vmatpush1.bf16.msra.mxu0 %v1202
    %1557 = vmatprep.subr.bf16.mxu0 0
    %1558 = vmatpush1.bf16.msra.mxu0 %v1201
    %1559 = vmatprep.subr.bf16.mxu0 0
    %1560 = vmatpush1.bf16.msra.mxu0 %v1200
    %1561 = vmatprep.subr.bf16.mxu0 0
    %1562 = vmatpush1.bf16.msra.mxu0 %v1199
    %1563 = vmatprep.subr.bf16.mxu0 0
    %1564 = vmatpush1.bf16.msra.mxu0 %v1198
    %1565 = vmatprep.subr.bf16.mxu0 0
    %1566 = vmatpush1.bf16.msra.mxu0 %v1197
    %1567 = vmatprep.subr.bf16.mxu0 0
    %1568 = vmatpush2.bf16.msra.mxu0 %v1212
    %1569 = vmatprep.subr.bf16.mxu0 0
    %1570 = vmatpush2.bf16.msra.mxu0 %v1211
    %1571 = vmatprep.subr.bf16.mxu0 0
    %1572 = vmatpush2.bf16.msra.mxu0 %v1210
    %1573 = vmatprep.subr.bf16.mxu0 0
    %1574 = vmatpush2.bf16.msra.mxu0 %v1209
    %1575 = vmatprep.subr.bf16.mxu0 0
    %1576 = vmatpush2.bf16.msra.mxu0 %v1208
    %1577 = vmatprep.subr.bf16.mxu0 0
    %1578 = vmatpush2.bf16.msra.mxu0 %v1207
    %1579 = vmatprep.subr.bf16.mxu0 0
    %1580 = vmatpush2.bf16.msra.mxu0 %v1206
    %1581 = vmatprep.subr.bf16.mxu0 0
    %1582 = vmatpush2.bf16.msra.mxu0 %v1205
    %1583 = vmatprep.mubr.bf16.mxu0 %v530
    %1584 = vmatmul.mubr.bf16.gmra.mxu0 %v529
    %v1585 = vpop.f32.mrf.mxu0
    %v1586 = vadd.f32 %v1521, %v1585
    %v1587 = vpop.f32.mrf.mxu0
    %v1588 = vpop.f32.mrf.mxu0
    %v1589 = vadd.f32 %v1524, %v1588
    %v1590 = vpop.f32.mrf.mxu0
    %1591 = vmatprep.mubr.bf16.mxu0 %v546
    %1592 = vmatmul.mubr.bf16.gmra.mxu0 %v545
    %v1593 = vpop.f32.mrf.mxu0
    %v1594 = vadd.f32 %v1529, %v1593
    %v1595 = vpop.f32.mrf.mxu0
    %v1596 = vpop.f32.mrf.mxu0
    %v1597 = vadd.f32 %v1532, %v1596
    %v1598 = vpop.f32.mrf.mxu0
    %1599 = vmatprep.mubr.bf16.mxu0 %v562
    %1600 = vmatmul.mubr.bf16.gmra.mxu0 %v561
    %v1601 = vpop.f32.mrf.mxu0
    %v1602 = vadd.f32 %v1537, %v1601
    %v1603 = vpop.f32.mrf.mxu0
    %v1604 = vpop.f32.mrf.mxu0
    %v1605 = vadd.f32 %v1540, %v1604
    %v1606 = vpop.f32.mrf.mxu0
    %1607 = vmatprep.mubr.bf16.mxu0 %v578
    %1608 = vmatmul.mubr.bf16.gmra.mxu0 %v577
    %v1609 = vpop.f32.mrf.mxu0
    %v1610 = vadd.f32 %v1545, %v1609
    %v1611 = vpop.f32.mrf.mxu0
    %v1612 = vpop.f32.mrf.mxu0
    %v1613 = vadd.f32 %v1548, %v1612
    %v1614 = vpop.f32.mrf.mxu0
    %1615 = vdwg.mxu0
    %1616 = vmatprep.subr.bf16.mxu0 0
    %1617 = vmatpush1.bf16.msra.mxu0 %v1220
    %1618 = vmatprep.subr.bf16.mxu0 0
    %1619 = vmatpush1.bf16.msra.mxu0 %v1219
    %1620 = vmatprep.subr.bf16.mxu0 0
    %1621 = vmatpush1.bf16.msra.mxu0 %v1218
    %1622 = vmatprep.subr.bf16.mxu0 0
    %1623 = vmatpush1.bf16.msra.mxu0 %v1217
    %1624 = vmatprep.subr.bf16.mxu0 0
    %1625 = vmatpush1.bf16.msra.mxu0 %v1216
    %1626 = vmatprep.subr.bf16.mxu0 0
    %1627 = vmatpush1.bf16.msra.mxu0 %v1215
    %1628 = vmatprep.subr.bf16.mxu0 0
    %1629 = vmatpush1.bf16.msra.mxu0 %v1214
    %1630 = vmatprep.subr.bf16.mxu0 0
    %1631 = vmatpush1.bf16.msra.mxu0 %v1213
    %1632 = vmatprep.subr.bf16.mxu0 0
    %1633 = vmatpush2.bf16.msra.mxu0 %v1228
    %1634 = vmatprep.subr.bf16.mxu0 0
    %1635 = vmatpush2.bf16.msra.mxu0 %v1227
    %1636 = vmatprep.subr.bf16.mxu0 0
    %1637 = vmatpush2.bf16.msra.mxu0 %v1226
    %1638 = vmatprep.subr.bf16.mxu0 0
    %1639 = vmatpush2.bf16.msra.mxu0 %v1225
    %1640 = vmatprep.subr.bf16.mxu0 0
    %1641 = vmatpush2.bf16.msra.mxu0 %v1224
    %1642 = vmatprep.subr.bf16.mxu0 0
    %1643 = vmatpush2.bf16.msra.mxu0 %v1223
    %1644 = vmatprep.subr.bf16.mxu0 0
    %1645 = vmatpush2.bf16.msra.mxu0 %v1222
    %1646 = vmatprep.subr.bf16.mxu0 0
    %1647 = vmatpush2.bf16.msra.mxu0 %v1221
    %1648 = vmatprep.mubr.bf16.mxu0 %v532
    %1649 = vmatmul.mubr.bf16.gmra.mxu0 %v531
    %v1650 = vpop.f32.mrf.mxu0
    %v1651 = vadd.f32 %v1586, %v1650
    %v1652 = vpop.f32.mrf.mxu0
    %v1653 = vpop.f32.mrf.mxu0
    %v1654 = vadd.f32 %v1589, %v1653
    %v1655 = vpop.f32.mrf.mxu0
    %1656 = vmatprep.mubr.bf16.mxu0 %v548
    %1657 = vmatmul.mubr.bf16.gmra.mxu0 %v547
    %v1658 = vpop.f32.mrf.mxu0
    %v1659 = vadd.f32 %v1594, %v1658
    %v1660 = vpop.f32.mrf.mxu0
    %v1661 = vpop.f32.mrf.mxu0
    %v1662 = vadd.f32 %v1597, %v1661
    %v1663 = vpop.f32.mrf.mxu0
    %1664 = vmatprep.mubr.bf16.mxu0 %v564
    %1665 = vmatmul.mubr.bf16.gmra.mxu0 %v563
    %v1666 = vpop.f32.mrf.mxu0
    %v1667 = vadd.f32 %v1602, %v1666
    %v1668 = vpop.f32.mrf.mxu0
    %v1669 = vpop.f32.mrf.mxu0
    %v1670 = vadd.f32 %v1605, %v1669
    %v1671 = vpop.f32.mrf.mxu0
    %1672 = vmatprep.mubr.bf16.mxu0 %v580
    %1673 = vmatmul.mubr.bf16.gmra.mxu0 %v579
    %v1674 = vpop.f32.mrf.mxu0
    %v1675 = vadd.f32 %v1610, %v1674
    %v1676 = vpop.f32.mrf.mxu0
    %v1677 = vpop.f32.mrf.mxu0
    %v1678 = vadd.f32 %v1613, %v1677
    %v1679 = vpop.f32.mrf.mxu0
    %1680 = vdwg.mxu0
    %1681 = vmatprep.subr.bf16.mxu0 0
    %1682 = vmatpush1.bf16.msra.mxu0 %v1236
    %1683 = vmatprep.subr.bf16.mxu0 0
    %1684 = vmatpush1.bf16.msra.mxu0 %v1235
    %1685 = vmatprep.subr.bf16.mxu0 0
    %1686 = vmatpush1.bf16.msra.mxu0 %v1234
    %1687 = vmatprep.subr.bf16.mxu0 0
    %1688 = vmatpush1.bf16.msra.mxu0 %v1233
    %1689 = vmatprep.subr.bf16.mxu0 0
    %1690 = vmatpush1.bf16.msra.mxu0 %v1232
    %1691 = vmatprep.subr.bf16.mxu0 0
    %1692 = vmatpush1.bf16.msra.mxu0 %v1231
    %1693 = vmatprep.subr.bf16.mxu0 0
    %1694 = vmatpush1.bf16.msra.mxu0 %v1230
    %1695 = vmatprep.subr.bf16.mxu0 0
    %1696 = vmatpush1.bf16.msra.mxu0 %v1229
    %1697 = vmatprep.subr.bf16.mxu0 0
    %1698 = vmatpush2.bf16.msra.mxu0 %v1244
    %1699 = vmatprep.subr.bf16.mxu0 0
    %1700 = vmatpush2.bf16.msra.mxu0 %v1243
    %1701 = vmatprep.subr.bf16.mxu0 0
    %1702 = vmatpush2.bf16.msra.mxu0 %v1242
    %1703 = vmatprep.subr.bf16.mxu0 0
    %1704 = vmatpush2.bf16.msra.mxu0 %v1241
    %1705 = vmatprep.subr.bf16.mxu0 0
    %1706 = vmatpush2.bf16.msra.mxu0 %v1240
    %1707 = vmatprep.subr.bf16.mxu0 0
    %1708 = vmatpush2.bf16.msra.mxu0 %v1239
    %1709 = vmatprep.subr.bf16.mxu0 0
    %1710 = vmatpush2.bf16.msra.mxu0 %v1238
    %1711 = vmatprep.subr.bf16.mxu0 0
    %1712 = vmatpush2.bf16.msra.mxu0 %v1237
    %1713 = vmatprep.mubr.bf16.mxu0 %v534
    %1714 = vmatmul.mubr.bf16.gmra.mxu0 %v533
    %v1715 = vpop.f32.mrf.mxu0
    %v1716 = vadd.f32 %v1651, %v1715
    %v1717 = vpop.f32.mrf.mxu0
    %v1718 = vpop.f32.mrf.mxu0
    %v1719 = vadd.f32 %v1654, %v1718
    %v1720 = vpop.f32.mrf.mxu0
    %1721 = vmatprep.mubr.bf16.mxu0 %v550
    %1722 = vmatmul.mubr.bf16.gmra.mxu0 %v549
    %v1723 = vpop.f32.mrf.mxu0
    %v1724 = vadd.f32 %v1659, %v1723
    %v1725 = vpop.f32.mrf.mxu0
    %v1726 = vpop.f32.mrf.mxu0
    %v1727 = vadd.f32 %v1662, %v1726
    %v1728 = vpop.f32.mrf.mxu0
    %1729 = vmatprep.mubr.bf16.mxu0 %v566
    %1730 = vmatmul.mubr.bf16.gmra.mxu0 %v565
    %v1731 = vpop.f32.mrf.mxu0
    %v1732 = vadd.f32 %v1667, %v1731
    %v1733 = vpop.f32.mrf.mxu0
    %v1734 = vpop.f32.mrf.mxu0
    %v1735 = vadd.f32 %v1670, %v1734
    %v1736 = vpop.f32.mrf.mxu0
    %1737 = vmatprep.mubr.bf16.mxu0 %v582
    %1738 = vmatmul.mubr.bf16.gmra.mxu0 %v581
    %v1739 = vpop.f32.mrf.mxu0
    %v1740 = vadd.f32 %v1675, %v1739
    %v1741 = vpop.f32.mrf.mxu0
    %v1742 = vpop.f32.mrf.mxu0
    %v1743 = vadd.f32 %v1678, %v1742
    %v1744 = vpop.f32.mrf.mxu0
    %1745 = vdwg.mxu0
    %1746 = vmatprep.subr.bf16.mxu0 0
    %1747 = vmatpush1.bf16.msra.mxu0 %v1252
    %1748 = vmatprep.subr.bf16.mxu0 0
    %1749 = vmatpush1.bf16.msra.mxu0 %v1251
    %1750 = vmatprep.subr.bf16.mxu0 0
    %1751 = vmatpush1.bf16.msra.mxu0 %v1250
    %1752 = vmatprep.subr.bf16.mxu0 0
    %1753 = vmatpush1.bf16.msra.mxu0 %v1249
    %1754 = vmatprep.subr.bf16.mxu0 0
    %1755 = vmatpush1.bf16.msra.mxu0 %v1248
    %1756 = vmatprep.subr.bf16.mxu0 0
    %1757 = vmatpush1.bf16.msra.mxu0 %v1247
    %1758 = vmatprep.subr.bf16.mxu0 0
    %1759 = vmatpush1.bf16.msra.mxu0 %v1246
    %1760 = vmatprep.subr.bf16.mxu0 0
    %1761 = vmatpush1.bf16.msra.mxu0 %v1245
    %1762 = vmatprep.subr.bf16.mxu0 0
    %1763 = vmatpush2.bf16.msra.mxu0 %v1260
    %1764 = vmatprep.subr.bf16.mxu0 0
    %1765 = vmatpush2.bf16.msra.mxu0 %v1259
    %1766 = vmatprep.subr.bf16.mxu0 0
    %1767 = vmatpush2.bf16.msra.mxu0 %v1258
    %1768 = vmatprep.subr.bf16.mxu0 0
    %1769 = vmatpush2.bf16.msra.mxu0 %v1257
    %1770 = vmatprep.subr.bf16.mxu0 0
    %1771 = vmatpush2.bf16.msra.mxu0 %v1256
    %1772 = vmatprep.subr.bf16.mxu0 0
    %1773 = vmatpush2.bf16.msra.mxu0 %v1255
    %1774 = vmatprep.subr.bf16.mxu0 0
    %1775 = vmatpush2.bf16.msra.mxu0 %v1254
    %1776 = vmatprep.subr.bf16.mxu0 0
    %1777 = vmatpush2.bf16.msra.mxu0 %v1253
    %1778 = vmatprep.mubr.bf16.mxu0 %v536
    %1779 = vmatmul.mubr.bf16.gmra.mxu0 %v535
    %v1780 = vpop.f32.mrf.mxu0
    %v1781 = vadd.f32 %v1716, %v1780
    %v1782 = vpop.f32.mrf.mxu0
    %v1783 = vpop.f32.mrf.mxu0
    %v1784 = vadd.f32 %v1719, %v1783
    %v1785 = vpop.f32.mrf.mxu0
    %1786 = vmatprep.mubr.bf16.mxu0 %v552
    %1787 = vmatmul.mubr.bf16.gmra.mxu0 %v551
    %v1788 = vpop.f32.mrf.mxu0
    %v1789 = vadd.f32 %v1724, %v1788
    %v1790 = vpop.f32.mrf.mxu0
    %v1791 = vpop.f32.mrf.mxu0
    %v1792 = vadd.f32 %v1727, %v1791
    %v1793 = vpop.f32.mrf.mxu0
    %1794 = vmatprep.mubr.bf16.mxu0 %v568
    %1795 = vmatmul.mubr.bf16.gmra.mxu0 %v567
    %v1796 = vpop.f32.mrf.mxu0
    %v1797 = vadd.f32 %v1732, %v1796
    %v1798 = vpop.f32.mrf.mxu0
    %v1799 = vpop.f32.mrf.mxu0
    %v1800 = vadd.f32 %v1735, %v1799
    %v1801 = vpop.f32.mrf.mxu0
    %1802 = vmatprep.mubr.bf16.mxu0 %v584
    %1803 = vmatmul.mubr.bf16.gmra.mxu0 %v583
    %v1804 = vpop.f32.mrf.mxu0
    %v1805 = vadd.f32 %v1740, %v1804
    %v1806 = vpop.f32.mrf.mxu0
    %v1807 = vpop.f32.mrf.mxu0
    %v1808 = vadd.f32 %v1743, %v1807
    %v1809 = vpop.f32.mrf.mxu0
    %1810 = vdwg.mxu0
    %1811 = vmatprep.subr.bf16.mxu0 0
    %1812 = vmatpush1.bf16.msra.mxu0 %v1268
    %1813 = vmatprep.subr.bf16.mxu0 0
    %1814 = vmatpush1.bf16.msra.mxu0 %v1267
    %1815 = vmatprep.subr.bf16.mxu0 0
    %1816 = vmatpush1.bf16.msra.mxu0 %v1266
    %1817 = vmatprep.subr.bf16.mxu0 0
    %1818 = vmatpush1.bf16.msra.mxu0 %v1265
    %1819 = vmatprep.subr.bf16.mxu0 0
    %1820 = vmatpush1.bf16.msra.mxu0 %v1264
    %1821 = vmatprep.subr.bf16.mxu0 0
    %1822 = vmatpush1.bf16.msra.mxu0 %v1263
    %1823 = vmatprep.subr.bf16.mxu0 0
    %1824 = vmatpush1.bf16.msra.mxu0 %v1262
    %1825 = vmatprep.subr.bf16.mxu0 0
    %1826 = vmatpush1.bf16.msra.mxu0 %v1261
    %1827 = vmatprep.subr.bf16.mxu0 0
    %1828 = vmatpush2.bf16.msra.mxu0 %v1276
    %1829 = vmatprep.subr.bf16.mxu0 0
    %1830 = vmatpush2.bf16.msra.mxu0 %v1275
    %1831 = vmatprep.subr.bf16.mxu0 0
    %1832 = vmatpush2.bf16.msra.mxu0 %v1274
    %1833 = vmatprep.subr.bf16.mxu0 0
    %1834 = vmatpush2.bf16.msra.mxu0 %v1273
    %1835 = vmatprep.subr.bf16.mxu0 0
    %1836 = vmatpush2.bf16.msra.mxu0 %v1272
    %1837 = vmatprep.subr.bf16.mxu0 0
    %1838 = vmatpush2.bf16.msra.mxu0 %v1271
    %1839 = vmatprep.subr.bf16.mxu0 0
    %1840 = vmatpush2.bf16.msra.mxu0 %v1270
    %1841 = vmatprep.subr.bf16.mxu0 0
    %1842 = vmatpush2.bf16.msra.mxu0 %v1269
    %1843 = vmatprep.mubr.bf16.mxu0 %v538
    %1844 = vmatmul.mubr.bf16.gmra.mxu0 %v537
    %v1845 = vpop.f32.mrf.mxu0
    %v1846 = vadd.f32 %v1781, %v1845
    %v1847 = vpop.f32.mrf.mxu0
    %v1848 = vpop.f32.mrf.mxu0
    %v1849 = vadd.f32 %v1784, %v1848
    %v1850 = vpop.f32.mrf.mxu0
    %1851 = vmatprep.mubr.bf16.mxu0 %v554
    %1852 = vmatmul.mubr.bf16.gmra.mxu0 %v553
    %v1853 = vpop.f32.mrf.mxu0
    %v1854 = vadd.f32 %v1789, %v1853
    %v1855 = vpop.f32.mrf.mxu0
    %v1856 = vpop.f32.mrf.mxu0
    %v1857 = vadd.f32 %v1792, %v1856
    %v1858 = vpop.f32.mrf.mxu0
    %1859 = vmatprep.mubr.bf16.mxu0 %v570
    %1860 = vmatmul.mubr.bf16.gmra.mxu0 %v569
    %v1861 = vpop.f32.mrf.mxu0
    %v1862 = vadd.f32 %v1797, %v1861
    %v1863 = vpop.f32.mrf.mxu0
    %v1864 = vpop.f32.mrf.mxu0
    %v1865 = vadd.f32 %v1800, %v1864
    %v1866 = vpop.f32.mrf.mxu0
    %1867 = vmatprep.mubr.bf16.mxu0 %v586
    %1868 = vmatmul.mubr.bf16.gmra.mxu0 %v585
    %v1869 = vpop.f32.mrf.mxu0
    %v1870 = vadd.f32 %v1805, %v1869
    %v1871 = vpop.f32.mrf.mxu0
    %v1872 = vpop.f32.mrf.mxu0
    %v1873 = vadd.f32 %v1808, %v1872
    %v1874 = vpop.f32.mrf.mxu0
    %1875 = vdwg.mxu0
    %1876 = vmatprep.subr.bf16.mxu0 0
    %1877 = vmatpush1.bf16.msra.mxu0 %v1284
    %1878 = vmatprep.subr.bf16.mxu0 0
    %1879 = vmatpush1.bf16.msra.mxu0 %v1283
    %1880 = vmatprep.subr.bf16.mxu0 0
    %1881 = vmatpush1.bf16.msra.mxu0 %v1282
    %1882 = vmatprep.subr.bf16.mxu0 0
    %1883 = vmatpush1.bf16.msra.mxu0 %v1281
    %1884 = vmatprep.subr.bf16.mxu0 0
    %1885 = vmatpush1.bf16.msra.mxu0 %v1280
    %1886 = vmatprep.subr.bf16.mxu0 0
    %1887 = vmatpush1.bf16.msra.mxu0 %v1279
    %1888 = vmatprep.subr.bf16.mxu0 0
    %1889 = vmatpush1.bf16.msra.mxu0 %v1278
    %1890 = vmatprep.subr.bf16.mxu0 0
    %1891 = vmatpush1.bf16.msra.mxu0 %v1277
    %1892 = vmatprep.subr.bf16.mxu0 0
    %1893 = vmatpush2.bf16.msra.mxu0 %v1292
    %1894 = vmatprep.subr.bf16.mxu0 0
    %1895 = vmatpush2.bf16.msra.mxu0 %v1291
    %1896 = vmatprep.subr.bf16.mxu0 0
    %1897 = vmatpush2.bf16.msra.mxu0 %v1290
    %1898 = vmatprep.subr.bf16.mxu0 0
    %1899 = vmatpush2.bf16.msra.mxu0 %v1289
    %1900 = vmatprep.subr.bf16.mxu0 0
    %1901 = vmatpush2.bf16.msra.mxu0 %v1288
    %1902 = vmatprep.subr.bf16.mxu0 0
    %1903 = vmatpush2.bf16.msra.mxu0 %v1287
    %1904 = vmatprep.subr.bf16.mxu0 0
    %1905 = vmatpush2.bf16.msra.mxu0 %v1286
    %1906 = vmatprep.subr.bf16.mxu0 0
    %1907 = vmatpush2.bf16.msra.mxu0 %v1285
    %1908 = vmatprep.mubr.bf16.mxu0 %v540
    %1909 = vmatmul.mubr.bf16.gmra.mxu0 %v539
    %v1910 = vpop.f32.mrf.mxu0
    %v1911 = vadd.f32 %v1846, %v1910
    %v1912 = vpop.f32.mrf.mxu0
    %v1913 = vpop.f32.mrf.mxu0
    %v1914 = vadd.f32 %v1849, %v1913
    %v1915 = vpop.f32.mrf.mxu0
    %1916 = vmatprep.mubr.bf16.mxu0 %v556
    %1917 = vmatmul.mubr.bf16.gmra.mxu0 %v555
    %v1918 = vpop.f32.mrf.mxu0
    %v1919 = vadd.f32 %v1854, %v1918
    %v1920 = vpop.f32.mrf.mxu0
    %v1921 = vpop.f32.mrf.mxu0
    %v1922 = vadd.f32 %v1857, %v1921
    %v1923 = vpop.f32.mrf.mxu0
    %1924 = vmatprep.mubr.bf16.mxu0 %v572
    %1925 = vmatmul.mubr.bf16.gmra.mxu0 %v571
    %v1926 = vpop.f32.mrf.mxu0
    %v1927 = vadd.f32 %v1862, %v1926
    %v1928 = vpop.f32.mrf.mxu0
    %v1929 = vpop.f32.mrf.mxu0
    %v1930 = vadd.f32 %v1865, %v1929
    %v1931 = vpop.f32.mrf.mxu0
    %1932 = vmatprep.mubr.bf16.mxu0 %v588
    %1933 = vmatmul.mubr.bf16.gmra.mxu0 %v587
    %v1934 = vpop.f32.mrf.mxu0
    %v1935 = vadd.f32 %v1870, %v1934
    %v1936 = vpop.f32.mrf.mxu0
    %v1937 = vpop.f32.mrf.mxu0
    %v1938 = vadd.f32 %v1873, %v1937
    %v1939 = vpop.f32.mrf.mxu0
    %1940 = vdwg.mxu0
    %v1941 = vmul.f32 %v1911, %v1911
    %v1942 = vmul.f32 %v1914, %v1914
    %v1943 = vmul.f32 %v1919, %v1919
    %v1944 = vmul.f32 %v1922, %v1922
    %v1945 = vmul.f32 %v1927, %v1927
    %v1946 = vmul.f32 %v1930, %v1930
    %v1947 = vmul.f32 %v1935, %v1935
    %v1948 = vmul.f32 %v1938, %v1938
    %1949 = vadd.xlane.f32.xlu0 %v1941
    %v1950 = vpop.xlane.xlu0 %1949
    %1951 = vadd.xlane.f32.xlu0 %v1942
    %v1952 = vpop.xlane.xlu0 %1951
    %1953 = vadd.xlane.f32.xlu0 %v1943
    %v1954 = vpop.xlane.xlu0 %1953
    %1955 = vadd.xlane.f32.xlu0 %v1944
    %v1956 = vpop.xlane.xlu0 %1955
    %1957 = vadd.xlane.f32.xlu0 %v1945
    %v1958 = vpop.xlane.xlu0 %1957
    %1959 = vadd.xlane.f32.xlu0 %v1946
    %v1960 = vpop.xlane.xlu0 %1959
    %1961 = vadd.xlane.f32.xlu0 %v1947
    %v1962 = vpop.xlane.xlu0 %1961
    %1963 = vadd.xlane.f32.xlu0 %v1948
    %v1964 = vpop.xlane.xlu0 %1963
    %v1965 = vadd.f32 %v1950, 1e-06
    %v1966 = vadd.f32 %v1952, 1e-06
    %v1967 = vadd.f32 %v1954, 1e-06
    %v1968 = vadd.f32 %v1956, 1e-06
    %v1969 = vadd.f32 %v1958, 1e-06
    %v1970 = vadd.f32 %v1960, 1e-06
    %v1971 = vadd.f32 %v1962, 1e-06
    %v1972 = vadd.f32 %v1964, 1e-06
    %v1973 = vrsqrt.pop %v1965
    %v1974 = vrsqrt.pop %v1966
    %v1975 = vrsqrt.pop %v1967
    %v1976 = vrsqrt.pop %v1968
    %v1977 = vrsqrt.pop %v1969
    %v1978 = vrsqrt.pop %v1970
    %v1979 = vrsqrt.pop %v1971
    %v1980 = vrsqrt.pop %v1972
    %v1981 = vmul.f32 %v1911, %v1973
    %v1982 = vmul.f32 %v1914, %v1974
    %v1983 = vmul.f32 %v1919, %v1975
    %v1984 = vmul.f32 %v1922, %v1976
    %v1985 = vmul.f32 %v1927, %v1977
    %v1986 = vmul.f32 %v1930, %v1978
    %v1987 = vmul.f32 %v1935, %v1979
    %v1988 = vmul.f32 %v1938, %v1980
    %1989 = vst [vmem:[#allocation2] sm:$0xff] %v1981
    %1990 = vst [vmem:[#allocation2 + $0x8] sm:$0xff] %v1982
    %1991 = vst [vmem:[#allocation2 + $0x10] sm:$0xff] %v1983
    %1992 = vst [vmem:[#allocation2 + $0x18] sm:$0xff] %v1984
    %1993 = vst [vmem:[#allocation2 + $0x20] sm:$0xff] %v1985
    %1994 = vst [vmem:[#allocation2 + $0x28] sm:$0xff] %v1986
    %1995 = vst [vmem:[#allocation2 + $0x30] sm:$0xff] %v1987
    %1996 = vst [vmem:[#allocation2 + $0x38] sm:$0xff] %v1988
    // Predicated region
    $region10: #{_predict_all.3} parent=1 // pred_check
      _
    $region11: #{_predict_all.3} parent=1 // pred_check_branch
      %1998 = sbr.rel (0) target = $region13
    $region12: #{_predict_all.3} parent=1 // pred_region
      %s2000 = ssub.s32 1024, 1024
      %2001 = vsyncadd [#allocation3], %s2000
      %s2002 = sshll.u32 [#allocation2], 4
      %s2003 = int_to_ptr.vmem [resolvable:$true] %s2002
      %2008 = dma.vmem_to_hbm [thread:$0]  %s2003, 1024, %s2, [#allocation3], 128, 128, 8
    $region13: #{_predict_all.3} parent=1 // pred_fallthru
      _
    // Predicated region
    $region14: #{_predict_all.3} parent=1 // pred_check
      _
    $region15: #{_predict_all.3} parent=1 // pred_check_branch
      %2010 = sbr.rel (0) target = $region17
    $region16: #{_predict_all.3} parent=1 // pred_region
      %2011 = dma.done [#allocation3], 1024
    $region17: #{_predict_all.3} parent=1 // pred_fallthru
      _
    %2012 = vsyncpa [#allocation3], 1

</llo_original>
